<compile_context>
chip_gen: v5e
topology: v5e:2x2
jax: 0.10.0
libtpu: 0.0.40
codegen_flags: <defaults>
</compile_context>

<pallas_src>
import math

import numpy as np
import jax
import jax.numpy as jnp
from jax import lax
from jax.experimental import pallas as pl
from jax.experimental.pallas import tpu as pltpu


# ----------------------------------------------------------------------------
# Shared math helpers (used by the Pallas kernel and the pure-JAX reference).
# ----------------------------------------------------------------------------
def _erf(x):
    # Abramowitz & Stegun 7.1.26 polynomial (|err| < 1.5e-7); plain VPU/EUP ops.
    p = 0.3275911
    a1, a2, a3, a4, a5 = (0.254829592, -0.284496736, 1.421413741,
                          -1.453152027, 1.061405429)
    sgn = jnp.where(x >= 0.0, 1.0, -1.0)
    ax = jnp.abs(x)
    t = 1.0 / (1.0 + p * ax)
    poly = ((((a5 * t + a4) * t + a3) * t + a2) * t + a1) * t
    return sgn * (1.0 - poly * jnp.exp(-ax * ax))


def _gelu_exact(x):
    # Matches torch.nn.functional.gelu (erf form) to ~1.5e-7.
    return 0.5 * x * (1.0 + _erf(x * (1.0 / math.sqrt(2.0))))


def _layer_norm(x, w, b, eps=1e-5):
    mu = jnp.mean(x, axis=-1, keepdims=True)
    var = jnp.mean((x - mu) ** 2, axis=-1, keepdims=True)
    return (x - mu) * lax.rsqrt(var + eps) * w + b


# ----------------------------------------------------------------------------
# Pallas kernel: one (batch-block nb, layer l) step of the decoder stack.
# ----------------------------------------------------------------------------
def _make_kernel(n_heads, b_blk, seq_q, seq_kv, ff_chunk):
    H = n_heads

    def _mha_block(xq, xkv, tq, tk, qw, kw, vw, qb, kb, vb, ow, ob):
        """Multi-head attention on flattened (b_blk*t, D) activations.

        qw/kw/vw/ow: (D, D) bf16 pre-transposed weights; qb/kb/vb/ob: (1, D) f32.
        """
        D = xq.shape[-1]
        hd = D // H
        scale = 1.0 / math.sqrt(hd)
        xq_bf = xq.astype(jnp.bfloat16)
        xkv_bf = xkv.astype(jnp.bfloat16)

        # Full-width projections over the whole batch block (bf16 -> f32 acc).
        q = jnp.dot(xq_bf, qw, preferred_element_type=jnp.float32) + qb
        k = jnp.dot(xkv_bf, kw, preferred_element_type=jnp.float32) + kb
        v = jnp.dot(xkv_bf, vw, preferred_element_type=jnp.float32) + vb
        q3 = q.reshape(b_blk, tq, D)
        k3 = k.reshape(b_blk, tk, D)
        v3 = v.reshape(b_blk, tk, D)

        head_ctx = []
        for h in range(H):      # small static head loop; dots batched over batch
            sl = slice(h * hd, (h + 1) * hd)
            qh = (q3[:, :, sl] * scale).astype(jnp.bfloat16)
            kh = k3[:, :, sl].astype(jnp.bfloat16)
            vh = v3[:, :, sl].astype(jnp.bfloat16)
            s = jnp.einsum('bqd,bkd->bqk', qh, kh,
                           preferred_element_type=jnp.float32)
            s = s - jnp.max(s, axis=-1, keepdims=True)
            e = jnp.exp(s)
            p_attn = e * pl.reciprocal(jnp.sum(e, axis=-1, keepdims=True),
                                       approx=True)
            ctx = jnp.einsum('bqk,bkd->bqd', p_attn.astype(jnp.bfloat16), vh,
                             preferred_element_type=jnp.float32)
            head_ctx.append(ctx)

        # Concatenate heads once, then a single (M,D)@(D,D) output projection.
        ctx_all = jnp.concatenate(head_ctx, axis=-1).reshape(b_blk * tq, D)
        return jnp.dot(ctx_all.astype(jnp.bfloat16), ow,
                       preferred_element_type=jnp.float32) + ob

    def kernel(x0_ref, cond_ref,
               sa_qw, sa_kw, sa_vw, sa_qb, sa_kb, sa_vb, sa_ow, sa_ob,
               ca_qw, ca_kw, ca_vw, ca_qb, ca_kb, ca_vb, ca_ow, ca_ob,
               n1_w, n1_b, n2_w, n2_b, n3_w, n3_b,
               ff1_w, ff1_b, ff2_w, ff2_b,
               head_w,
               out_ref, x_vmem):
        l = pl.program_id(1)

        # TODO(synk): nn.Dropout layers are identity here (inference mode);
        # training-mode stochastic dropout is not implemented.
        @pl.when(l == 0)
        def _():
            # latents + positional encoding (added on the host, lane-clean 2D).
            # TODO(synk): at large B_blk*T this block could be DMA'd once
            # manually instead of staying resident for the whole layer loop.
            x_vmem[...] = x0_ref[0]

        x = x_vmem[...]          # (B_blk*T, D) f32 residual stream
        mem = cond_ref[0]        # (B_blk*S, D) cross-attention memory

        # --- self-attention block (post-norm) ---
        sa = _mha_block(x, x, seq_q, seq_q,
                        sa_qw[0], sa_kw[0], sa_vw[0],
                        sa_qb[0], sa_kb[0], sa_vb[0], sa_ow[0], sa_ob[0])
        x = _layer_norm(x + sa, n1_w[0], n1_b[0])

        # --- cross-attention block ---
        ca = _mha_block(x, mem, seq_q, seq_kv,
                        ca_qw[0], ca_kw[0], ca_vw[0],
                        ca_qb[0], ca_kb[0], ca_vb[0], ca_ow[0], ca_ob[0])
        x = _layer_norm(x + ca, n2_w[0], n2_b[0])

        # --- feed-forward block, chunked over the 4*D hidden axis ---
        d_ff = ff1_w.shape[-1]
        x_bf = x.astype(jnp.bfloat16)
        ff = jnp.zeros_like(x)
        for c0 in range(0, d_ff, ff_chunk):      # static chunk loop
            c1 = min(d_ff, c0 + ff_chunk)
            hc = jnp.dot(x_bf, ff1_w[0, :, c0:c1],
                         preferred_element_type=jnp.float32) + ff1_b[0, :, c0:c1]
            hc = _gelu_exact(hc).astype(jnp.bfloat16)
            ff = ff + jnp.dot(hc, ff2_w[0, c0:c1, :],
                              preferred_element_type=jnp.float32)
        ff = ff + ff2_b[0]
        x = _layer_norm(x + ff, n3_w[0], n3_b[0])

        x_vmem[...] = x

        # --- final lane-dense (128-padded) action-head projection ---
        @pl.when(l == pl.num_programs(1) - 1)
        def _():
            out_ref[0] = jnp.dot(x.astype(jnp.bfloat16), head_w[...],
                                 preferred_element_type=jnp.float32)

    return kernel


# ----------------------------------------------------------------------------
# Wrapper: host-side prep + pallas_call.
# ----------------------------------------------------------------------------
def conditioned_decoder_forward(latents, condition, params, pe, n_heads, *,
                                batch_blocks=None, ff_chunk=512):
    B, T, D = latents.shape
    S = condition.shape[1]
    L = params["sa_in_w"].shape[0]
    A = params["head_w"].shape[0]
    A_pad = ((A + 127) // 128) * 128
    f32, bf16 = jnp.float32, jnp.bfloat16

    # Batch blocking: fold all batch rows of a block into each kernel step so
    # per-layer weights are streamed once per layer (not once per batch
    # element).  Two blocks keep both TensorCores of a megacore busy.
    if batch_blocks is None:
        batch_blocks = 2 if (B >= 2 and B % 2 == 0) else 1
    NB = batch_blocks
    assert B % NB == 0, "batch must divide evenly into batch blocks"
    B_blk = B // NB
    Mq, Mk = B_blk * T, B_blk * S
    ff_chunk = min(ff_chunk, 4 * D)

    # Host-side one-off prep: PE add, q/k/v split, pre-transposes, bf16
    # weights (f32 biases/norm params), lane-padded action head.
    x0 = (latents + pe[:, :T, :]).astype(f32).reshape(NB, Mq, D)
    cond = condition.astype(f32).reshape(NB, Mk, D)

    def t_bf16(w):                       # (L, out, in) -> (L, in, out), bf16
        return jnp.transpose(w, (0, 2, 1)).astype(bf16)

    def r_f32(v):                        # (L, N) -> (L, 1, N), f32
        return v[:, None, :].astype(f32)

    def split_qkv(w, b):
        # PyTorch in_proj layout: rows [q | k | v].
        return (t_bf16(w[:, :D, :]), t_bf16(w[:, D:2 * D, :]), t_bf16(w[:, 2 * D:, :]),
                r_f32(b[:, :D]), r_f32(b[:, D:2 * D]), r_f32(b[:, 2 * D:]))

    sa_qw, sa_kw, sa_vw, sa_qb, sa_kb, sa_vb = split_qkv(params["sa_in_w"],
                                                         params["sa_in_b"])
    ca_qw, ca_kw, ca_vw, ca_qb, ca_kb, ca_vb = split_qkv(params["ca_in_w"],
                                                         params["ca_in_b"])
    sa_ow, sa_ob = t_bf16(params["sa_out_w"]), r_f32(params["sa_out_b"])
    ca_ow, ca_ob = t_bf16(params["ca_out_w"]), r_f32(params["ca_out_b"])
    ff1_w, ff1_b = t_bf16(params["ff1_w"]), r_f32(params["ff1_b"])
    ff2_w, ff2_b = t_bf16(params["ff2_w"]), r_f32(params["ff2_b"])
    head_w = jnp.zeros((D, A_pad), bf16).at[:, :A].set(
        params["head_w"].T.astype(bf16))

    inputs = [
        x0, cond,
        sa_qw, sa_kw, sa_vw, sa_qb, sa_kb, sa_vb, sa_ow, sa_ob,
        ca_qw, ca_kw, ca_vw, ca_qb, ca_kb, ca_vb, ca_ow, ca_ob,
        r_f32(params["n1_w"]), r_f32(params["n1_b"]),
        r_f32(params["n2_w"]), r_f32(params["n2_b"]),
        r_f32(params["n3_w"]), r_f32(params["n3_b"]),
        ff1_w, ff1_b, ff2_w, ff2_b,
        head_w,
    ]

    batch_map = lambda nb, l: (nb, 0, 0)   # constant across l -> no re-DMA
    layer_map = lambda nb, l: (l, 0, 0)    # streamed once per layer

    def lspec(shape):
        return pl.BlockSpec((1,) + shape, layer_map)

    in_specs = [
        pl.BlockSpec((1, Mq, D), batch_map),                # x0 (latents + pe)
        pl.BlockSpec((1, Mk, D), batch_map),                # condition
        lspec((D, D)), lspec((D, D)), lspec((D, D)),        # sa q/k/v W^T (bf16)
        lspec((1, D)), lspec((1, D)), lspec((1, D)),        # sa q/k/v bias
        lspec((D, D)), lspec((1, D)),                       # sa out W^T, bias
        lspec((D, D)), lspec((D, D)), lspec((D, D)),        # ca q/k/v W^T
        lspec((1, D)), lspec((1, D)), lspec((1, D)),        # ca q/k/v bias
        lspec((D, D)), lspec((1, D)),                       # ca out W^T, bias
        lspec((1, D)), lspec((1, D)),                       # norm1 w, b
        lspec((1, D)), lspec((1, D)),                       # norm2 w, b
        lspec((1, D)), lspec((1, D)),                       # norm3 w, b
        lspec((D, 4 * D)), lspec((1, 4 * D)),               # ff1 W^T, bias
        lspec((4 * D, D)), lspec((1, D)),                   # ff2 W^T, bias
        pl.BlockSpec((D, A_pad), lambda nb, l: (0, 0)),     # action head W^T
    ]

    # Explicit VMEM budget: double-buffered per-layer bf16 weights + resident
    # activations/output/scratch, clamped to the v7x-safe 64 MiB ceiling.
    per_layer_w = 16 * D * D * 2                      # bf16 weight bytes / layer
    per_layer_s = 20 * D * 4                          # biases + norm params
    resident = (2 * Mq * D + Mk * D) * 4 + Mq * A_pad * 4 + D * A_pad * 2
    vmem_limit = int(min(64 * 2 ** 20,
                         max(32 * 2 ** 20,
                             4 * (per_layer_w + per_layer_s) + 2 * resident)))

    out_pad = pl.pallas_call(
        _make_kernel(n_heads, B_blk, T, S, ff_chunk),
        out_shape=jax.ShapeDtypeStruct((NB, Mq, A_pad), f32),
        grid=(NB, L),
        in_specs=in_specs,
        out_specs=pl.BlockSpec((1, Mq, A_pad), batch_map),
        scratch_shapes=[pltpu.VMEM((Mq, D), f32)],     # residual-stream carry
        compiler_params=pltpu.CompilerParams(
            dimension_semantics=("parallel", "arbitrary"),
            vmem_limit_bytes=vmem_limit),
    )(*inputs)
    return out_pad.reshape(B, T, A_pad)[:, :, :A]


# ----------------------------------------------------------------------------
# Deterministic parameter construction (synthetic; no checkpoint loading).
# ----------------------------------------------------------------------------
def get_pe(hidden_size, max_len):
    position = np.arange(max_len, dtype=np.float32)[:, None]
    div_term = np.exp(np.arange(0, hidden_size, 2, dtype=np.float32)
                      * (-math.log(10000.0) / hidden_size))
    pe = np.zeros((max_len, hidden_size), np.float32)
    pe[:, 0::2] = np.sin(position * div_term)
    pe[:, 1::2] = np.cos(position * div_term)
    return jnp.asarray(pe)[None]                  # (1, max_len, hidden)


def init_params(key, n_layers, hidden, action_dim):
    D = hidden
    ks = jax.random.split(key, 16)

    def w(k, shape, scale=0.02):
        return (scale * jax.random.normal(k, shape)).astype(jnp.float32)

    return dict(
        sa_in_w=w(ks[0], (n_layers, 3 * D, D)),
        sa_in_b=w(ks[1], (n_layers, 3 * D)),
        sa_out_w=w(ks[2], (n_layers, D, D)),
        sa_out_b=w(ks[3], (n_layers, D)),
        ca_in_w=w(ks[4], (n_layers, 3 * D, D)),
        ca_in_b=w(ks[5], (n_layers, 3 * D)),
        ca_out_w=w(ks[6], (n_layers, D, D)),
        ca_out_b=w(ks[7], (n_layers, D)),
        n1_w=jnp.ones((n_layers, D), jnp.float32),
        n1_b=jnp.zeros((n_layers, D), jnp.float32),
        n2_w=jnp.ones((n_layers, D), jnp.float32),
        n2_b=jnp.zeros((n_layers, D), jnp.float32),
        n3_w=jnp.ones((n_layers, D), jnp.float32),
        n3_b=jnp.zeros((n_layers, D), jnp.float32),
        ff1_w=w(ks[8], (n_layers, 4 * D, D)),
        ff1_b=w(ks[9], (n_layers, 4 * D)),
        ff2_w=w(ks[10], (n_layers, D, 4 * D)),
        ff2_b=w(ks[11], (n_layers, D)),
        head_w=w(ks[12], (action_dim, D)),
    )


# Pure-JAX f32 reference (exact softmax division) for the correctness check.
def reference_forward(latents, condition, params, pe, n_heads):
    B, T, D = latents.shape
    L = params["sa_in_w"].shape[0]
    H = n_heads
    hd = D // H
    x = latents + pe[:, :T, :]

    def mha(xq, xkv, w_in, b_in, w_out, b_out):
        q = xq @ w_in[:D].T + b_in[:D]
        k = xkv @ w_in[D:2 * D].T + b_in[D:2 * D]
        v = xkv @ w_in[2 * D:].T + b_in[2 * D:]
        q = q.reshape(B, -1, H, hd).transpose(0, 2, 1, 3)
        k = k.reshape(B, -1, H, hd).transpose(0, 2, 1, 3)
        v = v.reshape(B, -1, H, hd).transpose(0, 2, 1, 3)
        s = jnp.einsum('bhqd,bhkd->bhqk', q, k) / math.sqrt(hd)
        p = jax.nn.softmax(s, axis=-1)
        ctx = jnp.einsum('bhqk,bhkd->bhqd', p, v)
        ctx = ctx.transpose(0, 2, 1, 3).reshape(B, -1, D)
        return ctx @ w_out.T + b_out

    for l in range(L):
        sa = mha(x, x, params["sa_in_w"][l], params["sa_in_b"][l],
                 params["sa_out_w"][l], params["sa_out_b"][l])
        x = _layer_norm(x + sa, params["n1_w"][l], params["n1_b"][l])
        ca = mha(x, condition, params["ca_in_w"][l], params["ca_in_b"][l],
                 params["ca_out_w"][l], params["ca_out_b"][l])
        x = _layer_norm(x + ca, params["n2_w"][l], params["n2_b"][l])
        h = _gelu_exact(x @ params["ff1_w"][l].T + params["ff1_b"][l])
        ff = h @ params["ff2_w"][l].T + params["ff2_b"][l]
        x = _layer_norm(x + ff, params["n3_w"][l], params["n3_b"][l])
    return x @ params["head_w"].T


if __name__ == "__main__":
    # Module hyper-params (small, consistent with the __init__ signature).
    action_dim, hidden_size, n_heads, n_layers, horizon = 6, 32, 4, 2, 8
    B, T, S = 2, 8, 6          # latents: (B, T, hidden); condition: (B, S, hidden)

    key = jax.random.PRNGKey(0)
    k1, k2, k3 = jax.random.split(key, 3)
    latents = jax.random.normal(k1, (B, T, hidden_size), jnp.float32)
    condition = jax.random.normal(k2, (B, S, hidden_size), jnp.float32)
    params = init_params(k3, n_layers, hidden_size, action_dim)
    pe = get_pe(hidden_size, 2 * horizon)

    out = conditioned_decoder_forward(latents, condition, params, pe, n_heads)
    out = jax.block_until_ready(out)
    assert out.shape == (B, T, action_dim)

    ref = reference_forward(latents, condition, params, pe, n_heads)
    # bf16 matmul operands + approx softmax reciprocal => ~1e-3 level deviation.
    np.testing.assert_allclose(np.asarray(out), np.asarray(ref),
                               atol=5e-3, rtol=5e-3)
    print("KERNEL_OK")
</pallas_src>

<mosaic_0001>
module attributes {stable_mosaic.version = 11 : i64} {
  func.func @kernel(%arg0: i32, %arg1: i32, %arg2: memref<1x8x32xf32, #tpu.memory_space<vmem>>, %arg3: memref<1x6x32xf32, #tpu.memory_space<vmem>>, %arg4: memref<1x32x32xbf16, #tpu.memory_space<vmem>>, %arg5: memref<1x32x32xbf16, #tpu.memory_space<vmem>>, %arg6: memref<1x32x32xbf16, #tpu.memory_space<vmem>>, %arg7: memref<1x1x32xf32, #tpu.memory_space<vmem>>, %arg8: memref<1x1x32xf32, #tpu.memory_space<vmem>>, %arg9: memref<1x1x32xf32, #tpu.memory_space<vmem>>, %arg10: memref<1x32x32xbf16, #tpu.memory_space<vmem>>, %arg11: memref<1x1x32xf32, #tpu.memory_space<vmem>>, %arg12: memref<1x32x32xbf16, #tpu.memory_space<vmem>>, %arg13: memref<1x32x32xbf16, #tpu.memory_space<vmem>>, %arg14: memref<1x32x32xbf16, #tpu.memory_space<vmem>>, %arg15: memref<1x1x32xf32, #tpu.memory_space<vmem>>, %arg16: memref<1x1x32xf32, #tpu.memory_space<vmem>>, %arg17: memref<1x1x32xf32, #tpu.memory_space<vmem>>, %arg18: memref<1x32x32xbf16, #tpu.memory_space<vmem>>, %arg19: memref<1x1x32xf32, #tpu.memory_space<vmem>>, %arg20: memref<1x1x32xf32, #tpu.memory_space<vmem>>, %arg21: memref<1x1x32xf32, #tpu.memory_space<vmem>>, %arg22: memref<1x1x32xf32, #tpu.memory_space<vmem>>, %arg23: memref<1x1x32xf32, #tpu.memory_space<vmem>>, %arg24: memref<1x1x32xf32, #tpu.memory_space<vmem>>, %arg25: memref<1x1x32xf32, #tpu.memory_space<vmem>>, %arg26: memref<1x32x128xbf16, #tpu.memory_space<vmem>>, %arg27: memref<1x1x128xf32, #tpu.memory_space<vmem>>, %arg28: memref<1x128x32xbf16, #tpu.memory_space<vmem>>, %arg29: memref<1x1x32xf32, #tpu.memory_space<vmem>>, %arg30: memref<32x128xbf16, #tpu.memory_space<vmem>>, %arg31: memref<1x8x128xf32, #tpu.memory_space<vmem>>, %arg32: memref<8x32xf32, #tpu.memory_space<vmem>>) attributes {dimension_semantics = [#tpu.dimension_semantics<parallel>, #tpu.dimension_semantics<arbitrary>], iteration_bounds = array<i64: 2, 2>, scalar_prefetch = 0 : i64, scratch_operands = 1 : i64, tpu.core_type = #tpu.core_type<tc>, window_params = [{transform_indices = @transform_0, window_bounds = array<i64: 1, 8, 32>}, {transform_indices = @transform_1, window_bounds = array<i64: 1, 6, 32>}, {transform_indices = @transform_2, window_bounds = array<i64: 1, 32, 32>}, {transform_indices = @transform_3, window_bounds = array<i64: 1, 32, 32>}, {transform_indices = @transform_4, window_bounds = array<i64: 1, 32, 32>}, {transform_indices = @transform_5, window_bounds = array<i64: 1, 1, 32>}, {transform_indices = @transform_6, window_bounds = array<i64: 1, 1, 32>}, {transform_indices = @transform_7, window_bounds = array<i64: 1, 1, 32>}, {transform_indices = @transform_8, window_bounds = array<i64: 1, 32, 32>}, {transform_indices = @transform_9, window_bounds = array<i64: 1, 1, 32>}, {transform_indices = @transform_10, window_bounds = array<i64: 1, 32, 32>}, {transform_indices = @transform_11, window_bounds = array<i64: 1, 32, 32>}, {transform_indices = @transform_12, window_bounds = array<i64: 1, 32, 32>}, {transform_indices = @transform_13, window_bounds = array<i64: 1, 1, 32>}, {transform_indices = @transform_14, window_bounds = array<i64: 1, 1, 32>}, {transform_indices = @transform_15, window_bounds = array<i64: 1, 1, 32>}, {transform_indices = @transform_16, window_bounds = array<i64: 1, 32, 32>}, {transform_indices = @transform_17, window_bounds = array<i64: 1, 1, 32>}, {transform_indices = @transform_18, window_bounds = array<i64: 1, 1, 32>}, {transform_indices = @transform_19, window_bounds = array<i64: 1, 1, 32>}, {transform_indices = @transform_20, window_bounds = array<i64: 1, 1, 32>}, {transform_indices = @transform_21, window_bounds = array<i64: 1, 1, 32>}, {transform_indices = @transform_22, window_bounds = array<i64: 1, 1, 32>}, {transform_indices = @transform_23, window_bounds = array<i64: 1, 1, 32>}, {transform_indices = @transform_24, window_bounds = array<i64: 1, 32, 128>}, {transform_indices = @transform_25, window_bounds = array<i64: 1, 1, 128>}, {transform_indices = @transform_26, window_bounds = array<i64: 1, 128, 32>}, {transform_indices = @transform_27, window_bounds = array<i64: 1, 1, 32>}, {pipeline_mode = #tpu.pipeline_mode<synchronous>, transform_indices = @transform_28, window_bounds = array<i64: 32, 128>}, {transform_indices = @transform_29, window_bounds = array<i64: 1, 8, 128>}]} {
    %c0_i32 = arith.constant 0 : i32
    %0 = arith.cmpi eq, %arg1, %c0_i32 : i32
    %1 = arith.extui %0 : i1 to i32
    %c0_i32_0 = arith.constant 0 : i32
    %2 = arith.cmpi ne, %1, %c0_i32_0 : i32
    scf.if %2 {
      %c0_167 = arith.constant 0 : index
      %c0_168 = arith.constant 0 : index
      %c0_169 = arith.constant 0 : index
      %390 = vector.load %arg2[%c0_167, %c0_168, %c0_169] : memref<1x8x32xf32, #tpu.memory_space<vmem>>, vector<1x8x32xf32>
      %391 = vector.shape_cast %390 : vector<1x8x32xf32> to vector<8x32xf32>
      %c0_170 = arith.constant 0 : index
      %c0_171 = arith.constant 0 : index
      %392 = vector.load %arg32[%c0_170, %c0_171] : memref<8x32xf32, #tpu.memory_space<vmem>>, vector<8x32xf32>
      tpu.vector_store %arg32[%c0_170, %c0_171], %391 {strides = array<i32>} : memref<8x32xf32, #tpu.memory_space<vmem>>, vector<8x32xf32>,
    } else {
    }
    %c0 = arith.constant 0 : index
    %c0_1 = arith.constant 0 : index
    %3 = vector.load %arg32[%c0, %c0_1] : memref<8x32xf32, #tpu.memory_space<vmem>>, vector<8x32xf32>
    %c0_2 = arith.constant 0 : index
    %c0_3 = arith.constant 0 : index
    %c0_4 = arith.constant 0 : index
    %4 = vector.load %arg3[%c0_2, %c0_3, %c0_4] : memref<1x6x32xf32, #tpu.memory_space<vmem>>, vector<1x6x32xf32>
    %5 = vector.shape_cast %4 : vector<1x6x32xf32> to vector<6x32xf32>
    %c0_5 = arith.constant 0 : index
    %c0_6 = arith.constant 0 : index
    %c0_7 = arith.constant 0 : index
    %6 = vector.load %arg4[%c0_5, %c0_6, %c0_7] : memref<1x32x32xbf16, #tpu.memory_space<vmem>>, vector<1x32x32xbf16>
    %7 = vector.shape_cast %6 : vector<1x32x32xbf16> to vector<32x32xbf16>
    %c0_8 = arith.constant 0 : index
    %c0_9 = arith.constant 0 : index
    %c0_10 = arith.constant 0 : index
    %8 = vector.load %arg5[%c0_8, %c0_9, %c0_10] : memref<1x32x32xbf16, #tpu.memory_space<vmem>>, vector<1x32x32xbf16>
    %9 = vector.shape_cast %8 : vector<1x32x32xbf16> to vector<32x32xbf16>
    %c0_11 = arith.constant 0 : index
    %c0_12 = arith.constant 0 : index
    %c0_13 = arith.constant 0 : index
    %10 = vector.load %arg6[%c0_11, %c0_12, %c0_13] : memref<1x32x32xbf16, #tpu.memory_space<vmem>>, vector<1x32x32xbf16>
    %11 = vector.shape_cast %10 : vector<1x32x32xbf16> to vector<32x32xbf16>
    %c0_14 = arith.constant 0 : index
    %c0_15 = arith.constant 0 : index
    %c0_16 = arith.constant 0 : index
    %12 = vector.load %arg7[%c0_14, %c0_15, %c0_16] : memref<1x1x32xf32, #tpu.memory_space<vmem>>, vector<1x1x32xf32>
    %13 = vector.shape_cast %12 : vector<1x1x32xf32> to vector<1x32xf32>
    %c0_17 = arith.constant 0 : index
    %c0_18 = arith.constant 0 : index
    %c0_19 = arith.constant 0 : index
    %14 = vector.load %arg8[%c0_17, %c0_18, %c0_19] : memref<1x1x32xf32, #tpu.memory_space<vmem>>, vector<1x1x32xf32>
    %15 = vector.shape_cast %14 : vector<1x1x32xf32> to vector<1x32xf32>
    %c0_20 = arith.constant 0 : index
    %c0_21 = arith.constant 0 : index
    %c0_22 = arith.constant 0 : index
    %16 = vector.load %arg9[%c0_20, %c0_21, %c0_22] : memref<1x1x32xf32, #tpu.memory_space<vmem>>, vector<1x1x32xf32>
    %17 = vector.shape_cast %16 : vector<1x1x32xf32> to vector<1x32xf32>
    %c0_23 = arith.constant 0 : index
    %c0_24 = arith.constant 0 : index
    %c0_25 = arith.constant 0 : index
    %18 = vector.load %arg10[%c0_23, %c0_24, %c0_25] : memref<1x32x32xbf16, #tpu.memory_space<vmem>>, vector<1x32x32xbf16>
    %19 = vector.shape_cast %18 : vector<1x32x32xbf16> to vector<32x32xbf16>
    %c0_26 = arith.constant 0 : index
    %c0_27 = arith.constant 0 : index
    %c0_28 = arith.constant 0 : index
    %20 = vector.load %arg11[%c0_26, %c0_27, %c0_28] : memref<1x1x32xf32, #tpu.memory_space<vmem>>, vector<1x1x32xf32>
    %21 = vector.shape_cast %20 : vector<1x1x32xf32> to vector<1x32xf32>
    %22 = arith.truncf %3 : vector<8x32xf32> to vector<8x32xbf16>
    %23 = arith.truncf %3 : vector<8x32xf32> to vector<8x32xbf16>
    %cst = arith.constant dense<0.000000e+00> : vector<8x32xf32>
    %24 = tpu.matmul %22, %7, %cst {dimension_numbers = #tpu.dot_dimension_numbers<[1], [0], [0], [1], [0, 0, 1, 1], [], []>} : vector<8x32xbf16>, vector<32x32xbf16>, vector<8x32xf32> -> vector<8x32xf32>
    %25 = vector.broadcast %13 : vector<1x32xf32> to vector<8x32xf32>
    %26 = arith.addf %24, %25 : vector<8x32xf32>
    %cst_29 = arith.constant dense<0.000000e+00> : vector<8x32xf32>
    %27 = tpu.matmul %23, %9, %cst_29 {dimension_numbers = #tpu.dot_dimension_numbers<[1], [0], [0], [1], [0, 0, 1, 1], [], []>} : vector<8x32xbf16>, vector<32x32xbf16>, vector<8x32xf32> -> vector<8x32xf32>
    %28 = vector.broadcast %15 : vector<1x32xf32> to vector<8x32xf32>
    %29 = arith.addf %27, %28 : vector<8x32xf32>
    %cst_30 = arith.constant dense<0.000000e+00> : vector<8x32xf32>
    %30 = tpu.matmul %23, %11, %cst_30 {dimension_numbers = #tpu.dot_dimension_numbers<[1], [0], [0], [1], [0, 0, 1, 1], [], []>} : vector<8x32xbf16>, vector<32x32xbf16>, vector<8x32xf32> -> vector<8x32xf32>
    %31 = vector.broadcast %17 : vector<1x32xf32> to vector<8x32xf32>
    %32 = arith.addf %30, %31 : vector<8x32xf32>
    %33 = vector.shape_cast %26 : vector<8x32xf32> to vector<1x8x32xf32>
    %34 = vector.shape_cast %29 : vector<8x32xf32> to vector<1x8x32xf32>
    %35 = vector.shape_cast %32 : vector<8x32xf32> to vector<1x8x32xf32>
    %36 = vector.extract_strided_slice %33 {offsets = [0, 0, 0], sizes = [1, 8, 8], strides = [1, 1, 1]} : vector<1x8x32xf32> to vector<1x8x8xf32>
    %cst_31 = arith.constant 0.353553385 : f32
    %37 = vector.broadcast %cst_31 : f32 to vector<1x8x8xf32>
    %38 = arith.mulf %36, %37 : vector<1x8x8xf32>
    %39 = arith.truncf %38 : vector<1x8x8xf32> to vector<1x8x8xbf16>
    %40 = vector.extract_strided_slice %34 {offsets = [0, 0, 0], sizes = [1, 8, 8], strides = [1, 1, 1]} : vector<1x8x32xf32> to vector<1x8x8xf32>
    %41 = arith.truncf %40 : vector<1x8x8xf32> to vector<1x8x8xbf16>
    %42 = vector.extract_strided_slice %35 {offsets = [0, 0, 0], sizes = [1, 8, 8], strides = [1, 1, 1]} : vector<1x8x32xf32> to vector<1x8x8xf32>
    %43 = arith.truncf %42 : vector<1x8x8xf32> to vector<1x8x8xbf16>
    "tpu.trace_start"() <{level = 10 : i32, message = "bqd,bkd->bqk"}> : () -> ()
    %cst_32 = arith.constant dense<0.000000e+00> : vector<1x8x8xf32>
    %44 = tpu.matmul %39, %41, %cst_32 {dimension_numbers = #tpu.dot_dimension_numbers<[2], [2], [1], [1], [0, 0, 0, 1, 1, 1], [0], [0]>} : vector<1x8x8xbf16>, vector<1x8x8xbf16>, vector<1x8x8xf32> -> vector<1x8x8xf32>
    "tpu.trace_stop"() : () -> ()
    %cst_33 = arith.constant dense<0xFF800000> : vector<1x8xf32>
    %45 = vector.multi_reduction <maximumf>, %44, %cst_33 [2] : vector<1x8x8xf32> to vector<1x8xf32>
    %46 = vector.shape_cast %45 : vector<1x8xf32> to vector<1x8x1xf32>
    %47 = vector.broadcast %46 : vector<1x8x1xf32> to vector<1x8x8xf32>
    %48 = arith.subf %44, %47 : vector<1x8x8xf32>
    %49 = math.exp %48 : vector<1x8x8xf32>
    %cst_34 = arith.constant dense<0.000000e+00> : vector<1x8xf32>
    %50 = vector.multi_reduction <add>, %49, %cst_34 [2] : vector<1x8x8xf32> to vector<1x8xf32>
    %51 = vector.shape_cast %50 : vector<1x8xf32> to vector<1x8x1xf32>
    %52 = tpu.reciprocal %51 {approx = true} : vector<1x8x1xf32> -> vector<1x8x1xf32>
    %53 = vector.broadcast %52 : vector<1x8x1xf32> to vector<1x8x8xf32>
    %54 = arith.mulf %49, %53 : vector<1x8x8xf32>
    %55 = arith.truncf %54 : vector<1x8x8xf32> to vector<1x8x8xbf16>
    "tpu.trace_start"() <{level = 10 : i32, message = "bqk,bkd->bqd"}> : () -> ()
    %cst_35 = arith.constant dense<0.000000e+00> : vector<1x8x8xf32>
    %56 = tpu.matmul %55, %43, %cst_35 {dimension_numbers = #tpu.dot_dimension_numbers<[2], [1], [1], [2], [0, 0, 0, 1, 1, 2], [0], [0]>} : vector<1x8x8xbf16>, vector<1x8x8xbf16>, vector<1x8x8xf32> -> vector<1x8x8xf32>
    "tpu.trace_stop"() : () -> ()
    %57 = vector.extract_strided_slice %33 {offsets = [0, 0, 8], sizes = [1, 8, 8], strides = [1, 1, 1]} : vector<1x8x32xf32> to vector<1x8x8xf32>
    %cst_36 = arith.constant 0.353553385 : f32
    %58 = vector.broadcast %cst_36 : f32 to vector<1x8x8xf32>
    %59 = arith.mulf %57, %58 : vector<1x8x8xf32>
    %60 = arith.truncf %59 : vector<1x8x8xf32> to vector<1x8x8xbf16>
    %61 = vector.extract_strided_slice %34 {offsets = [0, 0, 8], sizes = [1, 8, 8], strides = [1, 1, 1]} : vector<1x8x32xf32> to vector<1x8x8xf32>
    %62 = arith.truncf %61 : vector<1x8x8xf32> to vector<1x8x8xbf16>
    %63 = vector.extract_strided_slice %35 {offsets = [0, 0, 8], sizes = [1, 8, 8], strides = [1, 1, 1]} : vector<1x8x32xf32> to vector<1x8x8xf32>
    %64 = arith.truncf %63 : vector<1x8x8xf32> to vector<1x8x8xbf16>
    "tpu.trace_start"() <{level = 10 : i32, message = "bqd,bkd->bqk"}> : () -> ()
    %cst_37 = arith.constant dense<0.000000e+00> : vector<1x8x8xf32>
    %65 = tpu.matmul %60, %62, %cst_37 {dimension_numbers = #tpu.dot_dimension_numbers<[2], [2], [1], [1], [0, 0, 0, 1, 1, 1], [0], [0]>} : vector<1x8x8xbf16>, vector<1x8x8xbf16>, vector<1x8x8xf32> -> vector<1x8x8xf32>
    "tpu.trace_stop"() : () -> ()
    %cst_38 = arith.constant dense<0xFF800000> : vector<1x8xf32>
    %66 = vector.multi_reduction <maximumf>, %65, %cst_38 [2] : vector<1x8x8xf32> to vector<1x8xf32>
    %67 = vector.shape_cast %66 : vector<1x8xf32> to vector<1x8x1xf32>
    %68 = vector.broadcast %67 : vector<1x8x1xf32> to vector<1x8x8xf32>
    %69 = arith.subf %65, %68 : vector<1x8x8xf32>
    %70 = math.exp %69 : vector<1x8x8xf32>
    %cst_39 = arith.constant dense<0.000000e+00> : vector<1x8xf32>
    %71 = vector.multi_reduction <add>, %70, %cst_39 [2] : vector<1x8x8xf32> to vector<1x8xf32>
    %72 = vector.shape_cast %71 : vector<1x8xf32> to vector<1x8x1xf32>
    %73 = tpu.reciprocal %72 {approx = true} : vector<1x8x1xf32> -> vector<1x8x1xf32>
    %74 = vector.broadcast %73 : vector<1x8x1xf32> to vector<1x8x8xf32>
    %75 = arith.mulf %70, %74 : vector<1x8x8xf32>
    %76 = arith.truncf %75 : vector<1x8x8xf32> to vector<1x8x8xbf16>
    "tpu.trace_start"() <{level = 10 : i32, message = "bqk,bkd->bqd"}> : () -> ()
    %cst_40 = arith.constant dense<0.000000e+00> : vector<1x8x8xf32>
    %77 = tpu.matmul %76, %64, %cst_40 {dimension_numbers = #tpu.dot_dimension_numbers<[2], [1], [1], [2], [0, 0, 0, 1, 1, 2], [0], [0]>} : vector<1x8x8xbf16>, vector<1x8x8xbf16>, vector<1x8x8xf32> -> vector<1x8x8xf32>
    "tpu.trace_stop"() : () -> ()
    %78 = vector.extract_strided_slice %33 {offsets = [0, 0, 16], sizes = [1, 8, 8], strides = [1, 1, 1]} : vector<1x8x32xf32> to vector<1x8x8xf32>
    %cst_41 = arith.constant 0.353553385 : f32
    %79 = vector.broadcast %cst_41 : f32 to vector<1x8x8xf32>
    %80 = arith.mulf %78, %79 : vector<1x8x8xf32>
    %81 = arith.truncf %80 : vector<1x8x8xf32> to vector<1x8x8xbf16>
    %82 = vector.extract_strided_slice %34 {offsets = [0, 0, 16], sizes = [1, 8, 8], strides = [1, 1, 1]} : vector<1x8x32xf32> to vector<1x8x8xf32>
    %83 = arith.truncf %82 : vector<1x8x8xf32> to vector<1x8x8xbf16>
    %84 = vector.extract_strided_slice %35 {offsets = [0, 0, 16], sizes = [1, 8, 8], strides = [1, 1, 1]} : vector<1x8x32xf32> to vector<1x8x8xf32>
    %85 = arith.truncf %84 : vector<1x8x8xf32> to vector<1x8x8xbf16>
    "tpu.trace_start"() <{level = 10 : i32, message = "bqd,bkd->bqk"}> : () -> ()
    %cst_42 = arith.constant dense<0.000000e+00> : vector<1x8x8xf32>
    %86 = tpu.matmul %81, %83, %cst_42 {dimension_numbers = #tpu.dot_dimension_numbers<[2], [2], [1], [1], [0, 0, 0, 1, 1, 1], [0], [0]>} : vector<1x8x8xbf16>, vector<1x8x8xbf16>, vector<1x8x8xf32> -> vector<1x8x8xf32>
    "tpu.trace_stop"() : () -> ()
    %cst_43 = arith.constant dense<0xFF800000> : vector<1x8xf32>
    %87 = vector.multi_reduction <maximumf>, %86, %cst_43 [2] : vector<1x8x8xf32> to vector<1x8xf32>
    %88 = vector.shape_cast %87 : vector<1x8xf32> to vector<1x8x1xf32>
    %89 = vector.broadcast %88 : vector<1x8x1xf32> to vector<1x8x8xf32>
    %90 = arith.subf %86, %89 : vector<1x8x8xf32>
    %91 = math.exp %90 : vector<1x8x8xf32>
    %cst_44 = arith.constant dense<0.000000e+00> : vector<1x8xf32>
    %92 = vector.multi_reduction <add>, %91, %cst_44 [2] : vector<1x8x8xf32> to vector<1x8xf32>
    %93 = vector.shape_cast %92 : vector<1x8xf32> to vector<1x8x1xf32>
    %94 = tpu.reciprocal %93 {approx = true} : vector<1x8x1xf32> -> vector<1x8x1xf32>
    %95 = vector.broadcast %94 : vector<1x8x1xf32> to vector<1x8x8xf32>
    %96 = arith.mulf %91, %95 : vector<1x8x8xf32>
    %97 = arith.truncf %96 : vector<1x8x8xf32> to vector<1x8x8xbf16>
    "tpu.trace_start"() <{level = 10 : i32, message = "bqk,bkd->bqd"}> : () -> ()
    %cst_45 = arith.constant dense<0.000000e+00> : vector<1x8x8xf32>
    %98 = tpu.matmul %97, %85, %cst_45 {dimension_numbers = #tpu.dot_dimension_numbers<[2], [1], [1], [2], [0, 0, 0, 1, 1, 2], [0], [0]>} : vector<1x8x8xbf16>, vector<1x8x8xbf16>, vector<1x8x8xf32> -> vector<1x8x8xf32>
    "tpu.trace_stop"() : () -> ()
    %99 = vector.extract_strided_slice %33 {offsets = [0, 0, 24], sizes = [1, 8, 8], strides = [1, 1, 1]} : vector<1x8x32xf32> to vector<1x8x8xf32>
    %cst_46 = arith.constant 0.353553385 : f32
    %100 = vector.broadcast %cst_46 : f32 to vector<1x8x8xf32>
    %101 = arith.mulf %99, %100 : vector<1x8x8xf32>
    %102 = arith.truncf %101 : vector<1x8x8xf32> to vector<1x8x8xbf16>
    %103 = vector.extract_strided_slice %34 {offsets = [0, 0, 24], sizes = [1, 8, 8], strides = [1, 1, 1]} : vector<1x8x32xf32> to vector<1x8x8xf32>
    %104 = arith.truncf %103 : vector<1x8x8xf32> to vector<1x8x8xbf16>
    %105 = vector.extract_strided_slice %35 {offsets = [0, 0, 24], sizes = [1, 8, 8], strides = [1, 1, 1]} : vector<1x8x32xf32> to vector<1x8x8xf32>
    %106 = arith.truncf %105 : vector<1x8x8xf32> to vector<1x8x8xbf16>
    "tpu.trace_start"() <{level = 10 : i32, message = "bqd,bkd->bqk"}> : () -> ()
    %cst_47 = arith.constant dense<0.000000e+00> : vector<1x8x8xf32>
    %107 = tpu.matmul %102, %104, %cst_47 {dimension_numbers = #tpu.dot_dimension_numbers<[2], [2], [1], [1], [0, 0, 0, 1, 1, 1], [0], [0]>} : vector<1x8x8xbf16>, vector<1x8x8xbf16>, vector<1x8x8xf32> -> vector<1x8x8xf32>
    "tpu.trace_stop"() : () -> ()
    %cst_48 = arith.constant dense<0xFF800000> : vector<1x8xf32>
    %108 = vector.multi_reduction <maximumf>, %107, %cst_48 [2] : vector<1x8x8xf32> to vector<1x8xf32>
    %109 = vector.shape_cast %108 : vector<1x8xf32> to vector<1x8x1xf32>
    %110 = vector.broadcast %109 : vector<1x8x1xf32> to vector<1x8x8xf32>
    %111 = arith.subf %107, %110 : vector<1x8x8xf32>
    %112 = math.exp %111 : vector<1x8x8xf32>
    %cst_49 = arith.constant dense<0.000000e+00> : vector<1x8xf32>
    %113 = vector.multi_reduction <add>, %112, %cst_49 [2] : vector<1x8x8xf32> to vector<1x8xf32>
    %114 = vector.shape_cast %113 : vector<1x8xf32> to vector<1x8x1xf32>
    %115 = tpu.reciprocal %114 {approx = true} : vector<1x8x1xf32> -> vector<1x8x1xf32>
    %116 = vector.broadcast %115 : vector<1x8x1xf32> to vector<1x8x8xf32>
    %117 = arith.mulf %112, %116 : vector<1x8x8xf32>
    %118 = arith.truncf %117 : vector<1x8x8xf32> to vector<1x8x8xbf16>
    "tpu.trace_start"() <{level = 10 : i32, message = "bqk,bkd->bqd"}> : () -> ()
    %cst_50 = arith.constant dense<0.000000e+00> : vector<1x8x8xf32>
    %119 = tpu.matmul %118, %106, %cst_50 {dimension_numbers = #tpu.dot_dimension_numbers<[2], [1], [1], [2], [0, 0, 0, 1, 1, 2], [0], [0]>} : vector<1x8x8xbf16>, vector<1x8x8xbf16>, vector<1x8x8xf32> -> vector<1x8x8xf32>
    "tpu.trace_stop"() : () -> ()
    %120 = tpu.concatenate %56, %77, %98, %119 in 2 : vector<1x8x8xf32>, vector<1x8x8xf32>, vector<1x8x8xf32>, vector<1x8x8xf32> -> vector<1x8x32xf32>
    %121 = vector.shape_cast %120 : vector<1x8x32xf32> to vector<8x32xf32>
    %122 = arith.truncf %121 : vector<8x32xf32> to vector<8x32xbf16>
    %cst_51 = arith.constant dense<0.000000e+00> : vector<8x32xf32>
    %123 = tpu.matmul %122, %19, %cst_51 {dimension_numbers = #tpu.dot_dimension_numbers<[1], [0], [0], [1], [0, 0, 1, 1], [], []>} : vector<8x32xbf16>, vector<32x32xbf16>, vector<8x32xf32> -> vector<8x32xf32>
    %124 = vector.broadcast %21 : vector<1x32xf32> to vector<8x32xf32>
    %125 = arith.addf %123, %124 : vector<8x32xf32>
    %126 = arith.addf %3, %125 : vector<8x32xf32>
    %c0_52 = arith.constant 0 : index
    %c0_53 = arith.constant 0 : index
    %c0_54 = arith.constant 0 : index
    %127 = vector.load %arg20[%c0_52, %c0_53, %c0_54] : memref<1x1x32xf32, #tpu.memory_space<vmem>>, vector<1x1x32xf32>
    %128 = vector.shape_cast %127 : vector<1x1x32xf32> to vector<1x32xf32>
    %c0_55 = arith.constant 0 : index
    %c0_56 = arith.constant 0 : index
    %c0_57 = arith.constant 0 : index
    %129 = vector.load %arg21[%c0_55, %c0_56, %c0_57] : memref<1x1x32xf32, #tpu.memory_space<vmem>>, vector<1x1x32xf32>
    %130 = vector.shape_cast %129 : vector<1x1x32xf32> to vector<1x32xf32>
    %cst_58 = arith.constant dense<0.000000e+00> : vector<8xf32>
    %131 = vector.multi_reduction <add>, %126, %cst_58 [1] : vector<8x32xf32> to vector<8xf32>
    %132 = vector.shape_cast %131 : vector<8xf32> to vector<8x1xf32>
    %cst_59 = arith.constant 3.200000e+01 : f32
    %133 = vector.broadcast %cst_59 : f32 to vector<8x1xf32>
    %134 = arith.divf %132, %133 : vector<8x1xf32>
    %135 = vector.broadcast %134 : vector<8x1xf32> to vector<8x32xf32>
    %136 = arith.subf %126, %135 : vector<8x32xf32>
    %137 = arith.mulf %136, %136 : vector<8x32xf32>
    %cst_60 = arith.constant dense<0.000000e+00> : vector<8xf32>
    %138 = vector.multi_reduction <add>, %137, %cst_60 [1] : vector<8x32xf32> to vector<8xf32>
    %139 = vector.shape_cast %138 : vector<8xf32> to vector<8x1xf32>
    %cst_61 = arith.constant 3.200000e+01 : f32
    %140 = vector.broadcast %cst_61 : f32 to vector<8x1xf32>
    %141 = arith.divf %139, %140 : vector<8x1xf32>
    %142 = vector.broadcast %134 : vector<8x1xf32> to vector<8x32xf32>
    %143 = arith.subf %126, %142 : vector<8x32xf32>
    %cst_62 = arith.constant 9.99999974E-6 : f32
    %144 = vector.broadcast %cst_62 : f32 to vector<8x1xf32>
    %145 = arith.addf %141, %144 : vector<8x1xf32>
    %146 = math.rsqrt %145 : vector<8x1xf32>
    %147 = vector.broadcast %146 : vector<8x1xf32> to vector<8x32xf32>
    %148 = arith.mulf %143, %147 : vector<8x32xf32>
    %149 = vector.broadcast %128 : vector<1x32xf32> to vector<8x32xf32>
    %150 = arith.mulf %148, %149 : vector<8x32xf32>
    %151 = vector.broadcast %130 : vector<1x32xf32> to vector<8x32xf32>
    %152 = arith.addf %150, %151 : vector<8x32xf32>
    %c0_63 = arith.constant 0 : index
    %c0_64 = arith.constant 0 : index
    %c0_65 = arith.constant 0 : index
    %153 = vector.load %arg12[%c0_63, %c0_64, %c0_65] : memref<1x32x32xbf16, #tpu.memory_space<vmem>>, vector<1x32x32xbf16>
    %154 = vector.shape_cast %153 : vector<1x32x32xbf16> to vector<32x32xbf16>
    %c0_66 = arith.constant 0 : index
    %c0_67 = arith.constant 0 : index
    %c0_68 = arith.constant 0 : index
    %155 = vector.load %arg13[%c0_66, %c0_67, %c0_68] : memref<1x32x32xbf16, #tpu.memory_space<vmem>>, vector<1x32x32xbf16>
    %156 = vector.shape_cast %155 : vector<1x32x32xbf16> to vector<32x32xbf16>
    %c0_69 = arith.constant 0 : index
    %c0_70 = arith.constant 0 : index
    %c0_71 = arith.constant 0 : index
    %157 = vector.load %arg14[%c0_69, %c0_70, %c0_71] : memref<1x32x32xbf16, #tpu.memory_space<vmem>>, vector<1x32x32xbf16>
    %158 = vector.shape_cast %157 : vector<1x32x32xbf16> to vector<32x32xbf16>
    %c0_72 = arith.constant 0 : index
    %c0_73 = arith.constant 0 : index
    %c0_74 = arith.constant 0 : index
    %159 = vector.load %arg15[%c0_72, %c0_73, %c0_74] : memref<1x1x32xf32, #tpu.memory_space<vmem>>, vector<1x1x32xf32>
    %160 = vector.shape_cast %159 : vector<1x1x32xf32> to vector<1x32xf32>
    %c0_75 = arith.constant 0 : index
    %c0_76 = arith.constant 0 : index
    %c0_77 = arith.constant 0 : index
    %161 = vector.load %arg16[%c0_75, %c0_76, %c0_77] : memref<1x1x32xf32, #tpu.memory_space<vmem>>, vector<1x1x32xf32>
    %162 = vector.shape_cast %161 : vector<1x1x32xf32> to vector<1x32xf32>
    %c0_78 = arith.constant 0 : index
    %c0_79 = arith.constant 0 : index
    %c0_80 = arith.constant 0 : index
    %163 = vector.load %arg17[%c0_78, %c0_79, %c0_80] : memref<1x1x32xf32, #tpu.memory_space<vmem>>, vector<1x1x32xf32>
    %164 = vector.shape_cast %163 : vector<1x1x32xf32> to vector<1x32xf32>
    %c0_81 = arith.constant 0 : index
    %c0_82 = arith.constant 0 : index
    %c0_83 = arith.constant 0 : index
    %165 = vector.load %arg18[%c0_81, %c0_82, %c0_83] : memref<1x32x32xbf16, #tpu.memory_space<vmem>>, vector<1x32x32xbf16>
    %166 = vector.shape_cast %165 : vector<1x32x32xbf16> to vector<32x32xbf16>
    %c0_84 = arith.constant 0 : index
    %c0_85 = arith.constant 0 : index
    %c0_86 = arith.constant 0 : index
    %167 = vector.load %arg19[%c0_84, %c0_85, %c0_86] : memref<1x1x32xf32, #tpu.memory_space<vmem>>, vector<1x1x32xf32>
    %168 = vector.shape_cast %167 : vector<1x1x32xf32> to vector<1x32xf32>
    %169 = arith.truncf %152 : vector<8x32xf32> to vector<8x32xbf16>
    %170 = arith.truncf %5 : vector<6x32xf32> to vector<6x32xbf16>
    %cst_87 = arith.constant dense<0.000000e+00> : vector<8x32xf32>
    %171 = tpu.matmul %169, %154, %cst_87 {dimension_numbers = #tpu.dot_dimension_numbers<[1], [0], [0], [1], [0, 0, 1, 1], [], []>} : vector<8x32xbf16>, vector<32x32xbf16>, vector<8x32xf32> -> vector<8x32xf32>
    %172 = vector.broadcast %160 : vector<1x32xf32> to vector<8x32xf32>
    %173 = arith.addf %171, %172 : vector<8x32xf32>
    %cst_88 = arith.constant dense<0.000000e+00> : vector<6x32xf32>
    %174 = tpu.matmul %170, %156, %cst_88 {dimension_numbers = #tpu.dot_dimension_numbers<[1], [0], [0], [1], [0, 0, 1, 1], [], []>} : vector<6x32xbf16>, vector<32x32xbf16>, vector<6x32xf32> -> vector<6x32xf32>
    %175 = vector.broadcast %162 : vector<1x32xf32> to vector<6x32xf32>
    %176 = arith.addf %174, %175 : vector<6x32xf32>
    %cst_89 = arith.constant dense<0.000000e+00> : vector<6x32xf32>
    %177 = tpu.matmul %170, %158, %cst_89 {dimension_numbers = #tpu.dot_dimension_numbers<[1], [0], [0], [1], [0, 0, 1, 1], [], []>} : vector<6x32xbf16>, vector<32x32xbf16>, vector<6x32xf32> -> vector<6x32xf32>
    %178 = vector.broadcast %164 : vector<1x32xf32> to vector<6x32xf32>
    %179 = arith.addf %177, %178 : vector<6x32xf32>
    %180 = vector.shape_cast %173 : vector<8x32xf32> to vector<1x8x32xf32>
    %181 = vector.shape_cast %176 : vector<6x32xf32> to vector<1x6x32xf32>
    %182 = vector.shape_cast %179 : vector<6x32xf32> to vector<1x6x32xf32>
    %183 = vector.extract_strided_slice %180 {offsets = [0, 0, 0], sizes = [1, 8, 8], strides = [1, 1, 1]} : vector<1x8x32xf32> to vector<1x8x8xf32>
    %cst_90 = arith.constant 0.353553385 : f32
    %184 = vector.broadcast %cst_90 : f32 to vector<1x8x8xf32>
    %185 = arith.mulf %183, %184 : vector<1x8x8xf32>
    %186 = arith.truncf %185 : vector<1x8x8xf32> to vector<1x8x8xbf16>
    %187 = vector.extract_strided_slice %181 {offsets = [0, 0, 0], sizes = [1, 6, 8], strides = [1, 1, 1]} : vector<1x6x32xf32> to vector<1x6x8xf32>
    %188 = arith.truncf %187 : vector<1x6x8xf32> to vector<1x6x8xbf16>
    %189 = vector.extract_strided_slice %182 {offsets = [0, 0, 0], sizes = [1, 6, 8], strides = [1, 1, 1]} : vector<1x6x32xf32> to vector<1x6x8xf32>
    %190 = arith.truncf %189 : vector<1x6x8xf32> to vector<1x6x8xbf16>
    "tpu.trace_start"() <{level = 10 : i32, message = "bqd,bkd->bqk"}> : () -> ()
    %cst_91 = arith.constant dense<0.000000e+00> : vector<1x8x6xf32>
    %191 = tpu.matmul %186, %188, %cst_91 {dimension_numbers = #tpu.dot_dimension_numbers<[2], [2], [1], [1], [0, 0, 0, 1, 1, 1], [0], [0]>} : vector<1x8x8xbf16>, vector<1x6x8xbf16>, vector<1x8x6xf32> -> vector<1x8x6xf32>
    "tpu.trace_stop"() : () -> ()
    %cst_92 = arith.constant dense<0xFF800000> : vector<1x8xf32>
    %192 = vector.multi_reduction <maximumf>, %191, %cst_92 [2] : vector<1x8x6xf32> to vector<1x8xf32>
    %193 = vector.shape_cast %192 : vector<1x8xf32> to vector<1x8x1xf32>
    %194 = vector.broadcast %193 : vector<1x8x1xf32> to vector<1x8x6xf32>
    %195 = arith.subf %191, %194 : vector<1x8x6xf32>
    %196 = math.exp %195 : vector<1x8x6xf32>
    %cst_93 = arith.constant dense<0.000000e+00> : vector<1x8xf32>
    %197 = vector.multi_reduction <add>, %196, %cst_93 [2] : vector<1x8x6xf32> to vector<1x8xf32>
    %198 = vector.shape_cast %197 : vector<1x8xf32> to vector<1x8x1xf32>
    %199 = tpu.reciprocal %198 {approx = true} : vector<1x8x1xf32> -> vector<1x8x1xf32>
    %200 = vector.broadcast %199 : vector<1x8x1xf32> to vector<1x8x6xf32>
    %201 = arith.mulf %196, %200 : vector<1x8x6xf32>
    %202 = arith.truncf %201 : vector<1x8x6xf32> to vector<1x8x6xbf16>
    "tpu.trace_start"() <{level = 10 : i32, message = "bqk,bkd->bqd"}> : () -> ()
    %cst_94 = arith.constant dense<0.000000e+00> : vector<1x8x8xf32>
    %203 = tpu.matmul %202, %190, %cst_94 {dimension_numbers = #tpu.dot_dimension_numbers<[2], [1], [1], [2], [0, 0, 0, 1, 1, 2], [0], [0]>} : vector<1x8x6xbf16>, vector<1x6x8xbf16>, vector<1x8x8xf32> -> vector<1x8x8xf32>
    "tpu.trace_stop"() : () -> ()
    %204 = vector.extract_strided_slice %180 {offsets = [0, 0, 8], sizes = [1, 8, 8], strides = [1, 1, 1]} : vector<1x8x32xf32> to vector<1x8x8xf32>
    %cst_95 = arith.constant 0.353553385 : f32
    %205 = vector.broadcast %cst_95 : f32 to vector<1x8x8xf32>
    %206 = arith.mulf %204, %205 : vector<1x8x8xf32>
    %207 = arith.truncf %206 : vector<1x8x8xf32> to vector<1x8x8xbf16>
    %208 = vector.extract_strided_slice %181 {offsets = [0, 0, 8], sizes = [1, 6, 8], strides = [1, 1, 1]} : vector<1x6x32xf32> to vector<1x6x8xf32>
    %209 = arith.truncf %208 : vector<1x6x8xf32> to vector<1x6x8xbf16>
    %210 = vector.extract_strided_slice %182 {offsets = [0, 0, 8], sizes = [1, 6, 8], strides = [1, 1, 1]} : vector<1x6x32xf32> to vector<1x6x8xf32>
    %211 = arith.truncf %210 : vector<1x6x8xf32> to vector<1x6x8xbf16>
    "tpu.trace_start"() <{level = 10 : i32, message = "bqd,bkd->bqk"}> : () -> ()
    %cst_96 = arith.constant dense<0.000000e+00> : vector<1x8x6xf32>
    %212 = tpu.matmul %207, %209, %cst_96 {dimension_numbers = #tpu.dot_dimension_numbers<[2], [2], [1], [1], [0, 0, 0, 1, 1, 1], [0], [0]>} : vector<1x8x8xbf16>, vector<1x6x8xbf16>, vector<1x8x6xf32> -> vector<1x8x6xf32>
    "tpu.trace_stop"() : () -> ()
    %cst_97 = arith.constant dense<0xFF800000> : vector<1x8xf32>
    %213 = vector.multi_reduction <maximumf>, %212, %cst_97 [2] : vector<1x8x6xf32> to vector<1x8xf32>
    %214 = vector.shape_cast %213 : vector<1x8xf32> to vector<1x8x1xf32>
    %215 = vector.broadcast %214 : vector<1x8x1xf32> to vector<1x8x6xf32>
    %216 = arith.subf %212, %215 : vector<1x8x6xf32>
    %217 = math.exp %216 : vector<1x8x6xf32>
    %cst_98 = arith.constant dense<0.000000e+00> : vector<1x8xf32>
    %218 = vector.multi_reduction <add>, %217, %cst_98 [2] : vector<1x8x6xf32> to vector<1x8xf32>
    %219 = vector.shape_cast %218 : vector<1x8xf32> to vector<1x8x1xf32>
    %220 = tpu.reciprocal %219 {approx = true} : vector<1x8x1xf32> -> vector<1x8x1xf32>
    %221 = vector.broadcast %220 : vector<1x8x1xf32> to vector<1x8x6xf32>
    %222 = arith.mulf %217, %221 : vector<1x8x6xf32>
    %223 = arith.truncf %222 : vector<1x8x6xf32> to vector<1x8x6xbf16>
    "tpu.trace_start"() <{level = 10 : i32, message = "bqk,bkd->bqd"}> : () -> ()
    %cst_99 = arith.constant dense<0.000000e+00> : vector<1x8x8xf32>
    %224 = tpu.matmul %223, %211, %cst_99 {dimension_numbers = #tpu.dot_dimension_numbers<[2], [1], [1], [2], [0, 0, 0, 1, 1, 2], [0], [0]>} : vector<1x8x6xbf16>, vector<1x6x8xbf16>, vector<1x8x8xf32> -> vector<1x8x8xf32>
    "tpu.trace_stop"() : () -> ()
    %225 = vector.extract_strided_slice %180 {offsets = [0, 0, 16], sizes = [1, 8, 8], strides = [1, 1, 1]} : vector<1x8x32xf32> to vector<1x8x8xf32>
    %cst_100 = arith.constant 0.353553385 : f32
    %226 = vector.broadcast %cst_100 : f32 to vector<1x8x8xf32>
    %227 = arith.mulf %225, %226 : vector<1x8x8xf32>
    %228 = arith.truncf %227 : vector<1x8x8xf32> to vector<1x8x8xbf16>
    %229 = vector.extract_strided_slice %181 {offsets = [0, 0, 16], sizes = [1, 6, 8], strides = [1, 1, 1]} : vector<1x6x32xf32> to vector<1x6x8xf32>
    %230 = arith.truncf %229 : vector<1x6x8xf32> to vector<1x6x8xbf16>
    %231 = vector.extract_strided_slice %182 {offsets = [0, 0, 16], sizes = [1, 6, 8], strides = [1, 1, 1]} : vector<1x6x32xf32> to vector<1x6x8xf32>
    %232 = arith.truncf %231 : vector<1x6x8xf32> to vector<1x6x8xbf16>
    "tpu.trace_start"() <{level = 10 : i32, message = "bqd,bkd->bqk"}> : () -> ()
    %cst_101 = arith.constant dense<0.000000e+00> : vector<1x8x6xf32>
    %233 = tpu.matmul %228, %230, %cst_101 {dimension_numbers = #tpu.dot_dimension_numbers<[2], [2], [1], [1], [0, 0, 0, 1, 1, 1], [0], [0]>} : vector<1x8x8xbf16>, vector<1x6x8xbf16>, vector<1x8x6xf32> -> vector<1x8x6xf32>
    "tpu.trace_stop"() : () -> ()
    %cst_102 = arith.constant dense<0xFF800000> : vector<1x8xf32>
    %234 = vector.multi_reduction <maximumf>, %233, %cst_102 [2] : vector<1x8x6xf32> to vector<1x8xf32>
    %235 = vector.shape_cast %234 : vector<1x8xf32> to vector<1x8x1xf32>
    %236 = vector.broadcast %235 : vector<1x8x1xf32> to vector<1x8x6xf32>
    %237 = arith.subf %233, %236 : vector<1x8x6xf32>
    %238 = math.exp %237 : vector<1x8x6xf32>
    %cst_103 = arith.constant dense<0.000000e+00> : vector<1x8xf32>
    %239 = vector.multi_reduction <add>, %238, %cst_103 [2] : vector<1x8x6xf32> to vector<1x8xf32>
    %240 = vector.shape_cast %239 : vector<1x8xf32> to vector<1x8x1xf32>
    %241 = tpu.reciprocal %240 {approx = true} : vector<1x8x1xf32> -> vector<1x8x1xf32>
    %242 = vector.broadcast %241 : vector<1x8x1xf32> to vector<1x8x6xf32>
    %243 = arith.mulf %238, %242 : vector<1x8x6xf32>
    %244 = arith.truncf %243 : vector<1x8x6xf32> to vector<1x8x6xbf16>
    "tpu.trace_start"() <{level = 10 : i32, message = "bqk,bkd->bqd"}> : () -> ()
    %cst_104 = arith.constant dense<0.000000e+00> : vector<1x8x8xf32>
    %245 = tpu.matmul %244, %232, %cst_104 {dimension_numbers = #tpu.dot_dimension_numbers<[2], [1], [1], [2], [0, 0, 0, 1, 1, 2], [0], [0]>} : vector<1x8x6xbf16>, vector<1x6x8xbf16>, vector<1x8x8xf32> -> vector<1x8x8xf32>
    "tpu.trace_stop"() : () -> ()
    %246 = vector.extract_strided_slice %180 {offsets = [0, 0, 24], sizes = [1, 8, 8], strides = [1, 1, 1]} : vector<1x8x32xf32> to vector<1x8x8xf32>
    %cst_105 = arith.constant 0.353553385 : f32
    %247 = vector.broadcast %cst_105 : f32 to vector<1x8x8xf32>
    %248 = arith.mulf %246, %247 : vector<1x8x8xf32>
    %249 = arith.truncf %248 : vector<1x8x8xf32> to vector<1x8x8xbf16>
    %250 = vector.extract_strided_slice %181 {offsets = [0, 0, 24], sizes = [1, 6, 8], strides = [1, 1, 1]} : vector<1x6x32xf32> to vector<1x6x8xf32>
    %251 = arith.truncf %250 : vector<1x6x8xf32> to vector<1x6x8xbf16>
    %252 = vector.extract_strided_slice %182 {offsets = [0, 0, 24], sizes = [1, 6, 8], strides = [1, 1, 1]} : vector<1x6x32xf32> to vector<1x6x8xf32>
    %253 = arith.truncf %252 : vector<1x6x8xf32> to vector<1x6x8xbf16>
    "tpu.trace_start"() <{level = 10 : i32, message = "bqd,bkd->bqk"}> : () -> ()
    %cst_106 = arith.constant dense<0.000000e+00> : vector<1x8x6xf32>
    %254 = tpu.matmul %249, %251, %cst_106 {dimension_numbers = #tpu.dot_dimension_numbers<[2], [2], [1], [1], [0, 0, 0, 1, 1, 1], [0], [0]>} : vector<1x8x8xbf16>, vector<1x6x8xbf16>, vector<1x8x6xf32> -> vector<1x8x6xf32>
    "tpu.trace_stop"() : () -> ()
    %cst_107 = arith.constant dense<0xFF800000> : vector<1x8xf32>
    %255 = vector.multi_reduction <maximumf>, %254, %cst_107 [2] : vector<1x8x6xf32> to vector<1x8xf32>
    %256 = vector.shape_cast %255 : vector<1x8xf32> to vector<1x8x1xf32>
    %257 = vector.broadcast %256 : vector<1x8x1xf32> to vector<1x8x6xf32>
    %258 = arith.subf %254, %257 : vector<1x8x6xf32>
    %259 = math.exp %258 : vector<1x8x6xf32>
    %cst_108 = arith.constant dense<0.000000e+00> : vector<1x8xf32>
    %260 = vector.multi_reduction <add>, %259, %cst_108 [2] : vector<1x8x6xf32> to vector<1x8xf32>
    %261 = vector.shape_cast %260 : vector<1x8xf32> to vector<1x8x1xf32>
    %262 = tpu.reciprocal %261 {approx = true} : vector<1x8x1xf32> -> vector<1x8x1xf32>
    %263 = vector.broadcast %262 : vector<1x8x1xf32> to vector<1x8x6xf32>
    %264 = arith.mulf %259, %263 : vector<1x8x6xf32>
    %265 = arith.truncf %264 : vector<1x8x6xf32> to vector<1x8x6xbf16>
    "tpu.trace_start"() <{level = 10 : i32, message = "bqk,bkd->bqd"}> : () -> ()
    %cst_109 = arith.constant dense<0.000000e+00> : vector<1x8x8xf32>
    %266 = tpu.matmul %265, %253, %cst_109 {dimension_numbers = #tpu.dot_dimension_numbers<[2], [1], [1], [2], [0, 0, 0, 1, 1, 2], [0], [0]>} : vector<1x8x6xbf16>, vector<1x6x8xbf16>, vector<1x8x8xf32> -> vector<1x8x8xf32>
    "tpu.trace_stop"() : () -> ()
    %267 = tpu.concatenate %203, %224, %245, %266 in 2 : vector<1x8x8xf32>, vector<1x8x8xf32>, vector<1x8x8xf32>, vector<1x8x8xf32> -> vector<1x8x32xf32>
    %268 = vector.shape_cast %267 : vector<1x8x32xf32> to vector<8x32xf32>
    %269 = arith.truncf %268 : vector<8x32xf32> to vector<8x32xbf16>
    %cst_110 = arith.constant dense<0.000000e+00> : vector<8x32xf32>
    %270 = tpu.matmul %269, %166, %cst_110 {dimension_numbers = #tpu.dot_dimension_numbers<[1], [0], [0], [1], [0, 0, 1, 1], [], []>} : vector<8x32xbf16>, vector<32x32xbf16>, vector<8x32xf32> -> vector<8x32xf32>
    %271 = vector.broadcast %168 : vector<1x32xf32> to vector<8x32xf32>
    %272 = arith.addf %270, %271 : vector<8x32xf32>
    %273 = arith.addf %152, %272 : vector<8x32xf32>
    %c0_111 = arith.constant 0 : index
    %c0_112 = arith.constant 0 : index
    %c0_113 = arith.constant 0 : index
    %274 = vector.load %arg22[%c0_111, %c0_112, %c0_113] : memref<1x1x32xf32, #tpu.memory_space<vmem>>, vector<1x1x32xf32>
    %275 = vector.shape_cast %274 : vector<1x1x32xf32> to vector<1x32xf32>
    %c0_114 = arith.constant 0 : index
    %c0_115 = arith.constant 0 : index
    %c0_116 = arith.constant 0 : index
    %276 = vector.load %arg23[%c0_114, %c0_115, %c0_116] : memref<1x1x32xf32, #tpu.memory_space<vmem>>, vector<1x1x32xf32>
    %277 = vector.shape_cast %276 : vector<1x1x32xf32> to vector<1x32xf32>
    %cst_117 = arith.constant dense<0.000000e+00> : vector<8xf32>
    %278 = vector.multi_reduction <add>, %273, %cst_117 [1] : vector<8x32xf32> to vector<8xf32>
    %279 = vector.shape_cast %278 : vector<8xf32> to vector<8x1xf32>
    %cst_118 = arith.constant 3.200000e+01 : f32
    %280 = vector.broadcast %cst_118 : f32 to vector<8x1xf32>
    %281 = arith.divf %279, %280 : vector<8x1xf32>
    %282 = vector.broadcast %281 : vector<8x1xf32> to vector<8x32xf32>
    %283 = arith.subf %273, %282 : vector<8x32xf32>
    %284 = arith.mulf %283, %283 : vector<8x32xf32>
    %cst_119 = arith.constant dense<0.000000e+00> : vector<8xf32>
    %285 = vector.multi_reduction <add>, %284, %cst_119 [1] : vector<8x32xf32> to vector<8xf32>
    %286 = vector.shape_cast %285 : vector<8xf32> to vector<8x1xf32>
    %cst_120 = arith.constant 3.200000e+01 : f32
    %287 = vector.broadcast %cst_120 : f32 to vector<8x1xf32>
    %288 = arith.divf %286, %287 : vector<8x1xf32>
    %289 = vector.broadcast %281 : vector<8x1xf32> to vector<8x32xf32>
    %290 = arith.subf %273, %289 : vector<8x32xf32>
    %cst_121 = arith.constant 9.99999974E-6 : f32
    %291 = vector.broadcast %cst_121 : f32 to vector<8x1xf32>
    %292 = arith.addf %288, %291 : vector<8x1xf32>
    %293 = math.rsqrt %292 : vector<8x1xf32>
    %294 = vector.broadcast %293 : vector<8x1xf32> to vector<8x32xf32>
    %295 = arith.mulf %290, %294 : vector<8x32xf32>
    %296 = vector.broadcast %275 : vector<1x32xf32> to vector<8x32xf32>
    %297 = arith.mulf %295, %296 : vector<8x32xf32>
    %298 = vector.broadcast %277 : vector<1x32xf32> to vector<8x32xf32>
    %299 = arith.addf %297, %298 : vector<8x32xf32>
    %300 = arith.truncf %299 : vector<8x32xf32> to vector<8x32xbf16>
    %cst_122 = arith.constant 0.000000e+00 : f32
    %301 = vector.broadcast %cst_122 : f32 to vector<8x32xf32>
    %c0_123 = arith.constant 0 : index
    %c0_124 = arith.constant 0 : index
    %c0_125 = arith.constant 0 : index
    %302 = vector.load %arg26[%c0_123, %c0_124, %c0_125] : memref<1x32x128xbf16, #tpu.memory_space<vmem>>, vector<1x32x128xbf16>
    %303 = vector.shape_cast %302 : vector<1x32x128xbf16> to vector<32x128xbf16>
    %cst_126 = arith.constant dense<0.000000e+00> : vector<8x128xf32>
    %304 = tpu.matmul %300, %303, %cst_126 {dimension_numbers = #tpu.dot_dimension_numbers<[1], [0], [0], [1], [0, 0, 1, 1], [], []>} : vector<8x32xbf16>, vector<32x128xbf16>, vector<8x128xf32> -> vector<8x128xf32>
    %c0_127 = arith.constant 0 : index
    %c0_128 = arith.constant 0 : index
    %c0_129 = arith.constant 0 : index
    %305 = vector.load %arg27[%c0_127, %c0_128, %c0_129] : memref<1x1x128xf32, #tpu.memory_space<vmem>>, vector<1x1x128xf32>
    %306 = vector.shape_cast %305 : vector<1x1x128xf32> to vector<1x128xf32>
    %307 = vector.broadcast %306 : vector<1x128xf32> to vector<8x128xf32>
    %308 = arith.addf %304, %307 : vector<8x128xf32>
    %cst_130 = arith.constant 5.000000e-01 : f32
    %309 = vector.broadcast %cst_130 : f32 to vector<8x128xf32>
    %310 = arith.mulf %309, %308 : vector<8x128xf32>
    %cst_131 = arith.constant 0.707106769 : f32
    %311 = vector.broadcast %cst_131 : f32 to vector<8x128xf32>
    %312 = arith.mulf %308, %311 : vector<8x128xf32>
    %cst_132 = arith.constant 0.000000e+00 : f32
    %313 = vector.broadcast %cst_132 : f32 to vector<8x128xf32>
    %314 = arith.cmpf oge, %312, %313 : vector<8x128xf32>
    %cst_133 = arith.constant 1.000000e+00 : f32
    %cst_134 = arith.constant -1.000000e+00 : f32
    %315 = vector.broadcast %cst_133 : f32 to vector<8x128xf32>
    %316 = vector.broadcast %cst_134 : f32 to vector<8x128xf32>
    %317 = arith.select %314, %315, %316 : vector<8x128xi1>, vector<8x128xf32>
    %318 = math.absf %312 : vector<8x128xf32>
    %cst_135 = arith.constant 0.327591091 : f32
    %319 = vector.broadcast %cst_135 : f32 to vector<8x128xf32>
    %320 = arith.mulf %319, %318 : vector<8x128xf32>
    %cst_136 = arith.constant 1.000000e+00 : f32
    %321 = vector.broadcast %cst_136 : f32 to vector<8x128xf32>
    %322 = arith.addf %321, %320 : vector<8x128xf32>
    %cst_137 = arith.constant 1.000000e+00 : f32
    %323 = vector.broadcast %cst_137 : f32 to vector<8x128xf32>
    %324 = arith.divf %323, %322 : vector<8x128xf32>
    %cst_138 = arith.constant 1.06140542 : f32
    %325 = vector.broadcast %cst_138 : f32 to vector<8x128xf32>
    %326 = arith.mulf %325, %324 : vector<8x128xf32>
    %cst_139 = arith.constant -1.45315206 : f32
    %327 = vector.broadcast %cst_139 : f32 to vector<8x128xf32>
    %328 = arith.addf %326, %327 : vector<8x128xf32>
    %329 = arith.mulf %328, %324 : vector<8x128xf32>
    %cst_140 = arith.constant 1.42141378 : f32
    %330 = vector.broadcast %cst_140 : f32 to vector<8x128xf32>
    %331 = arith.addf %329, %330 : vector<8x128xf32>
    %332 = arith.mulf %331, %324 : vector<8x128xf32>
    %cst_141 = arith.constant -0.284496725 : f32
    %333 = vector.broadcast %cst_141 : f32 to vector<8x128xf32>
    %334 = arith.addf %332, %333 : vector<8x128xf32>
    %335 = arith.mulf %334, %324 : vector<8x128xf32>
    %cst_142 = arith.constant 0.254829586 : f32
    %336 = vector.broadcast %cst_142 : f32 to vector<8x128xf32>
    %337 = arith.addf %335, %336 : vector<8x128xf32>
    %338 = arith.mulf %337, %324 : vector<8x128xf32>
    %cst_143 = arith.constant 0.000000e+00 : f32
    %339 = vector.broadcast %cst_143 : f32 to vector<8x128xf32>
    %340 = arith.subf %339, %318 : vector<8x128xf32>
    %341 = arith.mulf %340, %318 : vector<8x128xf32>
    %342 = math.exp %341 : vector<8x128xf32>
    %343 = arith.mulf %338, %342 : vector<8x128xf32>
    %cst_144 = arith.constant 1.000000e+00 : f32
    %344 = vector.broadcast %cst_144 : f32 to vector<8x128xf32>
    %345 = arith.subf %344, %343 : vector<8x128xf32>
    %346 = arith.mulf %317, %345 : vector<8x128xf32>
    %cst_145 = arith.constant 1.000000e+00 : f32
    %347 = vector.broadcast %cst_145 : f32 to vector<8x128xf32>
    %348 = arith.addf %347, %346 : vector<8x128xf32>
    %349 = arith.mulf %310, %348 : vector<8x128xf32>
    %350 = arith.truncf %349 : vector<8x128xf32> to vector<8x128xbf16>
    %c0_146 = arith.constant 0 : index
    %c0_147 = arith.constant 0 : index
    %c0_148 = arith.constant 0 : index
    %351 = vector.load %arg28[%c0_146, %c0_147, %c0_148] : memref<1x128x32xbf16, #tpu.memory_space<vmem>>, vector<1x128x32xbf16>
    %352 = vector.shape_cast %351 : vector<1x128x32xbf16> to vector<128x32xbf16>
    %cst_149 = arith.constant dense<0.000000e+00> : vector<8x32xf32>
    %353 = tpu.matmul %350, %352, %cst_149 {dimension_numbers = #tpu.dot_dimension_numbers<[1], [0], [0], [1], [0, 0, 1, 1], [], []>} : vector<8x128xbf16>, vector<128x32xbf16>, vector<8x32xf32> -> vector<8x32xf32>
    %354 = arith.addf %301, %353 : vector<8x32xf32>
    %c0_150 = arith.constant 0 : index
    %c0_151 = arith.constant 0 : index
    %c0_152 = arith.constant 0 : index
    %355 = vector.load %arg29[%c0_150, %c0_151, %c0_152] : memref<1x1x32xf32, #tpu.memory_space<vmem>>, vector<1x1x32xf32>
    %356 = vector.shape_cast %355 : vector<1x1x32xf32> to vector<1x32xf32>
    %357 = vector.broadcast %356 : vector<1x32xf32> to vector<8x32xf32>
    %358 = arith.addf %354, %357 : vector<8x32xf32>
    %359 = arith.addf %299, %358 : vector<8x32xf32>
    %c0_153 = arith.constant 0 : index
    %c0_154 = arith.constant 0 : index
    %c0_155 = arith.constant 0 : index
    %360 = vector.load %arg24[%c0_153, %c0_154, %c0_155] : memref<1x1x32xf32, #tpu.memory_space<vmem>>, vector<1x1x32xf32>
    %361 = vector.shape_cast %360 : vector<1x1x32xf32> to vector<1x32xf32>
    %c0_156 = arith.constant 0 : index
    %c0_157 = arith.constant 0 : index
    %c0_158 = arith.constant 0 : index
    %362 = vector.load %arg25[%c0_156, %c0_157, %c0_158] : memref<1x1x32xf32, #tpu.memory_space<vmem>>, vector<1x1x32xf32>
    %363 = vector.shape_cast %362 : vector<1x1x32xf32> to vector<1x32xf32>
    %cst_159 = arith.constant dense<0.000000e+00> : vector<8xf32>
    %364 = vector.multi_reduction <add>, %359, %cst_159 [1] : vector<8x32xf32> to vector<8xf32>
    %365 = vector.shape_cast %364 : vector<8xf32> to vector<8x1xf32>
    %cst_160 = arith.constant 3.200000e+01 : f32
    %366 = vector.broadcast %cst_160 : f32 to vector<8x1xf32>
    %367 = arith.divf %365, %366 : vector<8x1xf32>
    %368 = vector.broadcast %367 : vector<8x1xf32> to vector<8x32xf32>
    %369 = arith.subf %359, %368 : vector<8x32xf32>
    %370 = arith.mulf %369, %369 : vector<8x32xf32>
    %cst_161 = arith.constant dense<0.000000e+00> : vector<8xf32>
    %371 = vector.multi_reduction <add>, %370, %cst_161 [1] : vector<8x32xf32> to vector<8xf32>
    %372 = vector.shape_cast %371 : vector<8xf32> to vector<8x1xf32>
    %cst_162 = arith.constant 3.200000e+01 : f32
    %373 = vector.broadcast %cst_162 : f32 to vector<8x1xf32>
    %374 = arith.divf %372, %373 : vector<8x1xf32>
    %375 = vector.broadcast %367 : vector<8x1xf32> to vector<8x32xf32>
    %376 = arith.subf %359, %375 : vector<8x32xf32>
    %cst_163 = arith.constant 9.99999974E-6 : f32
    %377 = vector.broadcast %cst_163 : f32 to vector<8x1xf32>
    %378 = arith.addf %374, %377 : vector<8x1xf32>
    %379 = math.rsqrt %378 : vector<8x1xf32>
    %380 = vector.broadcast %379 : vector<8x1xf32> to vector<8x32xf32>
    %381 = arith.mulf %376, %380 : vector<8x32xf32>
    %382 = vector.broadcast %361 : vector<1x32xf32> to vector<8x32xf32>
    %383 = arith.mulf %381, %382 : vector<8x32xf32>
    %384 = vector.broadcast %363 : vector<1x32xf32> to vector<8x32xf32>
    %385 = arith.addf %383, %384 : vector<8x32xf32>
    %c0_164 = arith.constant 0 : index
    %c0_165 = arith.constant 0 : index
    %386 = vector.load %arg32[%c0_164, %c0_165] : memref<8x32xf32, #tpu.memory_space<vmem>>, vector<8x32xf32>
    tpu.vector_store %arg32[%c0_164, %c0_165], %385 {strides = array<i32>} : memref<8x32xf32, #tpu.memory_space<vmem>>, vector<8x32xf32>,
    %c1_i32 = arith.constant 1 : i32
    %387 = arith.cmpi eq, %arg1, %c1_i32 : i32
    %388 = arith.extui %387 : i1 to i32
    %c0_i32_166 = arith.constant 0 : i32
    %389 = arith.cmpi ne, %388, %c0_i32_166 : i32
    scf.if %389 {
      %390 = arith.truncf %385 : vector<8x32xf32> to vector<8x32xbf16>
      %c0_167 = arith.constant 0 : index
      %c0_168 = arith.constant 0 : index
      %391 = vector.load %arg30[%c0_167, %c0_168] : memref<32x128xbf16, #tpu.memory_space<vmem>>, vector<32x128xbf16>
      %cst_169 = arith.constant dense<0.000000e+00> : vector<8x128xf32>
      %392 = tpu.matmul %390, %391, %cst_169 {dimension_numbers = #tpu.dot_dimension_numbers<[1], [0], [0], [1], [0, 0, 1, 1], [], []>} : vector<8x32xbf16>, vector<32x128xbf16>, vector<8x128xf32> -> vector<8x128xf32>
      %c0_170 = arith.constant 0 : index
      %c0_171 = arith.constant 0 : index
      %c0_172 = arith.constant 0 : index
      %393 = vector.load %arg31[%c0_170, %c0_171, %c0_172] : memref<1x8x128xf32, #tpu.memory_space<vmem>>, vector<1x8x128xf32>
      %394 = vector.shape_cast %393 : vector<1x8x128xf32> to vector<8x128xf32>
      %395 = vector.shape_cast %392 : vector<8x128xf32> to vector<1x8x128xf32>
      tpu.vector_store %arg31[%c0_170, %c0_171, %c0_172], %395 {strides = array<i32>} : memref<1x8x128xf32, #tpu.memory_space<vmem>>, vector<1x8x128xf32>,
    } else {
    }
    return
  }
  func.func @transform_0(%arg0: i32, %arg1: i32) -> (i32, i32, i32) {
    %c0_i32 = arith.constant 0 : i32
    %c0_i32_0 = arith.constant 0 : i32
    %c0_i32_1 = arith.constant 0 : i32
    return %arg0, %c0_i32, %c0_i32_0 : i32, i32, i32
  }
  func.func @transform_1(%arg0: i32, %arg1: i32) -> (i32, i32, i32) {
    %c0_i32 = arith.constant 0 : i32
    %c0_i32_0 = arith.constant 0 : i32
    %c0_i32_1 = arith.constant 0 : i32
    return %arg0, %c0_i32, %c0_i32_0 : i32, i32, i32
  }
  func.func @transform_2(%arg0: i32, %arg1: i32) -> (i32, i32, i32) {
    %c0_i32 = arith.constant 0 : i32
    %c0_i32_0 = arith.constant 0 : i32
    %c0_i32_1 = arith.constant 0 : i32
    return %arg1, %c0_i32, %c0_i32_0 : i32, i32, i32
  }
  func.func @transform_3(%arg0: i32, %arg1: i32) -> (i32, i32, i32) {
    %c0_i32 = arith.constant 0 : i32
    %c0_i32_0 = arith.constant 0 : i32
    %c0_i32_1 = arith.constant 0 : i32
    return %arg1, %c0_i32, %c0_i32_0 : i32, i32, i32
  }
  func.func @transform_4(%arg0: i32, %arg1: i32) -> (i32, i32, i32) {
    %c0_i32 = arith.constant 0 : i32
    %c0_i32_0 = arith.constant 0 : i32
    %c0_i32_1 = arith.constant 0 : i32
    return %arg1, %c0_i32, %c0_i32_0 : i32, i32, i32
  }
  func.func @transform_5(%arg0: i32, %arg1: i32) -> (i32, i32, i32) {
    %c0_i32 = arith.constant 0 : i32
    %c0_i32_0 = arith.constant 0 : i32
    %c0_i32_1 = arith.constant 0 : i32
    return %arg1, %c0_i32, %c0_i32_0 : i32, i32, i32
  }
  func.func @transform_6(%arg0: i32, %arg1: i32) -> (i32, i32, i32) {
    %c0_i32 = arith.constant 0 : i32
    %c0_i32_0 = arith.constant 0 : i32
    %c0_i32_1 = arith.constant 0 : i32
    return %arg1, %c0_i32, %c0_i32_0 : i32, i32, i32
  }
  func.func @transform_7(%arg0: i32, %arg1: i32) -> (i32, i32, i32) {
    %c0_i32 = arith.constant 0 : i32
    %c0_i32_0 = arith.constant 0 : i32
    %c0_i32_1 = arith.constant 0 : i32
    return %arg1, %c0_i32, %c0_i32_0 : i32, i32, i32
  }
  func.func @transform_8(%arg0: i32, %arg1: i32) -> (i32, i32, i32) {
    %c0_i32 = arith.constant 0 : i32
    %c0_i32_0 = arith.constant 0 : i32
    %c0_i32_1 = arith.constant 0 : i32
    return %arg1, %c0_i32, %c0_i32_0 : i32, i32, i32
  }
  func.func @transform_9(%arg0: i32, %arg1: i32) -> (i32, i32, i32) {
    %c0_i32 = arith.constant 0 : i32
    %c0_i32_0 = arith.constant 0 : i32
    %c0_i32_1 = arith.constant 0 : i32
    return %arg1, %c0_i32, %c0_i32_0 : i32, i32, i32
  }
  func.func @transform_10(%arg0: i32, %arg1: i32) -> (i32, i32, i32) {
    %c0_i32 = arith.constant 0 : i32
    %c0_i32_0 = arith.constant 0 : i32
    %c0_i32_1 = arith.constant 0 : i32
    return %arg1, %c0_i32, %c0_i32_0 : i32, i32, i32
  }
  func.func @transform_11(%arg0: i32, %arg1: i32) -> (i32, i32, i32) {
    %c0_i32 = arith.constant 0 : i32
    %c0_i32_0 = arith.constant 0 : i32
    %c0_i32_1 = arith.constant 0 : i32
    return %arg1, %c0_i32, %c0_i32_0 : i32, i32, i32
  }
  func.func @transform_12(%arg0: i32, %arg1: i32) -> (i32, i32, i32) {
    %c0_i32 = arith.constant 0 : i32
    %c0_i32_0 = arith.constant 0 : i32
    %c0_i32_1 = arith.constant 0 : i32
    return %arg1, %c0_i32, %c0_i32_0 : i32, i32, i32
  }
  func.func @transform_13(%arg0: i32, %arg1: i32) -> (i32, i32, i32) {
    %c0_i32 = arith.constant 0 : i32
    %c0_i32_0 = arith.constant 0 : i32
    %c0_i32_1 = arith.constant 0 : i32
    return %arg1, %c0_i32, %c0_i32_0 : i32, i32, i32
  }
  func.func @transform_14(%arg0: i32, %arg1: i32) -> (i32, i32, i32) {
    %c0_i32 = arith.constant 0 : i32
    %c0_i32_0 = arith.constant 0 : i32
    %c0_i32_1 = arith.constant 0 : i32
    return %arg1, %c0_i32, %c0_i32_0 : i32, i32, i32
  }
  func.func @transform_15(%arg0: i32, %arg1: i32) -> (i32, i32, i32) {
    %c0_i32 = arith.constant 0 : i32
    %c0_i32_0 = arith.constant 0 : i32
    %c0_i32_1 = arith.constant 0 : i32
    return %arg1, %c0_i32, %c0_i32_0 : i32, i32, i32
  }
  func.func @transform_16(%arg0: i32, %arg1: i32) -> (i32, i32, i32) {
    %c0_i32 = arith.constant 0 : i32
    %c0_i32_0 = arith.constant 0 : i32
    %c0_i32_1 = arith.constant 0 : i32
    return %arg1, %c0_i32, %c0_i32_0 : i32, i32, i32
  }
  func.func @transform_17(%arg0: i32, %arg1: i32) -> (i32, i32, i32) {
    %c0_i32 = arith.constant 0 : i32
    %c0_i32_0 = arith.constant 0 : i32
    %c0_i32_1 = arith.constant 0 : i32
    return %arg1, %c0_i32, %c0_i32_0 : i32, i32, i32
  }
  func.func @transform_18(%arg0: i32, %arg1: i32) -> (i32, i32, i32) {
    %c0_i32 = arith.constant 0 : i32
    %c0_i32_0 = arith.constant 0 : i32
    %c0_i32_1 = arith.constant 0 : i32
    return %arg1, %c0_i32, %c0_i32_0 : i32, i32, i32
  }
  func.func @transform_19(%arg0: i32, %arg1: i32) -> (i32, i32, i32) {
    %c0_i32 = arith.constant 0 : i32
    %c0_i32_0 = arith.constant 0 : i32
    %c0_i32_1 = arith.constant 0 : i32
    return %arg1, %c0_i32, %c0_i32_0 : i32, i32, i32
  }
  func.func @transform_20(%arg0: i32, %arg1: i32) -> (i32, i32, i32) {
    %c0_i32 = arith.constant 0 : i32
    %c0_i32_0 = arith.constant 0 : i32
    %c0_i32_1 = arith.constant 0 : i32
    return %arg1, %c0_i32, %c0_i32_0 : i32, i32, i32
  }
  func.func @transform_21(%arg0: i32, %arg1: i32) -> (i32, i32, i32) {
    %c0_i32 = arith.constant 0 : i32
    %c0_i32_0 = arith.constant 0 : i32
    %c0_i32_1 = arith.constant 0 : i32
    return %arg1, %c0_i32, %c0_i32_0 : i32, i32, i32
  }
  func.func @transform_22(%arg0: i32, %arg1: i32) -> (i32, i32, i32) {
    %c0_i32 = arith.constant 0 : i32
    %c0_i32_0 = arith.constant 0 : i32
    %c0_i32_1 = arith.constant 0 : i32
    return %arg1, %c0_i32, %c0_i32_0 : i32, i32, i32
  }
  func.func @transform_23(%arg0: i32, %arg1: i32) -> (i32, i32, i32) {
    %c0_i32 = arith.constant 0 : i32
    %c0_i32_0 = arith.constant 0 : i32
    %c0_i32_1 = arith.constant 0 : i32
    return %arg1, %c0_i32, %c0_i32_0 : i32, i32, i32
  }
  func.func @transform_24(%arg0: i32, %arg1: i32) -> (i32, i32, i32) {
    %c0_i32 = arith.constant 0 : i32
    %c0_i32_0 = arith.constant 0 : i32
    %c0_i32_1 = arith.constant 0 : i32
    return %arg1, %c0_i32, %c0_i32_0 : i32, i32, i32
  }
  func.func @transform_25(%arg0: i32, %arg1: i32) -> (i32, i32, i32) {
    %c0_i32 = arith.constant 0 : i32
    %c0_i32_0 = arith.constant 0 : i32
    %c0_i32_1 = arith.constant 0 : i32
    return %arg1, %c0_i32, %c0_i32_0 : i32, i32, i32
  }
  func.func @transform_26(%arg0: i32, %arg1: i32) -> (i32, i32, i32) {
    %c0_i32 = arith.constant 0 : i32
    %c0_i32_0 = arith.constant 0 : i32
    %c0_i32_1 = arith.constant 0 : i32
    return %arg1, %c0_i32, %c0_i32_0 : i32, i32, i32
  }
  func.func @transform_27(%arg0: i32, %arg1: i32) -> (i32, i32, i32) {
    %c0_i32 = arith.constant 0 : i32
    %c0_i32_0 = arith.constant 0 : i32
    %c0_i32_1 = arith.constant 0 : i32
    return %arg1, %c0_i32, %c0_i32_0 : i32, i32, i32
  }
  func.func @transform_28(%arg0: i32, %arg1: i32) -> (i32, i32) {
    %c0_i32 = arith.constant 0 : i32
    %c0_i32_0 = arith.constant 0 : i32
    %c0_i32_1 = arith.constant 0 : i32
    return %c0_i32, %c0_i32_0 : i32, i32
  }
  func.func @transform_29(%arg0: i32, %arg1: i32) -> (i32, i32, i32) {
    %c0_i32 = arith.constant 0 : i32
    %c0_i32_0 = arith.constant 0 : i32
    %c0_i32_1 = arith.constant 0 : i32
    return %arg0, %c0_i32, %c0_i32_0 : i32, i32, i32
  }
}

</mosaic_0001>

<llo_original>
// kernel: tpu_custom_call.1
$region0: #{tpu_custom_call.1}
  #allocation0 [shape = 'u32[]', space=smem, size = 0x4, offset = 0x4, fixed_abs, tag = 'smem constant byte address 0x4 - core index']
  #allocation1 [shape = 'u32[72,128]{1,0:T(1,128)}', space=vmem, size = 0x9000, scoped, tag = 'internal scratch']
  #allocation2 [shape = 'f32[8,32]{1,0:T(8,128)}', space=vmem, size = 0x1000, scoped, tag = 'scratch operand']
  %s0 = inlined_call_operand.smem [shape: u32[30], index: -1, kind: input, shape index: {}]
  %s1 = sld [smem:[%s0]]
  %s2 = scalar_lea.smem %s0, 1
  %s3 = sld [smem:[%s2]]
  %s4 = scalar_lea.smem %s0, 2
  %s5 = sld [smem:[%s4]]
  %s6 = scalar_lea.smem %s0, 3
  %s7 = sld [smem:[%s6]]
  %s8 = scalar_lea.smem %s0, 4
  %s9 = sld [smem:[%s8]]
  %s10 = scalar_lea.smem %s0, 5
  %s11 = sld [smem:[%s10]]
  %s12 = scalar_lea.smem %s0, 6
  %s13 = sld [smem:[%s12]]
  %s14 = scalar_lea.smem %s0, 7
  %s15 = sld [smem:[%s14]]
  %s16 = scalar_lea.smem %s0, 8
  %s17 = sld [smem:[%s16]]
  %s18 = scalar_lea.smem %s0, 9
  %s19 = sld [smem:[%s18]]
  %s20 = scalar_lea.smem %s0, 10
  %s21 = sld [smem:[%s20]]
  %s22 = scalar_lea.smem %s0, 11
  %s23 = sld [smem:[%s22]]
  %s24 = scalar_lea.smem %s0, 12
  %s25 = sld [smem:[%s24]]
  %s26 = scalar_lea.smem %s0, 13
  %s27 = sld [smem:[%s26]]
  %s28 = scalar_lea.smem %s0, 14
  %s29 = sld [smem:[%s28]]
  %s30 = scalar_lea.smem %s0, 15
  %s31 = sld [smem:[%s30]]
  %s32 = scalar_lea.smem %s0, 16
  %s33 = sld [smem:[%s32]]
  %s34 = scalar_lea.smem %s0, 17
  %s35 = sld [smem:[%s34]]
  %s36 = scalar_lea.smem %s0, 18
  %s37 = sld [smem:[%s36]]
  %s38 = scalar_lea.smem %s0, 19
  %s39 = sld [smem:[%s38]]
  %s40 = scalar_lea.smem %s0, 20
  %s41 = sld [smem:[%s40]]
  %s42 = scalar_lea.smem %s0, 21
  %s43 = sld [smem:[%s42]]
  %s44 = scalar_lea.smem %s0, 22
  %s45 = sld [smem:[%s44]]
  %s46 = scalar_lea.smem %s0, 23
  %s47 = sld [smem:[%s46]]
  %s48 = scalar_lea.smem %s0, 24
  %s49 = sld [smem:[%s48]]
  %s50 = scalar_lea.smem %s0, 25
  %s51 = sld [smem:[%s50]]
  %s52 = scalar_lea.smem %s0, 26
  %s53 = sld [smem:[%s52]]
  %s54 = scalar_lea.smem %s0, 27
  %s55 = sld [smem:[%s54]]
  %s56 = scalar_lea.smem %s0, 28
  %s57 = sld [smem:[%s56]]
  %s58 = scalar_lea.smem %s0, 29
  %s59 = sld [smem:[%s58]]
  %s60 = sld [smem:[#allocation0]]
  $region233: #{tpu_custom_call.1} parent=0
    _
  %s62 = ssub.s32 1, %s60
  %s63 = scalar_select 0, %s62, %s60
  $region1: #{tpu_custom_call.1} parent=0
    #allocation3 [shape = 'u8[1024]{0}', space=vmem, size = 0x400, scoped, tag = 'input window, operand 7']
    #allocation4 [shape = 's32[2]{0}', space=sflag, size = 0x8, scoped, tag = 'scoped memory for tpu_custom_call.1']
    #allocation5 [shape = 's32[2]{0}', space=sflag, size = 0x8, scoped, tag = 'scoped memory for tpu_custom_call.1']
    #allocation6 [shape = 'u8[1024]{0}', space=vmem, size = 0x400, scoped, tag = 'input window, operand 9']
    #allocation7 [shape = 's32[2]{0}', space=sflag, size = 0x8, scoped, tag = 'scoped memory for tpu_custom_call.1']
    #allocation8 [shape = 'u8[16384]{0}', space=vmem, size = 0x4000, scoped, tag = 'input window, operand 11']
    #allocation9 [shape = 'u8[16384]{0}', space=vmem, size = 0x4000, scoped, tag = 'input window, operand 12']
    #allocation10 [shape = 's32[2]{0}', space=sflag, size = 0x8, scoped, tag = 'scoped memory for tpu_custom_call.1']
    #allocation11 [shape = 'u8[1024]{0}', space=vmem, size = 0x400, scoped, tag = 'input window, operand 13']
    #allocation12 [shape = 'u8[1024]{0}', space=vmem, size = 0x400, scoped, tag = 'input window, operand 14']
    #allocation13 [shape = 's32[2]{0}', space=sflag, size = 0x8, scoped, tag = 'scoped memory for tpu_custom_call.1']
    #allocation14 [shape = 'u8[1024]{0}', space=vmem, size = 0x400, scoped, tag = 'input window, operand 15']
    #allocation15 [shape = 'u8[16384]{0}', space=vmem, size = 0x4000, scoped, tag = 'input window, operand 16']
    #allocation16 [shape = 's32[2]{0}', space=sflag, size = 0x8, scoped, tag = 'scoped memory for tpu_custom_call.1']
    #allocation17 [shape = 'u8[1024]{0}', space=vmem, size = 0x400, scoped, tag = 'input window, operand 17']
    #allocation18 [shape = 'u8[1024]{0}', space=vmem, size = 0x400, scoped, tag = 'input window, operand 18']
    #allocation19 [shape = 's32[2]{0}', space=sflag, size = 0x8, scoped, tag = 'scoped memory for tpu_custom_call.1']
    #allocation20 [shape = 'u8[1024]{0}', space=vmem, size = 0x400, scoped, tag = 'input window, operand 19']
    #allocation21 [shape = 'u8[1024]{0}', space=vmem, size = 0x400, scoped, tag = 'input window, operand 20']
    #allocation22 [shape = 's32[2]{0}', space=sflag, size = 0x8, scoped, tag = 'scoped memory for tpu_custom_call.1']
    #allocation23 [shape = 'u8[1024]{0}', space=vmem, size = 0x400, scoped, tag = 'input window, operand 21']
    #allocation24 [shape = 'u8[1024]{0}', space=vmem, size = 0x400, scoped, tag = 'input window, operand 22']
    #allocation25 [shape = 's32[2]{0}', space=sflag, size = 0x8, scoped, tag = 'scoped memory for tpu_custom_call.1']
    #allocation26 [shape = 'u8[1024]{0}', space=vmem, size = 0x400, scoped, tag = 'input window, operand 23']
    #allocation27 [shape = 'u8[16384]{0}', space=vmem, size = 0x4000, scoped, tag = 'input window, operand 24']
    #allocation28 [shape = 's32[2]{0}', space=sflag, size = 0x8, scoped, tag = 'scoped memory for tpu_custom_call.1']
    #allocation29 [shape = 'u8[1024]{0}', space=vmem, size = 0x400, scoped, tag = 'input window, operand 25']
    #allocation30 [shape = 'u8[1024]{0}', space=vmem, size = 0x400, scoped, tag = 'input window, operand 27']
    #allocation31 [shape = 's32[2]{0}', space=sflag, size = 0x8, scoped, tag = 'scoped memory for tpu_custom_call.1']
    #allocation32 [shape = 'u8[8192]{0}', space=vmem, size = 0x2000, scoped, tag = 'input window, operand 28, single buffered']
    #allocation33 [shape = 'u8[8192]{0}', space=vmem, size = 0x2000, scoped, tag = 'output window, operand 0']
    %64 = vsyncpa [#allocation4], 0
    %s65 = scalar_lea.sflag [#allocation4], 1
    %66 = vsyncpa %s65, 0
    %67 = vsyncpa [#allocation7], 0
    %s68 = scalar_lea.sflag [#allocation7], 1
    %69 = vsyncpa %s68, 0
    %70 = vsyncpa [#allocation10], 0
    %s71 = scalar_lea.sflag [#allocation10], 1
    %72 = vsyncpa %s71, 0
    %73 = vsyncpa [#allocation13], 0
    %s74 = scalar_lea.sflag [#allocation13], 1
    %75 = vsyncpa %s74, 0
    %76 = vsyncpa [#allocation16], 0
    %s77 = scalar_lea.sflag [#allocation16], 1
    %78 = vsyncpa %s77, 0
    %79 = vsyncpa [#allocation19], 0
    %s80 = scalar_lea.sflag [#allocation19], 1
    %81 = vsyncpa %s80, 0
    %82 = vsyncpa [#allocation22], 0
    %s83 = scalar_lea.sflag [#allocation22], 1
    %84 = vsyncpa %s83, 0
    %85 = vsyncpa [#allocation25], 0
    %s86 = scalar_lea.sflag [#allocation25], 1
    %87 = vsyncpa %s86, 0
    %88 = vsyncpa [#allocation28], 0
    %s89 = scalar_lea.sflag [#allocation28], 1
    %90 = vsyncpa %s89, 0
    %91 = vsyncpa [#allocation31], 0
    %s92 = scalar_lea.sflag [#allocation31], 1
    %93 = vsyncpa %s92, 0
    %94 = vsyncpa [#allocation5], 0
    %s95 = scalar_lea.sflag [#allocation5], 1
    %96 = vsyncpa %s95, 0
    loop: start=0, step=1, limit=6
    $region2: #{tpu_custom_call.1} parent=1 // loop_pre_header
      _
    $region3: #{tpu_custom_call.1} parent=1 // loop_header
      %s98 = sphi 0, %s102
      %p99 = scmp.ge.s32.totalorder %s98, 6
      %s105 = sphi 0, %s117
      %s106 = sphi 0, %s113
      %s107 = sphi 0, %s105
      %s108 = sphi 0, %s106
      %s109 = sphi 0, %s107
      %s110 = sphi 0, %s108
      %s120 = sphi 0, %s122
      %s123 = sphi 0, %s120
      %s124 = sphi 0, %s123
      %s140 = sphi 0, %s124
      %s146 = sphi 0, %s148
      %s149 = sphi 0, %s146
      %s150 = sphi 0, %s149
      %s166 = sphi 0, %s150
      %s172 = sphi 0, %s174
      %s175 = sphi 0, %s172
      %s176 = sphi 0, %s175
      %s192 = sphi 0, %s176
      %s198 = sphi 0, %s200
      %s201 = sphi 0, %s198
      %s202 = sphi 0, %s201
      %s218 = sphi 0, %s202
      %s224 = sphi 0, %s226
      %s227 = sphi 0, %s224
      %s228 = sphi 0, %s227
      %s244 = sphi 0, %s228
      %s250 = sphi 0, %s252
      %s253 = sphi 0, %s250
      %s254 = sphi 0, %s253
      %s270 = sphi 0, %s254
      %s276 = sphi 0, %s278
      %s279 = sphi 0, %s276
      %s280 = sphi 0, %s279
      %s296 = sphi 0, %s280
      %s302 = sphi 0, %s304
      %s305 = sphi 0, %s302
      %s306 = sphi 0, %s305
      %s322 = sphi 0, %s306
      %s328 = sphi 0, %s330
      %s331 = sphi 0, %s328
      %s332 = sphi 0, %s331
      %s348 = sphi 0, %s332
      %s354 = sphi 0, %s356
      %s357 = sphi 0, %s354
      %s358 = sphi 0, %s357
      %s374 = sphi 0, %s358
      %s380 = sphi 0, %s382
      %s383 = sphi 0, %s380
      %s384 = sphi 0, %s383
      %s400 = sphi 0, %s384
      %s406 = sphi 0, %s408
      %s409 = sphi 0, %s406
      %s410 = sphi 0, %s409
      %s426 = sphi 0, %s410
      %s432 = sphi 0, %s434
      %s435 = sphi 0, %s432
      %s436 = sphi 0, %s435
      %s452 = sphi 0, %s436
      %s458 = sphi 0, %s460
      %s461 = sphi 0, %s458
      %s462 = sphi 0, %s461
      %s478 = sphi 0, %s462
      %s484 = sphi 0, %s486
      %s487 = sphi 0, %s484
      %s488 = sphi 0, %s487
      %s504 = sphi 0, %s488
      %s510 = sphi 0, %s512
      %s513 = sphi 0, %s510
      %s514 = sphi 0, %s513
      %s530 = sphi 0, %s514
      %s536 = sphi 0, %s538
      %s539 = sphi 0, %s536
      %s540 = sphi 0, %s539
      %s556 = sphi 0, %s540
      %s562 = sphi 0, %s564
      %s565 = sphi 0, %s562
      %s566 = sphi 0, %s565
      %s582 = sphi 0, %s566
      %s588 = sphi 0, %s590
      %s591 = sphi 0, %s588
      %s592 = sphi 0, %s591
      %s608 = sphi 0, %s592
      %s614 = sphi 0, %s616
      %s617 = sphi 0, %s614
      %s618 = sphi 0, %s617
      %s634 = sphi 0, %s618
      %s640 = sphi 0, %s642
      %s643 = sphi 0, %s640
      %s644 = sphi 0, %s643
      %s660 = sphi 0, %s644
      %s666 = sphi 0, %s668
      %s669 = sphi 0, %s666
      %s670 = sphi 0, %s669
      %s686 = sphi 0, %s670
      %s692 = sphi 0, %s694
      %s695 = sphi 0, %s692
      %s696 = sphi 0, %s695
      %s712 = sphi 0, %s696
      %s718 = sphi 0, %s720
      %s721 = sphi 0, %s718
      %s722 = sphi 0, %s721
      %s738 = sphi 0, %s722
      %s744 = sphi 0, %s746
      %s747 = sphi 0, %s744
      %s748 = sphi 0, %s747
      %s764 = sphi 0, %s748
      %s770 = sphi 0, %s772
      %s773 = sphi 0, %s770
      %s774 = sphi 0, %s773
      %s790 = sphi 0, %s774
      %s796 = sphi 0, %s798
      %s799 = sphi 0, %s796
      %s800 = sphi 0, %s799
      %s816 = sphi 0, %s800
      %s822 = sphi 0, %s824
      %s825 = sphi 0, %s822
      %s826 = sphi 0, %s825
      %s842 = sphi 0, %s826
      %s846 = sphi 0, %s846
      %s848 = sphi 0, %s846
      %s849 = sphi 0, %s848
      %s863 = sphi 0, %s849
      %s869 = sphi 0, %s871
      %s872 = sphi 0, %s869
      %s873 = sphi 0, %s872
      %s889 = sphi 0, %s873
    $region4: #{tpu_custom_call.1} parent=1 // loop_header_branch
      %101 = sbr.rel (%p99) target = $region8
    $region5: #{tpu_custom_call.1} parent=1 // loop_body
      %s103 = ssub.s32 %s98, 1
      %s104 = ssub.s32 %s98, 2
      %s111 = sadd.s32 1, %s106
      %p112 = scmp.ge.s32.totalorder %s111, 2
      %s113 = scalar_select %p112, 0, %s111
      %s114 = sadd.s32 1, %s105
      %s115 = scalar_select %p112, %s114, %s105
      %p116 = scmp.ge.s32.totalorder %s115, 2
      %s117 = scalar_select %p116, 0, %s115
      %s118 = ssub.s32 %s105, %s117
      %p119 = scmp.eq.s32.totalorder %s118, 0
      %s121 = sadd.s32 %s120, 1
      %s122 = scalar_select %p119, %s120, %s121
      %p125 = pneg %p119
      %p126 = scmp.eq.s32.totalorder %s98, 3
      %p127 = por %p125, %p126
      %p128 = scmp.ne.s32.totalorder %s120, %s123
      %p129 = scmp.eq.s32.totalorder %s98, 0
      %p130 = por %p128, %p129
      %p131 = scmp.ne.s32.totalorder %s120, %s123
      %p132 = scmp.eq.s32.totalorder %s103, 3
      %p133 = por %p131, %p132
      %p134 = scmp.ne.s32.totalorder %s123, %s124
      %p135 = scmp.eq.s32.totalorder %s103, 0
      %p136 = por %p134, %p135
      %p137 = scmp.ne.s32.totalorder %s123, %s124
      %p138 = scmp.eq.s32.totalorder %s104, 3
      %p139 = por %p137, %p138
      %p141 = scmp.ne.s32.totalorder %s124, %s140
      %p142 = scmp.eq.s32.totalorder %s104, 0
      %p143 = por %p141, %p142
      %s144 = ssub.s32 %s105, %s117
      %p145 = scmp.eq.s32.totalorder %s144, 0
      %s147 = sadd.s32 %s146, 1
      %s148 = scalar_select %p145, %s146, %s147
      %p151 = pneg %p145
      %p152 = scmp.eq.s32.totalorder %s98, 3
      %p153 = por %p151, %p152
      %p154 = scmp.ne.s32.totalorder %s146, %s149
      %p155 = scmp.eq.s32.totalorder %s98, 0
      %p156 = por %p154, %p155
      %p157 = scmp.ne.s32.totalorder %s146, %s149
      %p158 = scmp.eq.s32.totalorder %s103, 3
      %p159 = por %p157, %p158
      %p160 = scmp.ne.s32.totalorder %s149, %s150
      %p161 = scmp.eq.s32.totalorder %s103, 0
      %p162 = por %p160, %p161
      %p163 = scmp.ne.s32.totalorder %s149, %s150
      %p164 = scmp.eq.s32.totalorder %s104, 3
      %p165 = por %p163, %p164
      %p167 = scmp.ne.s32.totalorder %s150, %s166
      %p168 = scmp.eq.s32.totalorder %s104, 0
      %p169 = por %p167, %p168
      %s170 = ssub.s32 %s106, %s113
      %p171 = scmp.eq.s32.totalorder %s170, 0
      %s173 = sadd.s32 %s172, 1
      %s174 = scalar_select %p171, %s172, %s173
      %p177 = pneg %p171
      %p178 = scmp.eq.s32.totalorder %s98, 3
      %p179 = por %p177, %p178
      %p180 = scmp.ne.s32.totalorder %s172, %s175
      %p181 = scmp.eq.s32.totalorder %s98, 0
      %p182 = por %p180, %p181
      %p183 = scmp.ne.s32.totalorder %s172, %s175
      %p184 = scmp.eq.s32.totalorder %s103, 3
      %p185 = por %p183, %p184
      %p186 = scmp.ne.s32.totalorder %s175, %s176
      %p187 = scmp.eq.s32.totalorder %s103, 0
      %p188 = por %p186, %p187
      %p189 = scmp.ne.s32.totalorder %s175, %s176
      %p190 = scmp.eq.s32.totalorder %s104, 3
      %p191 = por %p189, %p190
      %p193 = scmp.ne.s32.totalorder %s176, %s192
      %p194 = scmp.eq.s32.totalorder %s104, 0
      %p195 = por %p193, %p194
      %s196 = ssub.s32 %s106, %s113
      %p197 = scmp.eq.s32.totalorder %s196, 0
      %s199 = sadd.s32 %s198, 1
      %s200 = scalar_select %p197, %s198, %s199
      %p203 = pneg %p197
      %p204 = scmp.eq.s32.totalorder %s98, 3
      %p205 = por %p203, %p204
      %p206 = scmp.ne.s32.totalorder %s198, %s201
      %p207 = scmp.eq.s32.totalorder %s98, 0
      %p208 = por %p206, %p207
      %p209 = scmp.ne.s32.totalorder %s198, %s201
      %p210 = scmp.eq.s32.totalorder %s103, 3
      %p211 = por %p209, %p210
      %p212 = scmp.ne.s32.totalorder %s201, %s202
      %p213 = scmp.eq.s32.totalorder %s103, 0
      %p214 = por %p212, %p213
      %p215 = scmp.ne.s32.totalorder %s201, %s202
      %p216 = scmp.eq.s32.totalorder %s104, 3
      %p217 = por %p215, %p216
      %p219 = scmp.ne.s32.totalorder %s202, %s218
      %p220 = scmp.eq.s32.totalorder %s104, 0
      %p221 = por %p219, %p220
      %s222 = ssub.s32 %s106, %s113
      %p223 = scmp.eq.s32.totalorder %s222, 0
      %s225 = sadd.s32 %s224, 1
      %s226 = scalar_select %p223, %s224, %s225
      %p229 = pneg %p223
      %p230 = scmp.eq.s32.totalorder %s98, 3
      %p231 = por %p229, %p230
      %p232 = scmp.ne.s32.totalorder %s224, %s227
      %p233 = scmp.eq.s32.totalorder %s98, 0
      %p234 = por %p232, %p233
      %p235 = scmp.ne.s32.totalorder %s224, %s227
      %p236 = scmp.eq.s32.totalorder %s103, 3
      %p237 = por %p235, %p236
      %p238 = scmp.ne.s32.totalorder %s227, %s228
      %p239 = scmp.eq.s32.totalorder %s103, 0
      %p240 = por %p238, %p239
      %p241 = scmp.ne.s32.totalorder %s227, %s228
      %p242 = scmp.eq.s32.totalorder %s104, 3
      %p243 = por %p241, %p242
      %p245 = scmp.ne.s32.totalorder %s228, %s244
      %p246 = scmp.eq.s32.totalorder %s104, 0
      %p247 = por %p245, %p246
      %s248 = ssub.s32 %s106, %s113
      %p249 = scmp.eq.s32.totalorder %s248, 0
      %s251 = sadd.s32 %s250, 1
      %s252 = scalar_select %p249, %s250, %s251
      %p255 = pneg %p249
      %p256 = scmp.eq.s32.totalorder %s98, 3
      %p257 = por %p255, %p256
      %p258 = scmp.ne.s32.totalorder %s250, %s253
      %p259 = scmp.eq.s32.totalorder %s98, 0
      %p260 = por %p258, %p259
      %p261 = scmp.ne.s32.totalorder %s250, %s253
      %p262 = scmp.eq.s32.totalorder %s103, 3
      %p263 = por %p261, %p262
      %p264 = scmp.ne.s32.totalorder %s253, %s254
      %p265 = scmp.eq.s32.totalorder %s103, 0
      %p266 = por %p264, %p265
      %p267 = scmp.ne.s32.totalorder %s253, %s254
      %p268 = scmp.eq.s32.totalorder %s104, 3
      %p269 = por %p267, %p268
      %p271 = scmp.ne.s32.totalorder %s254, %s270
      %p272 = scmp.eq.s32.totalorder %s104, 0
      %p273 = por %p271, %p272
      %s274 = ssub.s32 %s106, %s113
      %p275 = scmp.eq.s32.totalorder %s274, 0
      %s277 = sadd.s32 %s276, 1
      %s278 = scalar_select %p275, %s276, %s277
      %p281 = pneg %p275
      %p282 = scmp.eq.s32.totalorder %s98, 3
      %p283 = por %p281, %p282
      %p284 = scmp.ne.s32.totalorder %s276, %s279
      %p285 = scmp.eq.s32.totalorder %s98, 0
      %p286 = por %p284, %p285
      %p287 = scmp.ne.s32.totalorder %s276, %s279
      %p288 = scmp.eq.s32.totalorder %s103, 3
      %p289 = por %p287, %p288
      %p290 = scmp.ne.s32.totalorder %s279, %s280
      %p291 = scmp.eq.s32.totalorder %s103, 0
      %p292 = por %p290, %p291
      %p293 = scmp.ne.s32.totalorder %s279, %s280
      %p294 = scmp.eq.s32.totalorder %s104, 3
      %p295 = por %p293, %p294
      %p297 = scmp.ne.s32.totalorder %s280, %s296
      %p298 = scmp.eq.s32.totalorder %s104, 0
      %p299 = por %p297, %p298
      %s300 = ssub.s32 %s106, %s113
      %p301 = scmp.eq.s32.totalorder %s300, 0
      %s303 = sadd.s32 %s302, 1
      %s304 = scalar_select %p301, %s302, %s303
      %p307 = pneg %p301
      %p308 = scmp.eq.s32.totalorder %s98, 3
      %p309 = por %p307, %p308
      %p310 = scmp.ne.s32.totalorder %s302, %s305
      %p311 = scmp.eq.s32.totalorder %s98, 0
      %p312 = por %p310, %p311
      %p313 = scmp.ne.s32.totalorder %s302, %s305
      %p314 = scmp.eq.s32.totalorder %s103, 3
      %p315 = por %p313, %p314
      %p316 = scmp.ne.s32.totalorder %s305, %s306
      %p317 = scmp.eq.s32.totalorder %s103, 0
      %p318 = por %p316, %p317
      %p319 = scmp.ne.s32.totalorder %s305, %s306
      %p320 = scmp.eq.s32.totalorder %s104, 3
      %p321 = por %p319, %p320
      %p323 = scmp.ne.s32.totalorder %s306, %s322
      %p324 = scmp.eq.s32.totalorder %s104, 0
      %p325 = por %p323, %p324
      %s326 = ssub.s32 %s106, %s113
      %p327 = scmp.eq.s32.totalorder %s326, 0
      %s329 = sadd.s32 %s328, 1
      %s330 = scalar_select %p327, %s328, %s329
      %p333 = pneg %p327
      %p334 = scmp.eq.s32.totalorder %s98, 3
      %p335 = por %p333, %p334
      %p336 = scmp.ne.s32.totalorder %s328, %s331
      %p337 = scmp.eq.s32.totalorder %s98, 0
      %p338 = por %p336, %p337
      %p339 = scmp.ne.s32.totalorder %s328, %s331
      %p340 = scmp.eq.s32.totalorder %s103, 3
      %p341 = por %p339, %p340
      %p342 = scmp.ne.s32.totalorder %s331, %s332
      %p343 = scmp.eq.s32.totalorder %s103, 0
      %p344 = por %p342, %p343
      %p345 = scmp.ne.s32.totalorder %s331, %s332
      %p346 = scmp.eq.s32.totalorder %s104, 3
      %p347 = por %p345, %p346
      %p349 = scmp.ne.s32.totalorder %s332, %s348
      %p350 = scmp.eq.s32.totalorder %s104, 0
      %p351 = por %p349, %p350
      %s352 = ssub.s32 %s106, %s113
      %p353 = scmp.eq.s32.totalorder %s352, 0
      %s355 = sadd.s32 %s354, 1
      %s356 = scalar_select %p353, %s354, %s355
      %p359 = pneg %p353
      %p360 = scmp.eq.s32.totalorder %s98, 3
      %p361 = por %p359, %p360
      %p362 = scmp.ne.s32.totalorder %s354, %s357
      %p363 = scmp.eq.s32.totalorder %s98, 0
      %p364 = por %p362, %p363
      %p365 = scmp.ne.s32.totalorder %s354, %s357
      %p366 = scmp.eq.s32.totalorder %s103, 3
      %p367 = por %p365, %p366
      %p368 = scmp.ne.s32.totalorder %s357, %s358
      %p369 = scmp.eq.s32.totalorder %s103, 0
      %p370 = por %p368, %p369
      %p371 = scmp.ne.s32.totalorder %s357, %s358
      %p372 = scmp.eq.s32.totalorder %s104, 3
      %p373 = por %p371, %p372
      %p375 = scmp.ne.s32.totalorder %s358, %s374
      %p376 = scmp.eq.s32.totalorder %s104, 0
      %p377 = por %p375, %p376
      %s378 = ssub.s32 %s106, %s113
      %p379 = scmp.eq.s32.totalorder %s378, 0
      %s381 = sadd.s32 %s380, 1
      %s382 = scalar_select %p379, %s380, %s381
      %p385 = pneg %p379
      %p386 = scmp.eq.s32.totalorder %s98, 3
      %p387 = por %p385, %p386
      %p388 = scmp.ne.s32.totalorder %s380, %s383
      %p389 = scmp.eq.s32.totalorder %s98, 0
      %p390 = por %p388, %p389
      %p391 = scmp.ne.s32.totalorder %s380, %s383
      %p392 = scmp.eq.s32.totalorder %s103, 3
      %p393 = por %p391, %p392
      %p394 = scmp.ne.s32.totalorder %s383, %s384
      %p395 = scmp.eq.s32.totalorder %s103, 0
      %p396 = por %p394, %p395
      %p397 = scmp.ne.s32.totalorder %s383, %s384
      %p398 = scmp.eq.s32.totalorder %s104, 3
      %p399 = por %p397, %p398
      %p401 = scmp.ne.s32.totalorder %s384, %s400
      %p402 = scmp.eq.s32.totalorder %s104, 0
      %p403 = por %p401, %p402
      %s404 = ssub.s32 %s106, %s113
      %p405 = scmp.eq.s32.totalorder %s404, 0
      %s407 = sadd.s32 %s406, 1
      %s408 = scalar_select %p405, %s406, %s407
      %p411 = pneg %p405
      %p412 = scmp.eq.s32.totalorder %s98, 3
      %p413 = por %p411, %p412
      %p414 = scmp.ne.s32.totalorder %s406, %s409
      %p415 = scmp.eq.s32.totalorder %s98, 0
      %p416 = por %p414, %p415
      %p417 = scmp.ne.s32.totalorder %s406, %s409
      %p418 = scmp.eq.s32.totalorder %s103, 3
      %p419 = por %p417, %p418
      %p420 = scmp.ne.s32.totalorder %s409, %s410
      %p421 = scmp.eq.s32.totalorder %s103, 0
      %p422 = por %p420, %p421
      %p423 = scmp.ne.s32.totalorder %s409, %s410
      %p424 = scmp.eq.s32.totalorder %s104, 3
      %p425 = por %p423, %p424
      %p427 = scmp.ne.s32.totalorder %s410, %s426
      %p428 = scmp.eq.s32.totalorder %s104, 0
      %p429 = por %p427, %p428
      %s430 = ssub.s32 %s106, %s113
      %p431 = scmp.eq.s32.totalorder %s430, 0
      %s433 = sadd.s32 %s432, 1
      %s434 = scalar_select %p431, %s432, %s433
      %p437 = pneg %p431
      %p438 = scmp.eq.s32.totalorder %s98, 3
      %p439 = por %p437, %p438
      %p440 = scmp.ne.s32.totalorder %s432, %s435
      %p441 = scmp.eq.s32.totalorder %s98, 0
      %p442 = por %p440, %p441
      %p443 = scmp.ne.s32.totalorder %s432, %s435
      %p444 = scmp.eq.s32.totalorder %s103, 3
      %p445 = por %p443, %p444
      %p446 = scmp.ne.s32.totalorder %s435, %s436
      %p447 = scmp.eq.s32.totalorder %s103, 0
      %p448 = por %p446, %p447
      %p449 = scmp.ne.s32.totalorder %s435, %s436
      %p450 = scmp.eq.s32.totalorder %s104, 3
      %p451 = por %p449, %p450
      %p453 = scmp.ne.s32.totalorder %s436, %s452
      %p454 = scmp.eq.s32.totalorder %s104, 0
      %p455 = por %p453, %p454
      %s456 = ssub.s32 %s106, %s113
      %p457 = scmp.eq.s32.totalorder %s456, 0
      %s459 = sadd.s32 %s458, 1
      %s460 = scalar_select %p457, %s458, %s459
      %p463 = pneg %p457
      %p464 = scmp.eq.s32.totalorder %s98, 3
      %p465 = por %p463, %p464
      %p466 = scmp.ne.s32.totalorder %s458, %s461
      %p467 = scmp.eq.s32.totalorder %s98, 0
      %p468 = por %p466, %p467
      %p469 = scmp.ne.s32.totalorder %s458, %s461
      %p470 = scmp.eq.s32.totalorder %s103, 3
      %p471 = por %p469, %p470
      %p472 = scmp.ne.s32.totalorder %s461, %s462
      %p473 = scmp.eq.s32.totalorder %s103, 0
      %p474 = por %p472, %p473
      %p475 = scmp.ne.s32.totalorder %s461, %s462
      %p476 = scmp.eq.s32.totalorder %s104, 3
      %p477 = por %p475, %p476
      %p479 = scmp.ne.s32.totalorder %s462, %s478
      %p480 = scmp.eq.s32.totalorder %s104, 0
      %p481 = por %p479, %p480
      %s482 = ssub.s32 %s106, %s113
      %p483 = scmp.eq.s32.totalorder %s482, 0
      %s485 = sadd.s32 %s484, 1
      %s486 = scalar_select %p483, %s484, %s485
      %p489 = pneg %p483
      %p490 = scmp.eq.s32.totalorder %s98, 3
      %p491 = por %p489, %p490
      %p492 = scmp.ne.s32.totalorder %s484, %s487
      %p493 = scmp.eq.s32.totalorder %s98, 0
      %p494 = por %p492, %p493
      %p495 = scmp.ne.s32.totalorder %s484, %s487
      %p496 = scmp.eq.s32.totalorder %s103, 3
      %p497 = por %p495, %p496
      %p498 = scmp.ne.s32.totalorder %s487, %s488
      %p499 = scmp.eq.s32.totalorder %s103, 0
      %p500 = por %p498, %p499
      %p501 = scmp.ne.s32.totalorder %s487, %s488
      %p502 = scmp.eq.s32.totalorder %s104, 3
      %p503 = por %p501, %p502
      %p505 = scmp.ne.s32.totalorder %s488, %s504
      %p506 = scmp.eq.s32.totalorder %s104, 0
      %p507 = por %p505, %p506
      %s508 = ssub.s32 %s106, %s113
      %p509 = scmp.eq.s32.totalorder %s508, 0
      %s511 = sadd.s32 %s510, 1
      %s512 = scalar_select %p509, %s510, %s511
      %p515 = pneg %p509
      %p516 = scmp.eq.s32.totalorder %s98, 3
      %p517 = por %p515, %p516
      %p518 = scmp.ne.s32.totalorder %s510, %s513
      %p519 = scmp.eq.s32.totalorder %s98, 0
      %p520 = por %p518, %p519
      %p521 = scmp.ne.s32.totalorder %s510, %s513
      %p522 = scmp.eq.s32.totalorder %s103, 3
      %p523 = por %p521, %p522
      %p524 = scmp.ne.s32.totalorder %s513, %s514
      %p525 = scmp.eq.s32.totalorder %s103, 0
      %p526 = por %p524, %p525
      %p527 = scmp.ne.s32.totalorder %s513, %s514
      %p528 = scmp.eq.s32.totalorder %s104, 3
      %p529 = por %p527, %p528
      %p531 = scmp.ne.s32.totalorder %s514, %s530
      %p532 = scmp.eq.s32.totalorder %s104, 0
      %p533 = por %p531, %p532
      %s534 = ssub.s32 %s106, %s113
      %p535 = scmp.eq.s32.totalorder %s534, 0
      %s537 = sadd.s32 %s536, 1
      %s538 = scalar_select %p535, %s536, %s537
      %p541 = pneg %p535
      %p542 = scmp.eq.s32.totalorder %s98, 3
      %p543 = por %p541, %p542
      %p544 = scmp.ne.s32.totalorder %s536, %s539
      %p545 = scmp.eq.s32.totalorder %s98, 0
      %p546 = por %p544, %p545
      %p547 = scmp.ne.s32.totalorder %s536, %s539
      %p548 = scmp.eq.s32.totalorder %s103, 3
      %p549 = por %p547, %p548
      %p550 = scmp.ne.s32.totalorder %s539, %s540
      %p551 = scmp.eq.s32.totalorder %s103, 0
      %p552 = por %p550, %p551
      %p553 = scmp.ne.s32.totalorder %s539, %s540
      %p554 = scmp.eq.s32.totalorder %s104, 3
      %p555 = por %p553, %p554
      %p557 = scmp.ne.s32.totalorder %s540, %s556
      %p558 = scmp.eq.s32.totalorder %s104, 0
      %p559 = por %p557, %p558
      %s560 = ssub.s32 %s106, %s113
      %p561 = scmp.eq.s32.totalorder %s560, 0
      %s563 = sadd.s32 %s562, 1
      %s564 = scalar_select %p561, %s562, %s563
      %p567 = pneg %p561
      %p568 = scmp.eq.s32.totalorder %s98, 3
      %p569 = por %p567, %p568
      %p570 = scmp.ne.s32.totalorder %s562, %s565
      %p571 = scmp.eq.s32.totalorder %s98, 0
      %p572 = por %p570, %p571
      %p573 = scmp.ne.s32.totalorder %s562, %s565
      %p574 = scmp.eq.s32.totalorder %s103, 3
      %p575 = por %p573, %p574
      %p576 = scmp.ne.s32.totalorder %s565, %s566
      %p577 = scmp.eq.s32.totalorder %s103, 0
      %p578 = por %p576, %p577
      %p579 = scmp.ne.s32.totalorder %s565, %s566
      %p580 = scmp.eq.s32.totalorder %s104, 3
      %p581 = por %p579, %p580
      %p583 = scmp.ne.s32.totalorder %s566, %s582
      %p584 = scmp.eq.s32.totalorder %s104, 0
      %p585 = por %p583, %p584
      %s586 = ssub.s32 %s106, %s113
      %p587 = scmp.eq.s32.totalorder %s586, 0
      %s589 = sadd.s32 %s588, 1
      %s590 = scalar_select %p587, %s588, %s589
      %p593 = pneg %p587
      %p594 = scmp.eq.s32.totalorder %s98, 3
      %p595 = por %p593, %p594
      %p596 = scmp.ne.s32.totalorder %s588, %s591
      %p597 = scmp.eq.s32.totalorder %s98, 0
      %p598 = por %p596, %p597
      %p599 = scmp.ne.s32.totalorder %s588, %s591
      %p600 = scmp.eq.s32.totalorder %s103, 3
      %p601 = por %p599, %p600
      %p602 = scmp.ne.s32.totalorder %s591, %s592
      %p603 = scmp.eq.s32.totalorder %s103, 0
      %p604 = por %p602, %p603
      %p605 = scmp.ne.s32.totalorder %s591, %s592
      %p606 = scmp.eq.s32.totalorder %s104, 3
      %p607 = por %p605, %p606
      %p609 = scmp.ne.s32.totalorder %s592, %s608
      %p610 = scmp.eq.s32.totalorder %s104, 0
      %p611 = por %p609, %p610
      %s612 = ssub.s32 %s106, %s113
      %p613 = scmp.eq.s32.totalorder %s612, 0
      %s615 = sadd.s32 %s614, 1
      %s616 = scalar_select %p613, %s614, %s615
      %p619 = pneg %p613
      %p620 = scmp.eq.s32.totalorder %s98, 3
      %p621 = por %p619, %p620
      %p622 = scmp.ne.s32.totalorder %s614, %s617
      %p623 = scmp.eq.s32.totalorder %s98, 0
      %p624 = por %p622, %p623
      %p625 = scmp.ne.s32.totalorder %s614, %s617
      %p626 = scmp.eq.s32.totalorder %s103, 3
      %p627 = por %p625, %p626
      %p628 = scmp.ne.s32.totalorder %s617, %s618
      %p629 = scmp.eq.s32.totalorder %s103, 0
      %p630 = por %p628, %p629
      %p631 = scmp.ne.s32.totalorder %s617, %s618
      %p632 = scmp.eq.s32.totalorder %s104, 3
      %p633 = por %p631, %p632
      %p635 = scmp.ne.s32.totalorder %s618, %s634
      %p636 = scmp.eq.s32.totalorder %s104, 0
      %p637 = por %p635, %p636
      %s638 = ssub.s32 %s106, %s113
      %p639 = scmp.eq.s32.totalorder %s638, 0
      %s641 = sadd.s32 %s640, 1
      %s642 = scalar_select %p639, %s640, %s641
      %p645 = pneg %p639
      %p646 = scmp.eq.s32.totalorder %s98, 3
      %p647 = por %p645, %p646
      %p648 = scmp.ne.s32.totalorder %s640, %s643
      %p649 = scmp.eq.s32.totalorder %s98, 0
      %p650 = por %p648, %p649
      %p651 = scmp.ne.s32.totalorder %s640, %s643
      %p652 = scmp.eq.s32.totalorder %s103, 3
      %p653 = por %p651, %p652
      %p654 = scmp.ne.s32.totalorder %s643, %s644
      %p655 = scmp.eq.s32.totalorder %s103, 0
      %p656 = por %p654, %p655
      %p657 = scmp.ne.s32.totalorder %s643, %s644
      %p658 = scmp.eq.s32.totalorder %s104, 3
      %p659 = por %p657, %p658
      %p661 = scmp.ne.s32.totalorder %s644, %s660
      %p662 = scmp.eq.s32.totalorder %s104, 0
      %p663 = por %p661, %p662
      %s664 = ssub.s32 %s106, %s113
      %p665 = scmp.eq.s32.totalorder %s664, 0
      %s667 = sadd.s32 %s666, 1
      %s668 = scalar_select %p665, %s666, %s667
      %p671 = pneg %p665
      %p672 = scmp.eq.s32.totalorder %s98, 3
      %p673 = por %p671, %p672
      %p674 = scmp.ne.s32.totalorder %s666, %s669
      %p675 = scmp.eq.s32.totalorder %s98, 0
      %p676 = por %p674, %p675
      %p677 = scmp.ne.s32.totalorder %s666, %s669
      %p678 = scmp.eq.s32.totalorder %s103, 3
      %p679 = por %p677, %p678
      %p680 = scmp.ne.s32.totalorder %s669, %s670
      %p681 = scmp.eq.s32.totalorder %s103, 0
      %p682 = por %p680, %p681
      %p683 = scmp.ne.s32.totalorder %s669, %s670
      %p684 = scmp.eq.s32.totalorder %s104, 3
      %p685 = por %p683, %p684
      %p687 = scmp.ne.s32.totalorder %s670, %s686
      %p688 = scmp.eq.s32.totalorder %s104, 0
      %p689 = por %p687, %p688
      %s690 = ssub.s32 %s106, %s113
      %p691 = scmp.eq.s32.totalorder %s690, 0
      %s693 = sadd.s32 %s692, 1
      %s694 = scalar_select %p691, %s692, %s693
      %p697 = pneg %p691
      %p698 = scmp.eq.s32.totalorder %s98, 3
      %p699 = por %p697, %p698
      %p700 = scmp.ne.s32.totalorder %s692, %s695
      %p701 = scmp.eq.s32.totalorder %s98, 0
      %p702 = por %p700, %p701
      %p703 = scmp.ne.s32.totalorder %s692, %s695
      %p704 = scmp.eq.s32.totalorder %s103, 3
      %p705 = por %p703, %p704
      %p706 = scmp.ne.s32.totalorder %s695, %s696
      %p707 = scmp.eq.s32.totalorder %s103, 0
      %p708 = por %p706, %p707
      %p709 = scmp.ne.s32.totalorder %s695, %s696
      %p710 = scmp.eq.s32.totalorder %s104, 3
      %p711 = por %p709, %p710
      %p713 = scmp.ne.s32.totalorder %s696, %s712
      %p714 = scmp.eq.s32.totalorder %s104, 0
      %p715 = por %p713, %p714
      %s716 = ssub.s32 %s106, %s113
      %p717 = scmp.eq.s32.totalorder %s716, 0
      %s719 = sadd.s32 %s718, 1
      %s720 = scalar_select %p717, %s718, %s719
      %p723 = pneg %p717
      %p724 = scmp.eq.s32.totalorder %s98, 3
      %p725 = por %p723, %p724
      %p726 = scmp.ne.s32.totalorder %s718, %s721
      %p727 = scmp.eq.s32.totalorder %s98, 0
      %p728 = por %p726, %p727
      %p729 = scmp.ne.s32.totalorder %s718, %s721
      %p730 = scmp.eq.s32.totalorder %s103, 3
      %p731 = por %p729, %p730
      %p732 = scmp.ne.s32.totalorder %s721, %s722
      %p733 = scmp.eq.s32.totalorder %s103, 0
      %p734 = por %p732, %p733
      %p735 = scmp.ne.s32.totalorder %s721, %s722
      %p736 = scmp.eq.s32.totalorder %s104, 3
      %p737 = por %p735, %p736
      %p739 = scmp.ne.s32.totalorder %s722, %s738
      %p740 = scmp.eq.s32.totalorder %s104, 0
      %p741 = por %p739, %p740
      %s742 = ssub.s32 %s106, %s113
      %p743 = scmp.eq.s32.totalorder %s742, 0
      %s745 = sadd.s32 %s744, 1
      %s746 = scalar_select %p743, %s744, %s745
      %p749 = pneg %p743
      %p750 = scmp.eq.s32.totalorder %s98, 3
      %p751 = por %p749, %p750
      %p752 = scmp.ne.s32.totalorder %s744, %s747
      %p753 = scmp.eq.s32.totalorder %s98, 0
      %p754 = por %p752, %p753
      %p755 = scmp.ne.s32.totalorder %s744, %s747
      %p756 = scmp.eq.s32.totalorder %s103, 3
      %p757 = por %p755, %p756
      %p758 = scmp.ne.s32.totalorder %s747, %s748
      %p759 = scmp.eq.s32.totalorder %s103, 0
      %p760 = por %p758, %p759
      %p761 = scmp.ne.s32.totalorder %s747, %s748
      %p762 = scmp.eq.s32.totalorder %s104, 3
      %p763 = por %p761, %p762
      %p765 = scmp.ne.s32.totalorder %s748, %s764
      %p766 = scmp.eq.s32.totalorder %s104, 0
      %p767 = por %p765, %p766
      %s768 = ssub.s32 %s106, %s113
      %p769 = scmp.eq.s32.totalorder %s768, 0
      %s771 = sadd.s32 %s770, 1
      %s772 = scalar_select %p769, %s770, %s771
      %p775 = pneg %p769
      %p776 = scmp.eq.s32.totalorder %s98, 3
      %p777 = por %p775, %p776
      %p778 = scmp.ne.s32.totalorder %s770, %s773
      %p779 = scmp.eq.s32.totalorder %s98, 0
      %p780 = por %p778, %p779
      %p781 = scmp.ne.s32.totalorder %s770, %s773
      %p782 = scmp.eq.s32.totalorder %s103, 3
      %p783 = por %p781, %p782
      %p784 = scmp.ne.s32.totalorder %s773, %s774
      %p785 = scmp.eq.s32.totalorder %s103, 0
      %p786 = por %p784, %p785
      %p787 = scmp.ne.s32.totalorder %s773, %s774
      %p788 = scmp.eq.s32.totalorder %s104, 3
      %p789 = por %p787, %p788
      %p791 = scmp.ne.s32.totalorder %s774, %s790
      %p792 = scmp.eq.s32.totalorder %s104, 0
      %p793 = por %p791, %p792
      %s794 = ssub.s32 %s106, %s113
      %p795 = scmp.eq.s32.totalorder %s794, 0
      %s797 = sadd.s32 %s796, 1
      %s798 = scalar_select %p795, %s796, %s797
      %p801 = pneg %p795
      %p802 = scmp.eq.s32.totalorder %s98, 3
      %p803 = por %p801, %p802
      %p804 = scmp.ne.s32.totalorder %s796, %s799
      %p805 = scmp.eq.s32.totalorder %s98, 0
      %p806 = por %p804, %p805
      %p807 = scmp.ne.s32.totalorder %s796, %s799
      %p808 = scmp.eq.s32.totalorder %s103, 3
      %p809 = por %p807, %p808
      %p810 = scmp.ne.s32.totalorder %s799, %s800
      %p811 = scmp.eq.s32.totalorder %s103, 0
      %p812 = por %p810, %p811
      %p813 = scmp.ne.s32.totalorder %s799, %s800
      %p814 = scmp.eq.s32.totalorder %s104, 3
      %p815 = por %p813, %p814
      %p817 = scmp.ne.s32.totalorder %s800, %s816
      %p818 = scmp.eq.s32.totalorder %s104, 0
      %p819 = por %p817, %p818
      %s820 = ssub.s32 %s106, %s113
      %p821 = scmp.eq.s32.totalorder %s820, 0
      %s823 = sadd.s32 %s822, 1
      %s824 = scalar_select %p821, %s822, %s823
      %p827 = pneg %p821
      %p828 = scmp.eq.s32.totalorder %s98, 3
      %p829 = por %p827, %p828
      %p830 = scmp.ne.s32.totalorder %s822, %s825
      %p831 = scmp.eq.s32.totalorder %s98, 0
      %p832 = por %p830, %p831
      %p833 = scmp.ne.s32.totalorder %s822, %s825
      %p834 = scmp.eq.s32.totalorder %s103, 3
      %p835 = por %p833, %p834
      %p836 = scmp.ne.s32.totalorder %s825, %s826
      %p837 = scmp.eq.s32.totalorder %s103, 0
      %p838 = por %p836, %p837
      %p839 = scmp.ne.s32.totalorder %s825, %s826
      %p840 = scmp.eq.s32.totalorder %s104, 3
      %p841 = por %p839, %p840
      %p843 = scmp.ne.s32.totalorder %s826, %s842
      %p844 = scmp.eq.s32.totalorder %s104, 0
      %p845 = por %p843, %p844
      %s847 = sadd.s32 %s846, 1
      %p850 = scmp.eq.s32.totalorder %s98, 3
      %p851 = scmp.ne.s32.totalorder %s846, %s848
      %p852 = scmp.eq.s32.totalorder %s98, 0
      %p853 = por %p851, %p852
      %p854 = scmp.ne.s32.totalorder %s846, %s848
      %p855 = scmp.eq.s32.totalorder %s103, 3
      %p856 = por %p854, %p855
      %p857 = scmp.ne.s32.totalorder %s848, %s849
      %p858 = scmp.eq.s32.totalorder %s103, 0
      %p859 = por %p857, %p858
      %p860 = scmp.ne.s32.totalorder %s848, %s849
      %p861 = scmp.eq.s32.totalorder %s104, 3
      %p862 = por %p860, %p861
      %p864 = scmp.ne.s32.totalorder %s849, %s863
      %p865 = scmp.eq.s32.totalorder %s104, 0
      %p866 = por %p864, %p865
      %s867 = ssub.s32 %s105, %s117
      %p868 = scmp.eq.s32.totalorder %s867, 0
      %s870 = sadd.s32 %s869, 1
      %s871 = scalar_select %p868, %s869, %s870
      %p874 = pneg %p868
      %p875 = scmp.eq.s32.totalorder %s98, 3
      %p876 = por %p874, %p875
      %p877 = scmp.ne.s32.totalorder %s869, %s872
      %p878 = scmp.eq.s32.totalorder %s98, 0
      %p879 = por %p877, %p878
      %p880 = scmp.ne.s32.totalorder %s869, %s872
      %p881 = scmp.eq.s32.totalorder %s103, 3
      %p882 = por %p880, %p881
      %p883 = scmp.ne.s32.totalorder %s872, %s873
      %p884 = scmp.eq.s32.totalorder %s103, 0
      %p885 = por %p883, %p884
      %p886 = scmp.ne.s32.totalorder %s872, %s873
      %p887 = scmp.eq.s32.totalorder %s104, 3
      %p888 = por %p886, %p887
      %p890 = scmp.ne.s32.totalorder %s873, %s889
      %p891 = scmp.eq.s32.totalorder %s104, 0
      %p892 = por %p890, %p891
      %p893 = scmp.le.s32.totalorder 1, %s98
      %p894 = scmp.lt.s32.totalorder %s98, 5
      %p895 = pnand %p893, %p894
      %p896 = pneg %p895
      // Predicated region
      $region9: #{tpu_custom_call.1} parent=5 // pred_check
        _
      $region10: #{tpu_custom_call.1} parent=5 // pred_check_branch
        %898 = sbr.rel (%p895) target = $region12
      $region11: #{tpu_custom_call.1} parent=5 // pred_region
        %s899 = ssub.s32 %s98, 1
        // Predicated region
        $region13: #{tpu_custom_call.1} parent=11 // pred_check
          %p900 = pneg %p859
        $region14: #{tpu_custom_call.1} parent=11 // pred_check_branch
          %902 = sbr.rel (%p900) target = $region16
        $region15: #{tpu_custom_call.1} parent=11 // pred_region
          %904 = vsyncadd [#allocation31], 0
          %s905 = sshll.u32 %s57, 4
          %s906 = int_to_ptr.hbm [resolvable:$true] %s905
          %s907 = sshll.u32 [#allocation32], 4
          %s908 = int_to_ptr.vmem [resolvable:$true] %s907
          %913 = dma.hbm_to_vmem [thread:$0]  %s906, 256, %s908, [#allocation31], 64, 64, 4
        $region16: #{tpu_custom_call.1} parent=11 // pred_fallthru
          _
      $region12: #{tpu_custom_call.1} parent=5 // pred_fallthru
        _
      %p914 = scmp.lt.s32.totalorder %s98, 4
      // Predicated region
      $region17: #{tpu_custom_call.1} parent=5 // pred_check
        %p915 = pneg %p914
      $region18: #{tpu_custom_call.1} parent=5 // pred_check_branch
        %917 = sbr.rel (%p915) target = $region20
      $region19: #{tpu_custom_call.1} parent=5 // pred_region
        // Predicated region
        $region21: #{tpu_custom_call.1} parent=19 // pred_check
          %p918 = pneg %p130
        $region22: #{tpu_custom_call.1} parent=19 // pred_check_branch
          %920 = sbr.rel (%p918) target = $region24
        $region23: #{tpu_custom_call.1} parent=19 // pred_region
          %p921 = scmp.lt.s32.totalorder %s105, 1
          %s922 = scalar_select %p921, %s105, 1
          %s923 = smul.addr %s922, 8
          %s924 = scalar_lea.vmem %s1, %s923
        $region24: #{tpu_custom_call.1} parent=19 // pred_fallthru
          _
        // Predicated region
        $region25: #{tpu_custom_call.1} parent=19 // pred_check
          %p925 = pneg %p156
        $region26: #{tpu_custom_call.1} parent=19 // pred_check_branch
          %927 = sbr.rel (%p925) target = $region28
        $region27: #{tpu_custom_call.1} parent=19 // pred_region
          %p928 = scmp.lt.s32.totalorder %s105, 1
          %s929 = scalar_select %p928, %s105, 1
          %s930 = smul.addr %s929, 8
          %s931 = scalar_lea.vmem %s3, %s930
        $region28: #{tpu_custom_call.1} parent=19 // pred_fallthru
          _
        // Predicated region
        $region29: #{tpu_custom_call.1} parent=19 // pred_check
          %p932 = pneg %p182
        $region30: #{tpu_custom_call.1} parent=19 // pred_check_branch
          %934 = sbr.rel (%p932) target = $region32
        $region31: #{tpu_custom_call.1} parent=19 // pred_region
          %p935 = scmp.lt.s32.totalorder %s106, 1
          %s936 = scalar_select %p935, %s106, 1
          %s937 = smul.addr %s936, 4
          %s938 = smul.addr %s937, 4
          %s939 = scalar_lea.vmem %s5, %s938
        $region32: #{tpu_custom_call.1} parent=19 // pred_fallthru
          _
        // Predicated region
        $region33: #{tpu_custom_call.1} parent=19 // pred_check
          %p940 = pneg %p208
        $region34: #{tpu_custom_call.1} parent=19 // pred_check_branch
          %942 = sbr.rel (%p940) target = $region36
        $region35: #{tpu_custom_call.1} parent=19 // pred_region
          %p943 = scmp.lt.s32.totalorder %s106, 1
          %s944 = scalar_select %p943, %s106, 1
          %s945 = smul.addr %s944, 4
          %s946 = smul.addr %s945, 4
          %s947 = scalar_lea.vmem %s7, %s946
        $region36: #{tpu_custom_call.1} parent=19 // pred_fallthru
          _
        // Predicated region
        $region37: #{tpu_custom_call.1} parent=19 // pred_check
          %p948 = pneg %p234
        $region38: #{tpu_custom_call.1} parent=19 // pred_check_branch
          %950 = sbr.rel (%p948) target = $region40
        $region39: #{tpu_custom_call.1} parent=19 // pred_region
          %p951 = scmp.lt.s32.totalorder %s106, 1
          %s952 = scalar_select %p951, %s106, 1
          %s953 = smul.addr %s952, 4
          %s954 = smul.addr %s953, 4
          %s955 = scalar_lea.vmem %s9, %s954
        $region40: #{tpu_custom_call.1} parent=19 // pred_fallthru
          _
        // Predicated region
        $region41: #{tpu_custom_call.1} parent=19 // pred_check
          %p956 = pneg %p260
        $region42: #{tpu_custom_call.1} parent=19 // pred_check_branch
          %958 = sbr.rel (%p956) target = $region44
        $region43: #{tpu_custom_call.1} parent=19 // pred_region
          %p959 = scmp.lt.s32.totalorder %s106, 1
          %s960 = scalar_select %p959, %s106, 1
          %s961 = scalar_lea.vmem %s11, %s960
        $region44: #{tpu_custom_call.1} parent=19 // pred_fallthru
          _
        // Predicated region
        $region45: #{tpu_custom_call.1} parent=19 // pred_check
          %p962 = pneg %p286
        $region46: #{tpu_custom_call.1} parent=19 // pred_check_branch
          %964 = sbr.rel (%p962) target = $region48
        $region47: #{tpu_custom_call.1} parent=19 // pred_region
          %p965 = scmp.lt.s32.totalorder %s106, 1
          %s966 = scalar_select %p965, %s106, 1
          %s967 = scalar_lea.vmem %s13, %s966
        $region48: #{tpu_custom_call.1} parent=19 // pred_fallthru
          _
        // Predicated region
        $region49: #{tpu_custom_call.1} parent=19 // pred_check
          %p968 = pneg %p312
        $region50: #{tpu_custom_call.1} parent=19 // pred_check_branch
          %970 = sbr.rel (%p968) target = $region52
        $region51: #{tpu_custom_call.1} parent=19 // pred_region
          %s971 = sand.u32 %s302, 1
          %s972 = scalar_lea.sflag [#allocation4], %s971
          %s973 = sand.u32 %s302, 1
          %s974 = scalar_lea.vmem [#allocation3], %s973
          %976 = vsyncadd %s972, 0
          %s977 = scalar_lea.hbm %s15, %s106
          %s979 = sshll.u32 %s977, 4
          %s980 = int_to_ptr.hbm [resolvable:$true] %s979
          %s981 = sshll.u32 %s974, 4
          %s982 = int_to_ptr.vmem [resolvable:$true] %s981
          %984 = dma.hbm_to_vmem [thread:$0]  %s980, 16, %s982, %s972
        $region52: #{tpu_custom_call.1} parent=19 // pred_fallthru
          _
        // Predicated region
        $region53: #{tpu_custom_call.1} parent=19 // pred_check
          %p985 = pneg %p338
        $region54: #{tpu_custom_call.1} parent=19 // pred_check_branch
          %987 = sbr.rel (%p985) target = $region56
        $region55: #{tpu_custom_call.1} parent=19 // pred_region
          %p988 = scmp.lt.s32.totalorder %s106, 1
          %s989 = scalar_select %p988, %s106, 1
          %s990 = smul.addr %s989, 4
          %s991 = smul.addr %s990, 4
          %s992 = scalar_lea.vmem %s17, %s991
        $region56: #{tpu_custom_call.1} parent=19 // pred_fallthru
          _
        // Predicated region
        $region57: #{tpu_custom_call.1} parent=19 // pred_check
          %p993 = pneg %p364
        $region58: #{tpu_custom_call.1} parent=19 // pred_check_branch
          %995 = sbr.rel (%p993) target = $region60
        $region59: #{tpu_custom_call.1} parent=19 // pred_region
          %s996 = sand.u32 %s98, 1
          %s997 = scalar_lea.sflag [#allocation7], %s996
          %s998 = sand.u32 %s354, 1
          %s999 = scalar_lea.vmem [#allocation6], %s998
          %1001 = vsyncadd %s997, 0
          %s1002 = scalar_lea.hbm %s19, %s106
          %s1004 = sshll.u32 %s1002, 4
          %s1005 = int_to_ptr.hbm [resolvable:$true] %s1004
          %s1006 = sshll.u32 %s999, 4
          %s1007 = int_to_ptr.vmem [resolvable:$true] %s1006
          %1009 = dma.hbm_to_vmem [thread:$0]  %s1005, 16, %s1007, %s997
        $region60: #{tpu_custom_call.1} parent=19 // pred_fallthru
          _
        // Predicated region
        $region61: #{tpu_custom_call.1} parent=19 // pred_check
          %p1010 = pneg %p390
        $region62: #{tpu_custom_call.1} parent=19 // pred_check_branch
          %1012 = sbr.rel (%p1010) target = $region64
        $region63: #{tpu_custom_call.1} parent=19 // pred_region
          %p1013 = scmp.lt.s32.totalorder %s106, 1
          %s1014 = scalar_select %p1013, %s106, 1
          %s1015 = smul.addr %s1014, 4
          %s1016 = smul.addr %s1015, 4
          %s1017 = scalar_lea.vmem %s21, %s1016
        $region64: #{tpu_custom_call.1} parent=19 // pred_fallthru
          _
        // Predicated region
        $region65: #{tpu_custom_call.1} parent=19 // pred_check
          %p1018 = pneg %p416
        $region66: #{tpu_custom_call.1} parent=19 // pred_check_branch
          %1020 = sbr.rel (%p1018) target = $region68
        $region67: #{tpu_custom_call.1} parent=19 // pred_region
          %s1021 = sand.u32 %s98, 1
          %s1022 = scalar_lea.sflag [#allocation7], %s1021
          %s1023 = sand.u32 %s406, 1
          %s1024 = smul.addr %s1023, 16
          %s1025 = scalar_lea.vmem [#allocation8], %s1024
          %1027 = vsyncadd %s1022, 0
          %s1028 = smul.addr %s106, 4
          %s1029 = smul.addr %s1028, 4
          %s1030 = scalar_lea.hbm %s23, %s1029
          %s1031 = sshll.u32 %s1030, 4
          %s1032 = int_to_ptr.hbm [resolvable:$true] %s1031
          %s1033 = sshll.u32 %s1025, 4
          %s1034 = int_to_ptr.vmem [resolvable:$true] %s1033
          %1039 = dma.hbm_to_vmem [thread:$0]  %s1032, 256, %s1034, %s1022, 64, 64, 4
        $region68: #{tpu_custom_call.1} parent=19 // pred_fallthru
          _
        // Predicated region
        $region69: #{tpu_custom_call.1} parent=19 // pred_check
          %p1040 = pneg %p442
        $region70: #{tpu_custom_call.1} parent=19 // pred_check_branch
          %1042 = sbr.rel (%p1040) target = $region72
        $region71: #{tpu_custom_call.1} parent=19 // pred_region
          %s1043 = sand.u32 %s98, 1
          %s1044 = scalar_lea.sflag [#allocation10], %s1043
          %s1045 = sand.u32 %s432, 1
          %s1046 = smul.addr %s1045, 16
          %s1047 = scalar_lea.vmem [#allocation9], %s1046
          %1049 = vsyncadd %s1044, 0
          %s1050 = smul.addr %s106, 4
          %s1051 = smul.addr %s1050, 4
          %s1052 = scalar_lea.hbm %s25, %s1051
          %s1053 = sshll.u32 %s1052, 4
          %s1054 = int_to_ptr.hbm [resolvable:$true] %s1053
          %s1055 = sshll.u32 %s1047, 4
          %s1056 = int_to_ptr.vmem [resolvable:$true] %s1055
          %1061 = dma.hbm_to_vmem [thread:$0]  %s1054, 256, %s1056, %s1044, 64, 64, 4
        $region72: #{tpu_custom_call.1} parent=19 // pred_fallthru
          _
        // Predicated region
        $region73: #{tpu_custom_call.1} parent=19 // pred_check
          %p1062 = pneg %p468
        $region74: #{tpu_custom_call.1} parent=19 // pred_check_branch
          %1064 = sbr.rel (%p1062) target = $region76
        $region75: #{tpu_custom_call.1} parent=19 // pred_region
          %s1065 = sand.u32 %s98, 1
          %s1066 = scalar_lea.sflag [#allocation10], %s1065
          %s1067 = sand.u32 %s458, 1
          %s1068 = scalar_lea.vmem [#allocation11], %s1067
          %1070 = vsyncadd %s1066, 0
          %s1071 = scalar_lea.hbm %s27, %s106
          %s1073 = sshll.u32 %s1071, 4
          %s1074 = int_to_ptr.hbm [resolvable:$true] %s1073
          %s1075 = sshll.u32 %s1068, 4
          %s1076 = int_to_ptr.vmem [resolvable:$true] %s1075
          %1078 = dma.hbm_to_vmem [thread:$0]  %s1074, 16, %s1076, %s1066
        $region76: #{tpu_custom_call.1} parent=19 // pred_fallthru
          _
        // Predicated region
        $region77: #{tpu_custom_call.1} parent=19 // pred_check
          %p1079 = pneg %p494
        $region78: #{tpu_custom_call.1} parent=19 // pred_check_branch
          %1081 = sbr.rel (%p1079) target = $region80
        $region79: #{tpu_custom_call.1} parent=19 // pred_region
          %s1082 = sand.u32 %s98, 1
          %s1083 = scalar_lea.sflag [#allocation13], %s1082
          %s1084 = sand.u32 %s484, 1
          %s1085 = scalar_lea.vmem [#allocation12], %s1084
          %1087 = vsyncadd %s1083, 0
          %s1088 = scalar_lea.hbm %s29, %s106
          %s1090 = sshll.u32 %s1088, 4
          %s1091 = int_to_ptr.hbm [resolvable:$true] %s1090
          %s1092 = sshll.u32 %s1085, 4
          %s1093 = int_to_ptr.vmem [resolvable:$true] %s1092
          %1095 = dma.hbm_to_vmem [thread:$0]  %s1091, 16, %s1093, %s1083
        $region80: #{tpu_custom_call.1} parent=19 // pred_fallthru
          _
        // Predicated region
        $region81: #{tpu_custom_call.1} parent=19 // pred_check
          %p1096 = pneg %p520
        $region82: #{tpu_custom_call.1} parent=19 // pred_check_branch
          %1098 = sbr.rel (%p1096) target = $region84
        $region83: #{tpu_custom_call.1} parent=19 // pred_region
          %s1099 = sand.u32 %s98, 1
          %s1100 = scalar_lea.sflag [#allocation13], %s1099
          %s1101 = sand.u32 %s510, 1
          %s1102 = scalar_lea.vmem [#allocation14], %s1101
          %1104 = vsyncadd %s1100, 0
          %s1105 = scalar_lea.hbm %s31, %s106
          %s1107 = sshll.u32 %s1105, 4
          %s1108 = int_to_ptr.hbm [resolvable:$true] %s1107
          %s1109 = sshll.u32 %s1102, 4
          %s1110 = int_to_ptr.vmem [resolvable:$true] %s1109
          %1112 = dma.hbm_to_vmem [thread:$0]  %s1108, 16, %s1110, %s1100
        $region84: #{tpu_custom_call.1} parent=19 // pred_fallthru
          _
        // Predicated region
        $region85: #{tpu_custom_call.1} parent=19 // pred_check
          %p1113 = pneg %p546
        $region86: #{tpu_custom_call.1} parent=19 // pred_check_branch
          %1115 = sbr.rel (%p1113) target = $region88
        $region87: #{tpu_custom_call.1} parent=19 // pred_region
          %s1116 = sand.u32 %s98, 1
          %s1117 = scalar_lea.sflag [#allocation16], %s1116
          %s1118 = sand.u32 %s536, 1
          %s1119 = smul.addr %s1118, 16
          %s1120 = scalar_lea.vmem [#allocation15], %s1119
          %1122 = vsyncadd %s1117, 0
          %s1123 = smul.addr %s106, 4
          %s1124 = smul.addr %s1123, 4
          %s1125 = scalar_lea.hbm %s33, %s1124
          %s1126 = sshll.u32 %s1125, 4
          %s1127 = int_to_ptr.hbm [resolvable:$true] %s1126
          %s1128 = sshll.u32 %s1120, 4
          %s1129 = int_to_ptr.vmem [resolvable:$true] %s1128
          %1134 = dma.hbm_to_vmem [thread:$0]  %s1127, 256, %s1129, %s1117, 64, 64, 4
        $region88: #{tpu_custom_call.1} parent=19 // pred_fallthru
          _
        // Predicated region
        $region89: #{tpu_custom_call.1} parent=19 // pred_check
          %p1135 = pneg %p572
        $region90: #{tpu_custom_call.1} parent=19 // pred_check_branch
          %1137 = sbr.rel (%p1135) target = $region92
        $region91: #{tpu_custom_call.1} parent=19 // pred_region
          %s1138 = sand.u32 %s98, 1
          %s1139 = scalar_lea.sflag [#allocation16], %s1138
          %s1140 = sand.u32 %s562, 1
          %s1141 = scalar_lea.vmem [#allocation17], %s1140
          %1143 = vsyncadd %s1139, 0
          %s1144 = scalar_lea.hbm %s35, %s106
          %s1146 = sshll.u32 %s1144, 4
          %s1147 = int_to_ptr.hbm [resolvable:$true] %s1146
          %s1148 = sshll.u32 %s1141, 4
          %s1149 = int_to_ptr.vmem [resolvable:$true] %s1148
          %1151 = dma.hbm_to_vmem [thread:$0]  %s1147, 16, %s1149, %s1139
        $region92: #{tpu_custom_call.1} parent=19 // pred_fallthru
          _
        // Predicated region
        $region93: #{tpu_custom_call.1} parent=19 // pred_check
          %p1152 = pneg %p598
        $region94: #{tpu_custom_call.1} parent=19 // pred_check_branch
          %1154 = sbr.rel (%p1152) target = $region96
        $region95: #{tpu_custom_call.1} parent=19 // pred_region
          %s1155 = sand.u32 %s98, 1
          %s1156 = scalar_lea.sflag [#allocation19], %s1155
          %s1157 = sand.u32 %s588, 1
          %s1158 = scalar_lea.vmem [#allocation18], %s1157
          %1160 = vsyncadd %s1156, 0
          %s1161 = scalar_lea.hbm %s37, %s106
          %s1163 = sshll.u32 %s1161, 4
          %s1164 = int_to_ptr.hbm [resolvable:$true] %s1163
          %s1165 = sshll.u32 %s1158, 4
          %s1166 = int_to_ptr.vmem [resolvable:$true] %s1165
          %1168 = dma.hbm_to_vmem [thread:$0]  %s1164, 16, %s1166, %s1156
        $region96: #{tpu_custom_call.1} parent=19 // pred_fallthru
          _
        // Predicated region
        $region97: #{tpu_custom_call.1} parent=19 // pred_check
          %p1169 = pneg %p624
        $region98: #{tpu_custom_call.1} parent=19 // pred_check_branch
          %1171 = sbr.rel (%p1169) target = $region100
        $region99: #{tpu_custom_call.1} parent=19 // pred_region
          %s1172 = sand.u32 %s98, 1
          %s1173 = scalar_lea.sflag [#allocation19], %s1172
          %s1174 = sand.u32 %s614, 1
          %s1175 = scalar_lea.vmem [#allocation20], %s1174
          %1177 = vsyncadd %s1173, 0
          %s1178 = scalar_lea.hbm %s39, %s106
          %s1180 = sshll.u32 %s1178, 4
          %s1181 = int_to_ptr.hbm [resolvable:$true] %s1180
          %s1182 = sshll.u32 %s1175, 4
          %s1183 = int_to_ptr.vmem [resolvable:$true] %s1182
          %1185 = dma.hbm_to_vmem [thread:$0]  %s1181, 16, %s1183, %s1173
        $region100: #{tpu_custom_call.1} parent=19 // pred_fallthru
          _
        // Predicated region
        $region101: #{tpu_custom_call.1} parent=19 // pred_check
          %p1186 = pneg %p650
        $region102: #{tpu_custom_call.1} parent=19 // pred_check_branch
          %1188 = sbr.rel (%p1186) target = $region104
        $region103: #{tpu_custom_call.1} parent=19 // pred_region
          %s1189 = sand.u32 %s98, 1
          %s1190 = scalar_lea.sflag [#allocation22], %s1189
          %s1191 = sand.u32 %s640, 1
          %s1192 = scalar_lea.vmem [#allocation21], %s1191
          %1194 = vsyncadd %s1190, 0
          %s1195 = scalar_lea.hbm %s41, %s106
          %s1197 = sshll.u32 %s1195, 4
          %s1198 = int_to_ptr.hbm [resolvable:$true] %s1197
          %s1199 = sshll.u32 %s1192, 4
          %s1200 = int_to_ptr.vmem [resolvable:$true] %s1199
          %1202 = dma.hbm_to_vmem [thread:$0]  %s1198, 16, %s1200, %s1190
        $region104: #{tpu_custom_call.1} parent=19 // pred_fallthru
          _
        // Predicated region
        $region105: #{tpu_custom_call.1} parent=19 // pred_check
          %p1203 = pneg %p676
        $region106: #{tpu_custom_call.1} parent=19 // pred_check_branch
          %1205 = sbr.rel (%p1203) target = $region108
        $region107: #{tpu_custom_call.1} parent=19 // pred_region
          %s1206 = sand.u32 %s98, 1
          %s1207 = scalar_lea.sflag [#allocation22], %s1206
          %s1208 = sand.u32 %s666, 1
          %s1209 = scalar_lea.vmem [#allocation23], %s1208
          %1211 = vsyncadd %s1207, 0
          %s1212 = scalar_lea.hbm %s43, %s106
          %s1214 = sshll.u32 %s1212, 4
          %s1215 = int_to_ptr.hbm [resolvable:$true] %s1214
          %s1216 = sshll.u32 %s1209, 4
          %s1217 = int_to_ptr.vmem [resolvable:$true] %s1216
          %1219 = dma.hbm_to_vmem [thread:$0]  %s1215, 16, %s1217, %s1207
        $region108: #{tpu_custom_call.1} parent=19 // pred_fallthru
          _
        // Predicated region
        $region109: #{tpu_custom_call.1} parent=19 // pred_check
          %p1220 = pneg %p702
        $region110: #{tpu_custom_call.1} parent=19 // pred_check_branch
          %1222 = sbr.rel (%p1220) target = $region112
        $region111: #{tpu_custom_call.1} parent=19 // pred_region
          %s1223 = sand.u32 %s98, 1
          %s1224 = scalar_lea.sflag [#allocation25], %s1223
          %s1225 = sand.u32 %s692, 1
          %s1226 = scalar_lea.vmem [#allocation24], %s1225
          %1228 = vsyncadd %s1224, 0
          %s1229 = scalar_lea.hbm %s45, %s106
          %s1231 = sshll.u32 %s1229, 4
          %s1232 = int_to_ptr.hbm [resolvable:$true] %s1231
          %s1233 = sshll.u32 %s1226, 4
          %s1234 = int_to_ptr.vmem [resolvable:$true] %s1233
          %1236 = dma.hbm_to_vmem [thread:$0]  %s1232, 16, %s1234, %s1224
        $region112: #{tpu_custom_call.1} parent=19 // pred_fallthru
          _
        // Predicated region
        $region113: #{tpu_custom_call.1} parent=19 // pred_check
          %p1237 = pneg %p728
        $region114: #{tpu_custom_call.1} parent=19 // pred_check_branch
          %1239 = sbr.rel (%p1237) target = $region116
        $region115: #{tpu_custom_call.1} parent=19 // pred_region
          %s1240 = sand.u32 %s98, 1
          %s1241 = scalar_lea.sflag [#allocation25], %s1240
          %s1242 = sand.u32 %s718, 1
          %s1243 = scalar_lea.vmem [#allocation26], %s1242
          %1245 = vsyncadd %s1241, 0
          %s1246 = scalar_lea.hbm %s47, %s106
          %s1248 = sshll.u32 %s1246, 4
          %s1249 = int_to_ptr.hbm [resolvable:$true] %s1248
          %s1250 = sshll.u32 %s1243, 4
          %s1251 = int_to_ptr.vmem [resolvable:$true] %s1250
          %1253 = dma.hbm_to_vmem [thread:$0]  %s1249, 16, %s1251, %s1241
        $region116: #{tpu_custom_call.1} parent=19 // pred_fallthru
          _
        // Predicated region
        $region117: #{tpu_custom_call.1} parent=19 // pred_check
          %p1254 = pneg %p754
        $region118: #{tpu_custom_call.1} parent=19 // pred_check_branch
          %1256 = sbr.rel (%p1254) target = $region120
        $region119: #{tpu_custom_call.1} parent=19 // pred_region
          %s1257 = sand.u32 %s98, 1
          %s1258 = scalar_lea.sflag [#allocation28], %s1257
          %s1259 = sand.u32 %s744, 1
          %s1260 = smul.addr %s1259, 16
          %s1261 = scalar_lea.vmem [#allocation27], %s1260
          %1263 = vsyncadd %s1258, 0
          %s1264 = smul.addr %s106, 4
          %s1265 = smul.addr %s1264, 4
          %s1266 = scalar_lea.hbm %s49, %s1265
          %s1267 = sshll.u32 %s1266, 4
          %s1268 = int_to_ptr.hbm [resolvable:$true] %s1267
          %s1269 = sshll.u32 %s1261, 4
          %s1270 = int_to_ptr.vmem [resolvable:$true] %s1269
          %1275 = dma.hbm_to_vmem [thread:$0]  %s1268, 256, %s1270, %s1258, 64, 64, 4
        $region120: #{tpu_custom_call.1} parent=19 // pred_fallthru
          _
        // Predicated region
        $region121: #{tpu_custom_call.1} parent=19 // pred_check
          %p1276 = pneg %p780
        $region122: #{tpu_custom_call.1} parent=19 // pred_check_branch
          %1278 = sbr.rel (%p1276) target = $region124
        $region123: #{tpu_custom_call.1} parent=19 // pred_region
          %s1279 = sand.u32 %s98, 1
          %s1280 = scalar_lea.sflag [#allocation28], %s1279
          %s1281 = sand.u32 %s770, 1
          %s1282 = scalar_lea.vmem [#allocation29], %s1281
          %1284 = vsyncadd %s1280, 0
          %s1285 = scalar_lea.hbm %s51, %s106
          %s1287 = sshll.u32 %s1285, 4
          %s1288 = int_to_ptr.hbm [resolvable:$true] %s1287
          %s1289 = sshll.u32 %s1282, 4
          %s1290 = int_to_ptr.vmem [resolvable:$true] %s1289
          %1292 = dma.hbm_to_vmem [thread:$0]  %s1288, 16, %s1290, %s1280
        $region124: #{tpu_custom_call.1} parent=19 // pred_fallthru
          _
        // Predicated region
        $region125: #{tpu_custom_call.1} parent=19 // pred_check
          %p1293 = pneg %p806
        $region126: #{tpu_custom_call.1} parent=19 // pred_check_branch
          %1295 = sbr.rel (%p1293) target = $region128
        $region127: #{tpu_custom_call.1} parent=19 // pred_region
          %p1296 = scmp.lt.s32.totalorder %s106, 1
          %s1297 = scalar_select %p1296, %s106, 1
          %s1298 = smul.addr %s1297, 16
          %s1299 = smul.addr %s1298, 4
          %s1300 = scalar_lea.vmem %s53, %s1299
        $region128: #{tpu_custom_call.1} parent=19 // pred_fallthru
          _
        // Predicated region
        $region129: #{tpu_custom_call.1} parent=19 // pred_check
          %p1301 = pneg %p832
        $region130: #{tpu_custom_call.1} parent=19 // pred_check_branch
          %1303 = sbr.rel (%p1301) target = $region132
        $region131: #{tpu_custom_call.1} parent=19 // pred_region
          %s1304 = sand.u32 %s98, 1
          %s1305 = scalar_lea.sflag [#allocation31], %s1304
          %s1306 = sand.u32 %s822, 1
          %s1307 = scalar_lea.vmem [#allocation30], %s1306
          %1309 = vsyncadd %s1305, 0
          %s1310 = scalar_lea.hbm %s55, %s106
          %s1312 = sshll.u32 %s1310, 4
          %s1313 = int_to_ptr.hbm [resolvable:$true] %s1312
          %s1314 = sshll.u32 %s1307, 4
          %s1315 = int_to_ptr.vmem [resolvable:$true] %s1314
          %1317 = dma.hbm_to_vmem [thread:$0]  %s1313, 16, %s1315, %s1305
        $region132: #{tpu_custom_call.1} parent=19 // pred_fallthru
          _
      $region20: #{tpu_custom_call.1} parent=5 // pred_fallthru
        _
      %p1318 = scmp.le.s32.totalorder 1, %s98
      %p1319 = scmp.lt.s32.totalorder %s98, 5
      %p1320 = pnand %p1318, %p1319
      %p1321 = pneg %p1320
      // Predicated region
      $region133: #{tpu_custom_call.1} parent=5 // pred_check
        _
      $region134: #{tpu_custom_call.1} parent=5 // pred_check_branch
        %1323 = sbr.rel (%p1320) target = $region136
      $region135: #{tpu_custom_call.1} parent=5 // pred_region
        %s1324 = ssub.s32 %s98, 1
        %s1325 = sand.u32 %s305, 1
        %s1326 = scalar_lea.sflag [#allocation4], %s1325
        %s1327 = sand.u32 %s305, 1
        %s1328 = scalar_lea.vmem [#allocation3], %s1327
        // Predicated region
        $region137: #{tpu_custom_call.1} parent=135 // pred_check
          %p1329 = pneg %p318
        $region138: #{tpu_custom_call.1} parent=135 // pred_check_branch
          %1331 = sbr.rel (%p1329) target = $region140
        $region139: #{tpu_custom_call.1} parent=135 // pred_region
          %1333 = dma.done %s1326, 16
        $region140: #{tpu_custom_call.1} parent=135 // pred_fallthru
          _
        %s1334 = sand.u32 %s103, 1
        %s1335 = scalar_lea.sflag [#allocation7], %s1334
        %s1336 = sand.u32 %s357, 1
        %s1337 = scalar_lea.vmem [#allocation6], %s1336
        // Predicated region
        $region141: #{tpu_custom_call.1} parent=135 // pred_check
          %p1338 = pneg %p370
        $region142: #{tpu_custom_call.1} parent=135 // pred_check_branch
          %1340 = sbr.rel (%p1338) target = $region144
        $region143: #{tpu_custom_call.1} parent=135 // pred_region
          %1342 = dma.done %s1335, 16
        $region144: #{tpu_custom_call.1} parent=135 // pred_fallthru
          _
        %s1343 = sand.u32 %s103, 1
        %s1344 = scalar_lea.sflag [#allocation7], %s1343
        %s1345 = sand.u32 %s409, 1
        %s1346 = smul.addr %s1345, 16
        %s1347 = scalar_lea.vmem [#allocation8], %s1346
        // Predicated region
        $region145: #{tpu_custom_call.1} parent=135 // pred_check
          %p1348 = pneg %p422
        $region146: #{tpu_custom_call.1} parent=135 // pred_check_branch
          %1350 = sbr.rel (%p1348) target = $region148
        $region147: #{tpu_custom_call.1} parent=135 // pred_region
          %1352 = dma.done %s1344, 256
        $region148: #{tpu_custom_call.1} parent=135 // pred_fallthru
          _
        %s1353 = sand.u32 %s103, 1
        %s1354 = scalar_lea.sflag [#allocation10], %s1353
        %s1355 = sand.u32 %s435, 1
        %s1356 = smul.addr %s1355, 16
        %s1357 = scalar_lea.vmem [#allocation9], %s1356
        // Predicated region
        $region149: #{tpu_custom_call.1} parent=135 // pred_check
          %p1358 = pneg %p448
        $region150: #{tpu_custom_call.1} parent=135 // pred_check_branch
          %1360 = sbr.rel (%p1358) target = $region152
        $region151: #{tpu_custom_call.1} parent=135 // pred_region
          %1362 = dma.done %s1354, 256
        $region152: #{tpu_custom_call.1} parent=135 // pred_fallthru
          _
        %s1363 = sand.u32 %s103, 1
        %s1364 = scalar_lea.sflag [#allocation10], %s1363
        %s1365 = sand.u32 %s461, 1
        %s1366 = scalar_lea.vmem [#allocation11], %s1365
        // Predicated region
        $region153: #{tpu_custom_call.1} parent=135 // pred_check
          %p1367 = pneg %p474
        $region154: #{tpu_custom_call.1} parent=135 // pred_check_branch
          %1369 = sbr.rel (%p1367) target = $region156
        $region155: #{tpu_custom_call.1} parent=135 // pred_region
          %1371 = dma.done %s1364, 16
        $region156: #{tpu_custom_call.1} parent=135 // pred_fallthru
          _
        %s1372 = sand.u32 %s103, 1
        %s1373 = scalar_lea.sflag [#allocation13], %s1372
        %s1374 = sand.u32 %s487, 1
        %s1375 = scalar_lea.vmem [#allocation12], %s1374
        // Predicated region
        $region157: #{tpu_custom_call.1} parent=135 // pred_check
          %p1376 = pneg %p500
        $region158: #{tpu_custom_call.1} parent=135 // pred_check_branch
          %1378 = sbr.rel (%p1376) target = $region160
        $region159: #{tpu_custom_call.1} parent=135 // pred_region
          %1380 = dma.done %s1373, 16
        $region160: #{tpu_custom_call.1} parent=135 // pred_fallthru
          _
        %s1381 = sand.u32 %s103, 1
        %s1382 = scalar_lea.sflag [#allocation13], %s1381
        %s1383 = sand.u32 %s513, 1
        %s1384 = scalar_lea.vmem [#allocation14], %s1383
        // Predicated region
        $region161: #{tpu_custom_call.1} parent=135 // pred_check
          %p1385 = pneg %p526
        $region162: #{tpu_custom_call.1} parent=135 // pred_check_branch
          %1387 = sbr.rel (%p1385) target = $region164
        $region163: #{tpu_custom_call.1} parent=135 // pred_region
          %1389 = dma.done %s1382, 16
        $region164: #{tpu_custom_call.1} parent=135 // pred_fallthru
          _
        %s1390 = sand.u32 %s103, 1
        %s1391 = scalar_lea.sflag [#allocation16], %s1390
        %s1392 = sand.u32 %s539, 1
        %s1393 = smul.addr %s1392, 16
        %s1394 = scalar_lea.vmem [#allocation15], %s1393
        // Predicated region
        $region165: #{tpu_custom_call.1} parent=135 // pred_check
          %p1395 = pneg %p552
        $region166: #{tpu_custom_call.1} parent=135 // pred_check_branch
          %1397 = sbr.rel (%p1395) target = $region168
        $region167: #{tpu_custom_call.1} parent=135 // pred_region
          %1399 = dma.done %s1391, 256
        $region168: #{tpu_custom_call.1} parent=135 // pred_fallthru
          _
        %s1400 = sand.u32 %s103, 1
        %s1401 = scalar_lea.sflag [#allocation16], %s1400
        %s1402 = sand.u32 %s565, 1
        %s1403 = scalar_lea.vmem [#allocation17], %s1402
        // Predicated region
        $region169: #{tpu_custom_call.1} parent=135 // pred_check
          %p1404 = pneg %p578
        $region170: #{tpu_custom_call.1} parent=135 // pred_check_branch
          %1406 = sbr.rel (%p1404) target = $region172
        $region171: #{tpu_custom_call.1} parent=135 // pred_region
          %1408 = dma.done %s1401, 16
        $region172: #{tpu_custom_call.1} parent=135 // pred_fallthru
          _
        %s1409 = sand.u32 %s103, 1
        %s1410 = scalar_lea.sflag [#allocation19], %s1409
        %s1411 = sand.u32 %s591, 1
        %s1412 = scalar_lea.vmem [#allocation18], %s1411
        // Predicated region
        $region173: #{tpu_custom_call.1} parent=135 // pred_check
          %p1413 = pneg %p604
        $region174: #{tpu_custom_call.1} parent=135 // pred_check_branch
          %1415 = sbr.rel (%p1413) target = $region176
        $region175: #{tpu_custom_call.1} parent=135 // pred_region
          %1417 = dma.done %s1410, 16
        $region176: #{tpu_custom_call.1} parent=135 // pred_fallthru
          _
        %s1418 = sand.u32 %s103, 1
        %s1419 = scalar_lea.sflag [#allocation19], %s1418
        %s1420 = sand.u32 %s617, 1
        %s1421 = scalar_lea.vmem [#allocation20], %s1420
        // Predicated region
        $region177: #{tpu_custom_call.1} parent=135 // pred_check
          %p1422 = pneg %p630
        $region178: #{tpu_custom_call.1} parent=135 // pred_check_branch
          %1424 = sbr.rel (%p1422) target = $region180
        $region179: #{tpu_custom_call.1} parent=135 // pred_region
          %1426 = dma.done %s1419, 16
        $region180: #{tpu_custom_call.1} parent=135 // pred_fallthru
          _
        %s1427 = sand.u32 %s103, 1
        %s1428 = scalar_lea.sflag [#allocation22], %s1427
        %s1429 = sand.u32 %s643, 1
        %s1430 = scalar_lea.vmem [#allocation21], %s1429
        // Predicated region
        $region181: #{tpu_custom_call.1} parent=135 // pred_check
          %p1431 = pneg %p656
        $region182: #{tpu_custom_call.1} parent=135 // pred_check_branch
          %1433 = sbr.rel (%p1431) target = $region184
        $region183: #{tpu_custom_call.1} parent=135 // pred_region
          %1435 = dma.done %s1428, 16
        $region184: #{tpu_custom_call.1} parent=135 // pred_fallthru
          _
        %s1436 = sand.u32 %s103, 1
        %s1437 = scalar_lea.sflag [#allocation22], %s1436
        %s1438 = sand.u32 %s669, 1
        %s1439 = scalar_lea.vmem [#allocation23], %s1438
        // Predicated region
        $region185: #{tpu_custom_call.1} parent=135 // pred_check
          %p1440 = pneg %p682
        $region186: #{tpu_custom_call.1} parent=135 // pred_check_branch
          %1442 = sbr.rel (%p1440) target = $region188
        $region187: #{tpu_custom_call.1} parent=135 // pred_region
          %1444 = dma.done %s1437, 16
        $region188: #{tpu_custom_call.1} parent=135 // pred_fallthru
          _
        %s1445 = sand.u32 %s103, 1
        %s1446 = scalar_lea.sflag [#allocation25], %s1445
        %s1447 = sand.u32 %s695, 1
        %s1448 = scalar_lea.vmem [#allocation24], %s1447
        // Predicated region
        $region189: #{tpu_custom_call.1} parent=135 // pred_check
          %p1449 = pneg %p708
        $region190: #{tpu_custom_call.1} parent=135 // pred_check_branch
          %1451 = sbr.rel (%p1449) target = $region192
        $region191: #{tpu_custom_call.1} parent=135 // pred_region
          %1453 = dma.done %s1446, 16
        $region192: #{tpu_custom_call.1} parent=135 // pred_fallthru
          _
        %s1454 = sand.u32 %s103, 1
        %s1455 = scalar_lea.sflag [#allocation25], %s1454
        %s1456 = sand.u32 %s721, 1
        %s1457 = scalar_lea.vmem [#allocation26], %s1456
        // Predicated region
        $region193: #{tpu_custom_call.1} parent=135 // pred_check
          %p1458 = pneg %p734
        $region194: #{tpu_custom_call.1} parent=135 // pred_check_branch
          %1460 = sbr.rel (%p1458) target = $region196
        $region195: #{tpu_custom_call.1} parent=135 // pred_region
          %1462 = dma.done %s1455, 16
        $region196: #{tpu_custom_call.1} parent=135 // pred_fallthru
          _
        %s1463 = sand.u32 %s103, 1
        %s1464 = scalar_lea.sflag [#allocation28], %s1463
        %s1465 = sand.u32 %s747, 1
        %s1466 = smul.addr %s1465, 16
        %s1467 = scalar_lea.vmem [#allocation27], %s1466
        // Predicated region
        $region197: #{tpu_custom_call.1} parent=135 // pred_check
          %p1468 = pneg %p760
        $region198: #{tpu_custom_call.1} parent=135 // pred_check_branch
          %1470 = sbr.rel (%p1468) target = $region200
        $region199: #{tpu_custom_call.1} parent=135 // pred_region
          %1472 = dma.done %s1464, 256
        $region200: #{tpu_custom_call.1} parent=135 // pred_fallthru
          _
        %s1473 = sand.u32 %s103, 1
        %s1474 = scalar_lea.sflag [#allocation28], %s1473
        %s1475 = sand.u32 %s773, 1
        %s1476 = scalar_lea.vmem [#allocation29], %s1475
        // Predicated region
        $region201: #{tpu_custom_call.1} parent=135 // pred_check
          %p1477 = pneg %p786
        $region202: #{tpu_custom_call.1} parent=135 // pred_check_branch
          %1479 = sbr.rel (%p1477) target = $region204
        $region203: #{tpu_custom_call.1} parent=135 // pred_region
          %1481 = dma.done %s1474, 16
        $region204: #{tpu_custom_call.1} parent=135 // pred_fallthru
          _
        %s1482 = sand.u32 %s103, 1
        %s1483 = scalar_lea.sflag [#allocation31], %s1482
        %s1484 = sand.u32 %s825, 1
        %s1485 = scalar_lea.vmem [#allocation30], %s1484
        // Predicated region
        $region205: #{tpu_custom_call.1} parent=135 // pred_check
          %p1486 = pneg %p838
        $region206: #{tpu_custom_call.1} parent=135 // pred_check_branch
          %1488 = sbr.rel (%p1486) target = $region208
        $region207: #{tpu_custom_call.1} parent=135 // pred_region
          %1490 = dma.done %s1483, 16
        $region208: #{tpu_custom_call.1} parent=135 // pred_fallthru
          _
        // Predicated region
        $region209: #{tpu_custom_call.1} parent=135 // pred_check
          %p1491 = pneg %p859
        $region210: #{tpu_custom_call.1} parent=135 // pred_check_branch
          %1493 = sbr.rel (%p1491) target = $region212
        $region211: #{tpu_custom_call.1} parent=135 // pred_region
          %1495 = dma.done [#allocation31], 256
        $region212: #{tpu_custom_call.1} parent=135 // pred_fallthru
          _
        %p1496 = scmp.lt.s32.totalorder %s107, 1
        %s1497 = scalar_select %p1496, %s107, 1
        %s1498 = smul.addr %s1497, 8
        %s1499 = scalar_lea.vmem %s1, %s1498
        %p1500 = pneg %p136
        %p1501 = pneg %p133
        %p1502 = scmp.lt.s32.totalorder %s107, 1
        %s1503 = scalar_select %p1502, %s107, 1
        %s1504 = smul.addr %s1503, 8
        %s1505 = scalar_lea.vmem %s3, %s1504
        %p1506 = pneg %p162
        %p1507 = pneg %p159
        %p1508 = scmp.lt.s32.totalorder %s108, 1
        %s1509 = scalar_select %p1508, %s108, 1
        %s1510 = smul.addr %s1509, 4
        %s1511 = smul.addr %s1510, 4
        %s1512 = scalar_lea.vmem %s5, %s1511
        %p1513 = pneg %p188
        %p1514 = pneg %p185
        %p1515 = scmp.lt.s32.totalorder %s108, 1
        %s1516 = scalar_select %p1515, %s108, 1
        %s1517 = smul.addr %s1516, 4
        %s1518 = smul.addr %s1517, 4
        %s1519 = scalar_lea.vmem %s7, %s1518
        %p1520 = pneg %p214
        %p1521 = pneg %p211
        %p1522 = scmp.lt.s32.totalorder %s108, 1
        %s1523 = scalar_select %p1522, %s108, 1
        %s1524 = smul.addr %s1523, 4
        %s1525 = smul.addr %s1524, 4
        %s1526 = scalar_lea.vmem %s9, %s1525
        %p1527 = pneg %p240
        %p1528 = pneg %p237
        %p1529 = scmp.lt.s32.totalorder %s108, 1
        %s1530 = scalar_select %p1529, %s108, 1
        %s1531 = scalar_lea.vmem %s11, %s1530
        %p1532 = pneg %p266
        %p1533 = pneg %p263
        %p1534 = scmp.lt.s32.totalorder %s108, 1
        %s1535 = scalar_select %p1534, %s108, 1
        %s1536 = scalar_lea.vmem %s13, %s1535
        %p1537 = pneg %p292
        %p1538 = pneg %p289
        %s1539 = sand.u32 %s305, 1
        %s1540 = scalar_lea.sflag [#allocation4], %s1539
        %s1541 = sand.u32 %s305, 1
        %s1542 = scalar_lea.vmem [#allocation3], %s1541
        %p1543 = pneg %p318
        %p1544 = pneg %p315
        %p1545 = scmp.lt.s32.totalorder %s108, 1
        %s1546 = scalar_select %p1545, %s108, 1
        %s1547 = smul.addr %s1546, 4
        %s1548 = smul.addr %s1547, 4
        %s1549 = scalar_lea.vmem %s17, %s1548
        %p1550 = pneg %p344
        %p1551 = pneg %p341
        %s1552 = sand.u32 %s103, 1
        %s1553 = scalar_lea.sflag [#allocation7], %s1552
        %s1554 = sand.u32 %s357, 1
        %s1555 = scalar_lea.vmem [#allocation6], %s1554
        %p1556 = pneg %p370
        %p1557 = pneg %p367
        %p1558 = scmp.lt.s32.totalorder %s108, 1
        %s1559 = scalar_select %p1558, %s108, 1
        %s1560 = smul.addr %s1559, 4
        %s1561 = smul.addr %s1560, 4
        %s1562 = scalar_lea.vmem %s21, %s1561
        %p1563 = pneg %p396
        %p1564 = pneg %p393
        %s1565 = sand.u32 %s103, 1
        %s1566 = scalar_lea.sflag [#allocation7], %s1565
        %s1567 = sand.u32 %s409, 1
        %s1568 = smul.addr %s1567, 16
        %s1569 = scalar_lea.vmem [#allocation8], %s1568
        %p1570 = pneg %p422
        %p1571 = pneg %p419
        %s1572 = sand.u32 %s103, 1
        %s1573 = scalar_lea.sflag [#allocation10], %s1572
        %s1574 = sand.u32 %s435, 1
        %s1575 = smul.addr %s1574, 16
        %s1576 = scalar_lea.vmem [#allocation9], %s1575
        %p1577 = pneg %p448
        %p1578 = pneg %p445
        %s1579 = sand.u32 %s103, 1
        %s1580 = scalar_lea.sflag [#allocation10], %s1579
        %s1581 = sand.u32 %s461, 1
        %s1582 = scalar_lea.vmem [#allocation11], %s1581
        %p1583 = pneg %p474
        %p1584 = pneg %p471
        %s1585 = sand.u32 %s103, 1
        %s1586 = scalar_lea.sflag [#allocation13], %s1585
        %s1587 = sand.u32 %s487, 1
        %s1588 = scalar_lea.vmem [#allocation12], %s1587
        %p1589 = pneg %p500
        %p1590 = pneg %p497
        %s1591 = sand.u32 %s103, 1
        %s1592 = scalar_lea.sflag [#allocation13], %s1591
        %s1593 = sand.u32 %s513, 1
        %s1594 = scalar_lea.vmem [#allocation14], %s1593
        %p1595 = pneg %p526
        %p1596 = pneg %p523
        %s1597 = sand.u32 %s103, 1
        %s1598 = scalar_lea.sflag [#allocation16], %s1597
        %s1599 = sand.u32 %s539, 1
        %s1600 = smul.addr %s1599, 16
        %s1601 = scalar_lea.vmem [#allocation15], %s1600
        %p1602 = pneg %p552
        %p1603 = pneg %p549
        %s1604 = sand.u32 %s103, 1
        %s1605 = scalar_lea.sflag [#allocation16], %s1604
        %s1606 = sand.u32 %s565, 1
        %s1607 = scalar_lea.vmem [#allocation17], %s1606
        %p1608 = pneg %p578
        %p1609 = pneg %p575
        %s1610 = sand.u32 %s103, 1
        %s1611 = scalar_lea.sflag [#allocation19], %s1610
        %s1612 = sand.u32 %s591, 1
        %s1613 = scalar_lea.vmem [#allocation18], %s1612
        %p1614 = pneg %p604
        %p1615 = pneg %p601
        %s1616 = sand.u32 %s103, 1
        %s1617 = scalar_lea.sflag [#allocation19], %s1616
        %s1618 = sand.u32 %s617, 1
        %s1619 = scalar_lea.vmem [#allocation20], %s1618
        %p1620 = pneg %p630
        %p1621 = pneg %p627
        %s1622 = sand.u32 %s103, 1
        %s1623 = scalar_lea.sflag [#allocation22], %s1622
        %s1624 = sand.u32 %s643, 1
        %s1625 = scalar_lea.vmem [#allocation21], %s1624
        %p1626 = pneg %p656
        %p1627 = pneg %p653
        %s1628 = sand.u32 %s103, 1
        %s1629 = scalar_lea.sflag [#allocation22], %s1628
        %s1630 = sand.u32 %s669, 1
        %s1631 = scalar_lea.vmem [#allocation23], %s1630
        %p1632 = pneg %p682
        %p1633 = pneg %p679
        %s1634 = sand.u32 %s103, 1
        %s1635 = scalar_lea.sflag [#allocation25], %s1634
        %s1636 = sand.u32 %s695, 1
        %s1637 = scalar_lea.vmem [#allocation24], %s1636
        %p1638 = pneg %p708
        %p1639 = pneg %p705
        %s1640 = sand.u32 %s103, 1
        %s1641 = scalar_lea.sflag [#allocation25], %s1640
        %s1642 = sand.u32 %s721, 1
        %s1643 = scalar_lea.vmem [#allocation26], %s1642
        %p1644 = pneg %p734
        %p1645 = pneg %p731
        %s1646 = sand.u32 %s103, 1
        %s1647 = scalar_lea.sflag [#allocation28], %s1646
        %s1648 = sand.u32 %s747, 1
        %s1649 = smul.addr %s1648, 16
        %s1650 = scalar_lea.vmem [#allocation27], %s1649
        %p1651 = pneg %p760
        %p1652 = pneg %p757
        %s1653 = sand.u32 %s103, 1
        %s1654 = scalar_lea.sflag [#allocation28], %s1653
        %s1655 = sand.u32 %s773, 1
        %s1656 = scalar_lea.vmem [#allocation29], %s1655
        %p1657 = pneg %p786
        %p1658 = pneg %p783
        %p1659 = scmp.lt.s32.totalorder %s108, 1
        %s1660 = scalar_select %p1659, %s108, 1
        %s1661 = smul.addr %s1660, 16
        %s1662 = smul.addr %s1661, 4
        %s1663 = scalar_lea.vmem %s53, %s1662
        %p1664 = pneg %p812
        %p1665 = pneg %p809
        %s1666 = sand.u32 %s103, 1
        %s1667 = scalar_lea.sflag [#allocation31], %s1666
        %s1668 = sand.u32 %s825, 1
        %s1669 = scalar_lea.vmem [#allocation30], %s1668
        %p1670 = pneg %p838
        %p1671 = pneg %p835
        %p1672 = pneg %p859
        %p1673 = pneg %p856
        %p1674 = pneg %p885
        %p1675 = pneg %p882
        %s1676 = sand.u32 %s872, 1
        %s1677 = scalar_lea.sflag [#allocation5], %s1676
        %s1678 = sand.u32 %s872, 1
        %s1679 = smul.addr %s1678, 8
        %s1680 = scalar_lea.vmem [#allocation33], %s1679
        %p1681 = scmp.lt.s32.totalorder %s107, 1
        %s1682 = scalar_select %p1681, %s107, 1
        %s1683 = smul.addr %s1682, 8
        %s1684 = scalar_lea.vmem %s1, %s1683
        %p1685 = scmp.lt.s32.totalorder %s107, 1
        %s1686 = scalar_select %p1685, %s107, 1
        %s1687 = smul.addr %s1686, 8
        %s1688 = scalar_lea.vmem %s3, %s1687
        %p1689 = scmp.lt.s32.totalorder %s108, 1
        %s1690 = scalar_select %p1689, %s108, 1
        %s1691 = smul.addr %s1690, 4
        %s1692 = smul.addr %s1691, 4
        %s1693 = scalar_lea.vmem %s5, %s1692
        %p1694 = scmp.lt.s32.totalorder %s108, 1
        %s1695 = scalar_select %p1694, %s108, 1
        %s1696 = smul.addr %s1695, 4
        %s1697 = smul.addr %s1696, 4
        %s1698 = scalar_lea.vmem %s7, %s1697
        %p1699 = scmp.lt.s32.totalorder %s108, 1
        %s1700 = scalar_select %p1699, %s108, 1
        %s1701 = smul.addr %s1700, 4
        %s1702 = smul.addr %s1701, 4
        %s1703 = scalar_lea.vmem %s9, %s1702
        %p1704 = scmp.lt.s32.totalorder %s108, 1
        %s1705 = scalar_select %p1704, %s108, 1
        %s1706 = scalar_lea.vmem %s11, %s1705
        %p1707 = scmp.lt.s32.totalorder %s108, 1
        %s1708 = scalar_select %p1707, %s108, 1
        %s1709 = scalar_lea.vmem %s13, %s1708
        %p1710 = scmp.lt.s32.totalorder %s108, 1
        %s1711 = scalar_select %p1710, %s108, 1
        %s1712 = smul.addr %s1711, 4
        %s1713 = smul.addr %s1712, 4
        %s1714 = scalar_lea.vmem %s17, %s1713
        %p1715 = scmp.lt.s32.totalorder %s108, 1
        %s1716 = scalar_select %p1715, %s108, 1
        %s1717 = smul.addr %s1716, 4
        %s1718 = smul.addr %s1717, 4
        %s1719 = scalar_lea.vmem %s21, %s1718
        %p1720 = scmp.lt.s32.totalorder %s108, 1
        %s1721 = scalar_select %p1720, %s108, 1
        %s1722 = smul.addr %s1721, 16
        %s1723 = smul.addr %s1722, 4
        %s1724 = scalar_lea.vmem %s53, %s1723
        %p1726 = scmp.eq.s32.totalorder %s108, 0
        // Predicated region
        $region213: #{tpu_custom_call.1} parent=135 // pred_check
          %p1727 = pneg %p1726
        $region214: #{tpu_custom_call.1} parent=135 // pred_check_branch
          %1729 = sbr.rel (%p1727) target = $region216
        $region215: #{tpu_custom_call.1} parent=135 // pred_region
          %v1730 = vld [vmem:[%s1684] sm:$0xff]
          %vm1731 = vcmask 261120
          %1732 = vst.msk [vmem:[#allocation2] sm:$0xff] %vm1731, %v1730
        $region216: #{tpu_custom_call.1} parent=135 // pred_fallthru
          _
        %v1733 = vld [vmem:[#allocation2] sm:$0xff]
        %v1734 = vld [vmem:[%s1688] sm:$0x3f]
        %v1735 = vld [vmem:[%s1693] sm:$0xf]
        %v1736 = vld [vmem:[%s1693 + $0x4] sm:$0xf]
        %v1737 = vld [vmem:[%s1693 + $0x8] sm:$0xf]
        %v1738 = vld [vmem:[%s1693 + $0xc] sm:$0xf]
        %v1739 = vld [vmem:[%s1698] sm:$0xf]
        %v1740 = vld [vmem:[%s1698 + $0x4] sm:$0xf]
        %v1741 = vld [vmem:[%s1698 + $0x8] sm:$0xf]
        %v1742 = vld [vmem:[%s1698 + $0xc] sm:$0xf]
        %v1743 = vld [vmem:[%s1703] sm:$0xf]
        %v1744 = vld [vmem:[%s1703 + $0x4] sm:$0xf]
        %v1745 = vld [vmem:[%s1703 + $0x8] sm:$0xf]
        %v1746 = vld [vmem:[%s1703 + $0xc] sm:$0xf]
        %v1747 = vld [vmem:[%s1706] sm:$0x1]
        %v1748 = vld [vmem:[%s1709] sm:$0x1]
        %v1749 = vld [vmem:[%s1328] sm:$0x1]
        %v1750 = vld [vmem:[%s1714] sm:$0xf]
        %v1751 = vld [vmem:[%s1714 + $0x4] sm:$0xf]
        %v1752 = vld [vmem:[%s1714 + $0x8] sm:$0xf]
        %v1753 = vld [vmem:[%s1714 + $0xc] sm:$0xf]
        %v1754 = vld [vmem:[%s1337] sm:$0x1]
        %v1755 = vpack.c.bf16 %v1733, %v1733
        %v1757 = vperm.slane %v1747, 0
        %v1763 = vunpack.c.l.b16 %v1735
        %v1764 = vunpack.c.l.b16 %v1736
        %v1765 = vunpack.c.l.b16 %v1737
        %v1766 = vunpack.c.l.b16 %v1738
        %v1767 = vpack.c.b16 %v1764, %v1763
        %v1768 = vpack.c.b16 %v1766, %v1765
        %vm1771 = vcmask 261120
        %v1773 = vsel %vm1771, %v1755, 0
        %1775 = vmatpush.bf16.msra.mxu0 0
        %1776 = vmatpush.bf16.msra.mxu0 0
        %1777 = vmatpush.bf16.msra.mxu0 0
        %1778 = vmatpush.bf16.msra.mxu0 0
        %1779 = vmatpush.bf16.msra.mxu0 0
        %1780 = vmatpush.bf16.msra.mxu0 0
        %1781 = vmatpush.bf16.msra.mxu0 %v1768
        %1782 = vmatpush.bf16.msra.mxu0 %v1767
        %1783 = vmatmul.bf16.gmra.mxu0 %v1773
        %v1784 = vpop.f32.mrf.mxu0
        %v1785 = vadd.f32 %v1757, %v1784
        %v1786 = vpop.f32.mrf.mxu0
        %1787 = vdwg.mxu0
        %v1789 = vperm.slane %v1748, 0
        %v1795 = vunpack.c.l.b16 %v1739
        %v1796 = vunpack.c.l.b16 %v1740
        %v1797 = vunpack.c.l.b16 %v1741
        %v1798 = vunpack.c.l.b16 %v1742
        %v1799 = vpack.c.b16 %v1796, %v1795
        %v1800 = vpack.c.b16 %v1798, %v1797
        %1803 = vmatpush.bf16.msra.mxu0 0
        %1804 = vmatpush.bf16.msra.mxu0 0
        %1805 = vmatpush.bf16.msra.mxu0 0
        %1806 = vmatpush.bf16.msra.mxu0 0
        %1807 = vmatpush.bf16.msra.mxu0 0
        %1808 = vmatpush.bf16.msra.mxu0 0
        %1809 = vmatpush.bf16.msra.mxu0 %v1800
        %1810 = vmatpush.bf16.msra.mxu0 %v1799
        %1811 = vmatmul.bf16.gmra.mxu0 %v1773
        %v1812 = vpop.f32.mrf.mxu0
        %v1813 = vadd.f32 %v1789, %v1812
        %v1814 = vpop.f32.mrf.mxu0
        %1815 = vdwg.mxu0
        %v1817 = vperm.slane %v1749, 0
        %v1823 = vunpack.c.l.b16 %v1743
        %v1824 = vunpack.c.l.b16 %v1744
        %v1825 = vunpack.c.l.b16 %v1745
        %v1826 = vunpack.c.l.b16 %v1746
        %v1827 = vpack.c.b16 %v1824, %v1823
        %v1828 = vpack.c.b16 %v1826, %v1825
        %1831 = vmatpush.bf16.msra.mxu0 0
        %1832 = vmatpush.bf16.msra.mxu0 0
        %1833 = vmatpush.bf16.msra.mxu0 0
        %1834 = vmatpush.bf16.msra.mxu0 0
        %1835 = vmatpush.bf16.msra.mxu0 0
        %1836 = vmatpush.bf16.msra.mxu0 0
        %1837 = vmatpush.bf16.msra.mxu0 %v1828
        %1838 = vmatpush.bf16.msra.mxu0 %v1827
        %1839 = vmatmul.bf16.gmra.mxu0 %v1773
        %v1840 = vpop.f32.mrf.mxu0
        %v1841 = vadd.f32 %v1817, %v1840
        %v1842 = vpop.f32.mrf.mxu0
        %1843 = vdwg.mxu0
        %v1844 = vmul.f32 %v1785, 0.35355338
        %v1845 = vpack.c.bf16 %v1844, %v1844
        %v1846 = vpack.c.bf16 %v1813, %v1813
        %v1847 = vpack.c.bf16 %v1841, %v1841
        %vm1848 = vcmask 64512
        %v1850 = vsel %vm1848, %v1845, 0
        %v1853 = vsel %vm1848, %v1846, 0
        %1855 = vmatpush.bf16.xpose.msra.mxu0 0
        %1856 = vmatpush.bf16.xpose.msra.mxu0 0
        %1857 = vmatpush.bf16.xpose.msra.mxu0 0
        %1858 = vmatpush.bf16.xpose.msra.mxu0 0
        %1859 = vmatpush.bf16.xpose.msra.mxu0 0
        %1860 = vmatpush.bf16.xpose.msra.mxu0 0
        %1861 = vmatpush.bf16.xpose.msra.mxu0 0
        %1862 = vmatpush.bf16.xpose.msra.mxu0 %v1853
        %1863 = vmatmul.bf16.gmra.mxu0 %v1850
        %v1864 = vpop.f32.mrf.mxu0
        %v1865 = vadd.f32 0.0, %v1864
        %v1866 = vpop.f32.mrf.mxu0
        %1867 = vdwg.mxu0
        %v1868 = vsel %vm1848, %v1865, -inf
        %1869 = vmax.xlane.f32.xlu0 %v1868
        %v1870 = vpop.xlane.xlu0 %1869
        %v1871 = vsub.f32 %v1865, %v1870
        %v1872 = vmul.f32 %v1871, 1.442695
        %v1873 = vpow.pop %v1872
        %v1874 = vsel %vm1848, %v1873, 0.0
        %1875 = vadd.xlane.f32.xlu0 %v1874
        %v1876 = vpop.xlane.xlu0 %1875
        %v1877 = vrcp.pop %v1876
        %v1878 = vmul.f32 %v1873, %v1877
        %v1879 = vpack.c.bf16 %v1878, %v1878
        %v1881 = vsel %vm1848, %v1879, 0
        %vm1883 = vcmask 1043456
        %v1885 = vsel %vm1883, %v1847, 0
        %1887 = vmatpush.bf16.msra.mxu0 0
        %1888 = vmatpush.bf16.msra.mxu0 0
        %1889 = vmatpush.bf16.msra.mxu0 0
        %1890 = vmatpush.bf16.msra.mxu0 0
        %1891 = vmatpush.bf16.msra.mxu0 0
        %1892 = vmatpush.bf16.msra.mxu0 0
        %1893 = vmatpush.bf16.msra.mxu0 0
        %1894 = vmatpush.bf16.msra.mxu0 %v1885
        %1895 = vmatmul.bf16.gmra.mxu0 %v1881
        %v1896 = vpop.f32.mrf.mxu0
        %v1897 = vadd.f32 0.0, %v1896
        %v1898 = vpop.f32.mrf.mxu0
        %1899 = vdwg.mxu0
        %v1901 = vunpack.c.l.b16 %v1845
        %v1902 = vpack.c.b16 %v1901, %v1901
        %1903 = vrot.lane.b32.xlu0 %v1902, 120
        %v1904 = vpop.permute.xlu0 %1903
        %v1906 = vunpack.c.l.b16 %v1846
        %v1907 = vpack.c.b16 %v1906, %v1906
        %1908 = vrot.lane.b32.xlu0 %v1907, 120
        %v1909 = vpop.permute.xlu0 %1908
        %v1911 = vsel %vm1848, %v1904, 0
        %v1914 = vsel %vm1848, %v1909, 0
        %1916 = vmatpush.bf16.xpose.msra.mxu0 0
        %1917 = vmatpush.bf16.xpose.msra.mxu0 0
        %1918 = vmatpush.bf16.xpose.msra.mxu0 0
        %1919 = vmatpush.bf16.xpose.msra.mxu0 0
        %1920 = vmatpush.bf16.xpose.msra.mxu0 0
        %1921 = vmatpush.bf16.xpose.msra.mxu0 0
        %1922 = vmatpush.bf16.xpose.msra.mxu0 0
        %1923 = vmatpush.bf16.xpose.msra.mxu0 %v1914
        %1924 = vmatmul.bf16.gmra.mxu0 %v1911
        %v1925 = vpop.f32.mrf.mxu0
        %v1926 = vadd.f32 0.0, %v1925
        %v1927 = vpop.f32.mrf.mxu0
        %1928 = vdwg.mxu0
        %v1929 = vsel %vm1848, %v1926, -inf
        %1930 = vmax.xlane.f32.xlu0 %v1929
        %v1931 = vpop.xlane.xlu0 %1930
        %v1932 = vsub.f32 %v1926, %v1931
        %v1933 = vmul.f32 %v1932, 1.442695
        %v1934 = vpow.pop %v1933
        %v1935 = vsel %vm1848, %v1934, 0.0
        %1936 = vadd.xlane.f32.xlu0 %v1935
        %v1937 = vpop.xlane.xlu0 %1936
        %v1938 = vrcp.pop %v1937
        %v1939 = vmul.f32 %v1934, %v1938
        %v1940 = vpack.c.bf16 %v1939, %v1939
        %v1942 = vunpack.c.l.b16 %v1847
        %v1943 = vpack.c.b16 %v1942, %v1942
        %1944 = vrot.lane.b32.xlu0 %v1943, 120
        %v1945 = vpop.permute.xlu0 %1944
        %v1947 = vsel %vm1848, %v1940, 0
        %v1950 = vsel %vm1883, %v1945, 0
        %1952 = vmatpush.bf16.msra.mxu0 0
        %1953 = vmatpush.bf16.msra.mxu0 0
        %1954 = vmatpush.bf16.msra.mxu0 0
        %1955 = vmatpush.bf16.msra.mxu0 0
        %1956 = vmatpush.bf16.msra.mxu0 0
        %1957 = vmatpush.bf16.msra.mxu0 0
        %1958 = vmatpush.bf16.msra.mxu0 0
        %1959 = vmatpush.bf16.msra.mxu0 %v1950
        %1960 = vmatmul.bf16.gmra.mxu0 %v1947
        %v1961 = vpop.f32.mrf.mxu0
        %v1962 = vadd.f32 0.0, %v1961
        %v1963 = vpop.f32.mrf.mxu0
        %1964 = vdwg.mxu0
        %1965 = vrot.lane.b32.xlu0 %v1902, 112
        %v1966 = vpop.permute.xlu0 %1965
        %1967 = vrot.lane.b32.xlu0 %v1907, 112
        %v1968 = vpop.permute.xlu0 %1967
        %v1970 = vsel %vm1848, %v1966, 0
        %v1973 = vsel %vm1848, %v1968, 0
        %1975 = vmatpush.bf16.xpose.msra.mxu0 0
        %1976 = vmatpush.bf16.xpose.msra.mxu0 0
        %1977 = vmatpush.bf16.xpose.msra.mxu0 0
        %1978 = vmatpush.bf16.xpose.msra.mxu0 0
        %1979 = vmatpush.bf16.xpose.msra.mxu0 0
        %1980 = vmatpush.bf16.xpose.msra.mxu0 0
        %1981 = vmatpush.bf16.xpose.msra.mxu0 0
        %1982 = vmatpush.bf16.xpose.msra.mxu0 %v1973
        %1983 = vmatmul.bf16.gmra.mxu0 %v1970
        %v1984 = vpop.f32.mrf.mxu0
        %v1985 = vadd.f32 0.0, %v1984
        %v1986 = vpop.f32.mrf.mxu0
        %1987 = vdwg.mxu0
        %v1988 = vsel %vm1848, %v1985, -inf
        %1989 = vmax.xlane.f32.xlu0 %v1988
        %v1990 = vpop.xlane.xlu0 %1989
        %v1991 = vsub.f32 %v1985, %v1990
        %v1992 = vmul.f32 %v1991, 1.442695
        %v1993 = vpow.pop %v1992
        %v1994 = vsel %vm1848, %v1993, 0.0
        %1995 = vadd.xlane.f32.xlu0 %v1994
        %v1996 = vpop.xlane.xlu0 %1995
        %v1997 = vrcp.pop %v1996
        %v1998 = vmul.f32 %v1993, %v1997
        %v1999 = vpack.c.bf16 %v1998, %v1998
        %2000 = vrot.lane.b32.xlu0 %v1943, 112
        %v2001 = vpop.permute.xlu0 %2000
        %v2003 = vsel %vm1848, %v1999, 0
        %v2006 = vsel %vm1883, %v2001, 0
        %2008 = vmatpush.bf16.msra.mxu0 0
        %2009 = vmatpush.bf16.msra.mxu0 0
        %2010 = vmatpush.bf16.msra.mxu0 0
        %2011 = vmatpush.bf16.msra.mxu0 0
        %2012 = vmatpush.bf16.msra.mxu0 0
        %2013 = vmatpush.bf16.msra.mxu0 0
        %2014 = vmatpush.bf16.msra.mxu0 0
        %2015 = vmatpush.bf16.msra.mxu0 %v2006
        %2016 = vmatmul.bf16.gmra.mxu0 %v2003
        %v2017 = vpop.f32.mrf.mxu0
        %v2018 = vadd.f32 0.0, %v2017
        %v2019 = vpop.f32.mrf.mxu0
        %2020 = vdwg.mxu0
        %2021 = vrot.lane.b32.xlu0 %v1902, 104
        %v2022 = vpop.permute.xlu0 %2021
        %2023 = vrot.lane.b32.xlu0 %v1907, 104
        %v2024 = vpop.permute.xlu0 %2023
        %v2026 = vsel %vm1848, %v2022, 0
        %v2029 = vsel %vm1848, %v2024, 0
        %2031 = vmatpush.bf16.xpose.msra.mxu0 0
        %2032 = vmatpush.bf16.xpose.msra.mxu0 0
        %2033 = vmatpush.bf16.xpose.msra.mxu0 0
        %2034 = vmatpush.bf16.xpose.msra.mxu0 0
        %2035 = vmatpush.bf16.xpose.msra.mxu0 0
        %2036 = vmatpush.bf16.xpose.msra.mxu0 0
        %2037 = vmatpush.bf16.xpose.msra.mxu0 0
        %2038 = vmatpush.bf16.xpose.msra.mxu0 %v2029
        %2039 = vmatmul.bf16.gmra.mxu0 %v2026
        %v2040 = vpop.f32.mrf.mxu0
        %v2041 = vadd.f32 0.0, %v2040
        %v2042 = vpop.f32.mrf.mxu0
        %2043 = vdwg.mxu0
        %v2044 = vsel %vm1848, %v2041, -inf
        %2045 = vmax.xlane.f32.xlu0 %v2044
        %v2046 = vpop.xlane.xlu0 %2045
        %v2047 = vsub.f32 %v2041, %v2046
        %v2048 = vmul.f32 %v2047, 1.442695
        %v2049 = vpow.pop %v2048
        %v2050 = vsel %vm1848, %v2049, 0.0
        %2051 = vadd.xlane.f32.xlu0 %v2050
        %v2052 = vpop.xlane.xlu0 %2051
        %v2053 = vrcp.pop %v2052
        %v2054 = vmul.f32 %v2049, %v2053
        %v2055 = vpack.c.bf16 %v2054, %v2054
        %2056 = vrot.lane.b32.xlu0 %v1943, 104
        %v2057 = vpop.permute.xlu0 %2056
        %v2059 = vsel %vm1848, %v2055, 0
        %v2062 = vsel %vm1883, %v2057, 0
        %2064 = vmatpush.bf16.msra.mxu0 0
        %2065 = vmatpush.bf16.msra.mxu0 0
        %2066 = vmatpush.bf16.msra.mxu0 0
        %2067 = vmatpush.bf16.msra.mxu0 0
        %2068 = vmatpush.bf16.msra.mxu0 0
        %2069 = vmatpush.bf16.msra.mxu0 0
        %2070 = vmatpush.bf16.msra.mxu0 0
        %2071 = vmatpush.bf16.msra.mxu0 %v2062
        %2072 = vmatmul.bf16.gmra.mxu0 %v2059
        %v2073 = vpop.f32.mrf.mxu0
        %v2074 = vadd.f32 0.0, %v2073
        %v2075 = vpop.f32.mrf.mxu0
        %2076 = vdwg.mxu0
        %2078 = vrot.lane.b32.xlu0 %v1962, 8
        %v2079 = vpop.permute.xlu0 %2078
        %2082 = vrot.lane.b32.xlu0 %v2018, 16
        %v2083 = vpop.permute.xlu0 %2082
        %2086 = vrot.lane.b32.xlu0 %v2074, 24
        %v2087 = vpop.permute.xlu0 %2086
        %v2089 = vsel %vm1848, %v1897, %v2079
        %vm2090 = vcmask 130048
        %v2091 = vsel %vm2090, %v2089, %v2083
        %vm2092 = vcmask 195584
        %v2093 = vsel %vm2092, %v2091, %v2087
        %v2094 = vpack.c.bf16 %v2093, %v2093
        %v2096 = vperm.slane %v1754, 0
        %v2102 = vunpack.c.l.b16 %v1750
        %v2103 = vunpack.c.l.b16 %v1751
        %v2104 = vunpack.c.l.b16 %v1752
        %v2105 = vunpack.c.l.b16 %v1753
        %v2106 = vpack.c.b16 %v2103, %v2102
        %v2107 = vpack.c.b16 %v2105, %v2104
        %v2111 = vsel %vm1771, %v2094, 0
        %2113 = vmatpush.bf16.msra.mxu0 0
        %2114 = vmatpush.bf16.msra.mxu0 0
        %2115 = vmatpush.bf16.msra.mxu0 0
        %2116 = vmatpush.bf16.msra.mxu0 0
        %2117 = vmatpush.bf16.msra.mxu0 0
        %2118 = vmatpush.bf16.msra.mxu0 0
        %2119 = vmatpush.bf16.msra.mxu0 %v2107
        %2120 = vmatpush.bf16.msra.mxu0 %v2106
        %2121 = vmatmul.bf16.gmra.mxu0 %v2111
        %v2122 = vpop.f32.mrf.mxu0
        %v2123 = vadd.f32 %v2096, %v2122
        %v2124 = vpop.f32.mrf.mxu0
        %2125 = vdwg.mxu0
        %v2126 = vadd.f32 %v1733, %v2123
        %v2127 = vld [vmem:[%s1412] sm:$0x1]
        %v2128 = vld [vmem:[%s1421] sm:$0x1]
        %v2129 = vsel %vm1771, %v2126, 0.0
        %2130 = vadd.xlane.f32.xlu0 %v2129
        %v2131 = vpop.xlane.xlu0 %2130
        %v2132 = vrcp.pop 32.0
        %v2133 = vmul.f32 32.0, %v2132
        %v2134 = vsub.f32 1.0, %v2133
        %v2135 = vmul.f32 %v2132, %v2134
        %v2136 = vadd.f32 %v2132, %v2135
        %vm2137 = vweird.f32 %v2132
        %v2138 = vsel %vm2137, %v2132, %v2136
        %v2139 = vmul.f32 %v2131, %v2138
        %v2140 = vsub.f32 %v2126, %v2139
        %v2141 = vmul.f32 %v2140, %v2140
        %v2142 = vsel %vm1771, %v2141, 0.0
        %2143 = vadd.xlane.f32.xlu0 %v2142
        %v2144 = vpop.xlane.xlu0 %2143
        %v2145 = vmul.f32 %v2144, %v2138
        %v2146 = vadd.f32 %v2145, 1e-05
        %v2147 = vrsqrt.pop %v2146
        %v2148 = vmul.f32 %v2147, %v2146
        %v2149 = vmul.f32 %v2148, %v2147
        %v2150 = vmul.f32 0.5, %v2149
        %v2151 = vsub.f32 1.5, %v2150
        %v2152 = vmul.f32 %v2147, %v2151
        %vm2153 = vweird.f32 %v2146
        %vm2154 = vweird.f32 %v2147
        %vm2155 = vmor %vm2153, %vm2154
        %v2156 = vsel %vm2155, %v2147, %v2152
        %v2157 = vmul.f32 %v2140, %v2156
        %v2159 = vperm.slane %v2127, 0
        %v2161 = vmul.f32 %v2157, %v2159
        %v2163 = vperm.slane %v2128, 0
        %v2165 = vadd.f32 %v2161, %v2163
        %v2166 = vld [vmem:[%s1719] sm:$0xf]
        %v2167 = vld [vmem:[%s1719 + $0x4] sm:$0xf]
        %v2168 = vld [vmem:[%s1719 + $0x8] sm:$0xf]
        %v2169 = vld [vmem:[%s1719 + $0xc] sm:$0xf]
        %v2170 = vld [vmem:[%s1347] sm:$0xf]
        %v2171 = vld [vmem:[%s1347 + $0x4] sm:$0xf]
        %v2172 = vld [vmem:[%s1347 + $0x8] sm:$0xf]
        %v2173 = vld [vmem:[%s1347 + $0xc] sm:$0xf]
        %v2174 = vld [vmem:[%s1357] sm:$0xf]
        %v2175 = vld [vmem:[%s1357 + $0x4] sm:$0xf]
        %v2176 = vld [vmem:[%s1357 + $0x8] sm:$0xf]
        %v2177 = vld [vmem:[%s1357 + $0xc] sm:$0xf]
        %v2178 = vld [vmem:[%s1366] sm:$0x1]
        %v2179 = vld [vmem:[%s1375] sm:$0x1]
        %v2180 = vld [vmem:[%s1384] sm:$0x1]
        %v2181 = vld [vmem:[%s1394] sm:$0xf]
        %v2182 = vld [vmem:[%s1394 + $0x4] sm:$0xf]
        %v2183 = vld [vmem:[%s1394 + $0x8] sm:$0xf]
        %v2184 = vld [vmem:[%s1394 + $0xc] sm:$0xf]
        %v2185 = vld [vmem:[%s1403] sm:$0x1]
        %v2186 = vpack.c.bf16 %v2165, %v2165
        %v2187 = vpack.c.bf16 %v1734, %v1734
        %v2189 = vperm.slane %v2178, 0
        %v2195 = vunpack.c.l.b16 %v2166
        %v2196 = vunpack.c.l.b16 %v2167
        %v2197 = vunpack.c.l.b16 %v2168
        %v2198 = vunpack.c.l.b16 %v2169
        %v2199 = vpack.c.b16 %v2196, %v2195
        %v2200 = vpack.c.b16 %v2198, %v2197
        %v2204 = vsel %vm1771, %v2186, 0
        %2206 = vmatpush.bf16.msra.mxu0 0
        %2207 = vmatpush.bf16.msra.mxu0 0
        %2208 = vmatpush.bf16.msra.mxu0 0
        %2209 = vmatpush.bf16.msra.mxu0 0
        %2210 = vmatpush.bf16.msra.mxu0 0
        %2211 = vmatpush.bf16.msra.mxu0 0
        %2212 = vmatpush.bf16.msra.mxu0 %v2200
        %2213 = vmatpush.bf16.msra.mxu0 %v2199
        %2214 = vmatmul.bf16.gmra.mxu0 %v2204
        %v2215 = vpop.f32.mrf.mxu0
        %v2216 = vadd.f32 %v2189, %v2215
        %v2217 = vpop.f32.mrf.mxu0
        %2218 = vdwg.mxu0
        %v2220 = vperm.slane %v2179, 0
        %v2226 = vunpack.c.l.b16 %v2170
        %v2227 = vunpack.c.l.b16 %v2171
        %v2228 = vunpack.c.l.b16 %v2172
        %v2229 = vunpack.c.l.b16 %v2173
        %v2230 = vpack.c.b16 %v2227, %v2226
        %v2231 = vpack.c.b16 %v2229, %v2228
        %v2235 = vsel %vm1771, %v2187, 0
        %2237 = vmatpush.bf16.msra.mxu0 0
        %2238 = vmatpush.bf16.msra.mxu0 0
        %2239 = vmatpush.bf16.msra.mxu0 0
        %2240 = vmatpush.bf16.msra.mxu0 0
        %2241 = vmatpush.bf16.msra.mxu0 0
        %2242 = vmatpush.bf16.msra.mxu0 0
        %2243 = vmatpush.bf16.msra.mxu0 %v2231
        %2244 = vmatpush.bf16.msra.mxu0 %v2230
        %2245 = vmatmul.bf16.gmra.mxu0 %v2235
        %v2246 = vpop.f32.mrf.mxu0
        %v2247 = vadd.f32 %v2220, %v2246
        %v2248 = vpop.f32.mrf.mxu0
        %2249 = vdwg.mxu0
        %v2251 = vperm.slane %v2180, 0
        %v2257 = vunpack.c.l.b16 %v2174
        %v2258 = vunpack.c.l.b16 %v2175
        %v2259 = vunpack.c.l.b16 %v2176
        %v2260 = vunpack.c.l.b16 %v2177
        %v2261 = vpack.c.b16 %v2258, %v2257
        %v2262 = vpack.c.b16 %v2260, %v2259
        %2265 = vmatpush.bf16.msra.mxu0 0
        %2266 = vmatpush.bf16.msra.mxu0 0
        %2267 = vmatpush.bf16.msra.mxu0 0
        %2268 = vmatpush.bf16.msra.mxu0 0
        %2269 = vmatpush.bf16.msra.mxu0 0
        %2270 = vmatpush.bf16.msra.mxu0 0
        %2271 = vmatpush.bf16.msra.mxu0 %v2262
        %2272 = vmatpush.bf16.msra.mxu0 %v2261
        %2273 = vmatmul.bf16.gmra.mxu0 %v2235
        %v2274 = vpop.f32.mrf.mxu0
        %v2275 = vadd.f32 %v2251, %v2274
        %v2276 = vpop.f32.mrf.mxu0
        %2277 = vdwg.mxu0
        %v2278 = vmul.f32 %v2216, 0.35355338
        %v2279 = vpack.c.bf16 %v2278, %v2278
        %v2280 = vpack.c.bf16 %v2247, %v2247
        %v2281 = vpack.c.bf16 %v2275, %v2275
        %v2283 = vsel %vm1848, %v2279, 0
        %v2286 = vsel %vm1848, %v2280, 0
        %2288 = vmatpush.bf16.xpose.msra.mxu0 0
        %2289 = vmatpush.bf16.xpose.msra.mxu0 0
        %2290 = vmatpush.bf16.xpose.msra.mxu0 0
        %2291 = vmatpush.bf16.xpose.msra.mxu0 0
        %2292 = vmatpush.bf16.xpose.msra.mxu0 0
        %2293 = vmatpush.bf16.xpose.msra.mxu0 0
        %2294 = vmatpush.bf16.xpose.msra.mxu0 0
        %2295 = vmatpush.bf16.xpose.msra.mxu0 %v2286
        %2296 = vmatmul.bf16.gmra.mxu0 %v2283
        %v2297 = vpop.f32.mrf.mxu0
        %v2298 = vadd.f32 0.0, %v2297
        %v2299 = vpop.f32.mrf.mxu0
        %2300 = vdwg.mxu0
        %vm2301 = vcmask 48128
        %v2302 = vsel %vm2301, %v2298, -inf
        %2303 = vmax.xlane.f32.xlu0 %v2302
        %v2304 = vpop.xlane.xlu0 %2303
        %v2305 = vsub.f32 %v2298, %v2304
        %v2306 = vmul.f32 %v2305, 1.442695
        %v2307 = vpow.pop %v2306
        %v2308 = vsel %vm2301, %v2307, 0.0
        %2309 = vadd.xlane.f32.xlu0 %v2308
        %v2310 = vpop.xlane.xlu0 %2309
        %v2311 = vrcp.pop %v2310
        %v2312 = vmul.f32 %v2307, %v2311
        %v2313 = vpack.c.bf16 %v2312, %v2312
        %v2315 = vsel %vm2301, %v2313, 0
        %vm2317 = vcmask 1042432
        %v2319 = vsel %vm2317, %v2281, 0
        %2321 = vmatpush.bf16.msra.mxu0 0
        %2322 = vmatpush.bf16.msra.mxu0 0
        %2323 = vmatpush.bf16.msra.mxu0 0
        %2324 = vmatpush.bf16.msra.mxu0 0
        %2325 = vmatpush.bf16.msra.mxu0 0
        %2326 = vmatpush.bf16.msra.mxu0 0
        %2327 = vmatpush.bf16.msra.mxu0 0
        %2328 = vmatpush.bf16.msra.mxu0 %v2319
        %2329 = vmatmul.bf16.gmra.mxu0 %v2315
        %v2330 = vpop.f32.mrf.mxu0
        %v2331 = vadd.f32 0.0, %v2330
        %v2332 = vpop.f32.mrf.mxu0
        %2333 = vdwg.mxu0
        %v2335 = vunpack.c.l.b16 %v2279
        %v2336 = vpack.c.b16 %v2335, %v2335
        %2337 = vrot.lane.b32.xlu0 %v2336, 120
        %v2338 = vpop.permute.xlu0 %2337
        %v2340 = vunpack.c.l.b16 %v2280
        %v2341 = vpack.c.b16 %v2340, %v2340
        %2342 = vrot.lane.b32.xlu0 %v2341, 120
        %v2343 = vpop.permute.xlu0 %2342
        %v2345 = vsel %vm1848, %v2338, 0
        %v2348 = vsel %vm1848, %v2343, 0
        %2350 = vmatpush.bf16.xpose.msra.mxu0 0
        %2351 = vmatpush.bf16.xpose.msra.mxu0 0
        %2352 = vmatpush.bf16.xpose.msra.mxu0 0
        %2353 = vmatpush.bf16.xpose.msra.mxu0 0
        %2354 = vmatpush.bf16.xpose.msra.mxu0 0
        %2355 = vmatpush.bf16.xpose.msra.mxu0 0
        %2356 = vmatpush.bf16.xpose.msra.mxu0 0
        %2357 = vmatpush.bf16.xpose.msra.mxu0 %v2348
        %2358 = vmatmul.bf16.gmra.mxu0 %v2345
        %v2359 = vpop.f32.mrf.mxu0
        %v2360 = vadd.f32 0.0, %v2359
        %v2361 = vpop.f32.mrf.mxu0
        %2362 = vdwg.mxu0
        %v2363 = vsel %vm2301, %v2360, -inf
        %2364 = vmax.xlane.f32.xlu0 %v2363
        %v2365 = vpop.xlane.xlu0 %2364
        %v2366 = vsub.f32 %v2360, %v2365
        %v2367 = vmul.f32 %v2366, 1.442695
        %v2368 = vpow.pop %v2367
        %v2369 = vsel %vm2301, %v2368, 0.0
        %2370 = vadd.xlane.f32.xlu0 %v2369
        %v2371 = vpop.xlane.xlu0 %2370
        %v2372 = vrcp.pop %v2371
        %v2373 = vmul.f32 %v2368, %v2372
        %v2374 = vpack.c.bf16 %v2373, %v2373
        %v2376 = vunpack.c.l.b16 %v2281
        %v2377 = vpack.c.b16 %v2376, %v2376
        %2378 = vrot.lane.b32.xlu0 %v2377, 120
        %v2379 = vpop.permute.xlu0 %2378
        %v2381 = vsel %vm2301, %v2374, 0
        %v2384 = vsel %vm2317, %v2379, 0
        %2386 = vmatpush.bf16.msra.mxu0 0
        %2387 = vmatpush.bf16.msra.mxu0 0
        %2388 = vmatpush.bf16.msra.mxu0 0
        %2389 = vmatpush.bf16.msra.mxu0 0
        %2390 = vmatpush.bf16.msra.mxu0 0
        %2391 = vmatpush.bf16.msra.mxu0 0
        %2392 = vmatpush.bf16.msra.mxu0 0
        %2393 = vmatpush.bf16.msra.mxu0 %v2384
        %2394 = vmatmul.bf16.gmra.mxu0 %v2381
        %v2395 = vpop.f32.mrf.mxu0
        %v2396 = vadd.f32 0.0, %v2395
        %v2397 = vpop.f32.mrf.mxu0
        %2398 = vdwg.mxu0
        %2399 = vrot.lane.b32.xlu0 %v2336, 112
        %v2400 = vpop.permute.xlu0 %2399
        %2401 = vrot.lane.b32.xlu0 %v2341, 112
        %v2402 = vpop.permute.xlu0 %2401
        %v2404 = vsel %vm1848, %v2400, 0
        %v2407 = vsel %vm1848, %v2402, 0
        %2409 = vmatpush.bf16.xpose.msra.mxu0 0
        %2410 = vmatpush.bf16.xpose.msra.mxu0 0
        %2411 = vmatpush.bf16.xpose.msra.mxu0 0
        %2412 = vmatpush.bf16.xpose.msra.mxu0 0
        %2413 = vmatpush.bf16.xpose.msra.mxu0 0
        %2414 = vmatpush.bf16.xpose.msra.mxu0 0
        %2415 = vmatpush.bf16.xpose.msra.mxu0 0
        %2416 = vmatpush.bf16.xpose.msra.mxu0 %v2407
        %2417 = vmatmul.bf16.gmra.mxu0 %v2404
        %v2418 = vpop.f32.mrf.mxu0
        %v2419 = vadd.f32 0.0, %v2418
        %v2420 = vpop.f32.mrf.mxu0
        %2421 = vdwg.mxu0
        %v2422 = vsel %vm2301, %v2419, -inf
        %2423 = vmax.xlane.f32.xlu0 %v2422
        %v2424 = vpop.xlane.xlu0 %2423
        %v2425 = vsub.f32 %v2419, %v2424
        %v2426 = vmul.f32 %v2425, 1.442695
        %v2427 = vpow.pop %v2426
        %v2428 = vsel %vm2301, %v2427, 0.0
        %2429 = vadd.xlane.f32.xlu0 %v2428
        %v2430 = vpop.xlane.xlu0 %2429
        %v2431 = vrcp.pop %v2430
        %v2432 = vmul.f32 %v2427, %v2431
        %v2433 = vpack.c.bf16 %v2432, %v2432
        %2434 = vrot.lane.b32.xlu0 %v2377, 112
        %v2435 = vpop.permute.xlu0 %2434
        %v2437 = vsel %vm2301, %v2433, 0
        %v2440 = vsel %vm2317, %v2435, 0
        %2442 = vmatpush.bf16.msra.mxu0 0
        %2443 = vmatpush.bf16.msra.mxu0 0
        %2444 = vmatpush.bf16.msra.mxu0 0
        %2445 = vmatpush.bf16.msra.mxu0 0
        %2446 = vmatpush.bf16.msra.mxu0 0
        %2447 = vmatpush.bf16.msra.mxu0 0
        %2448 = vmatpush.bf16.msra.mxu0 0
        %2449 = vmatpush.bf16.msra.mxu0 %v2440
        %2450 = vmatmul.bf16.gmra.mxu0 %v2437
        %v2451 = vpop.f32.mrf.mxu0
        %v2452 = vadd.f32 0.0, %v2451
        %v2453 = vpop.f32.mrf.mxu0
        %2454 = vdwg.mxu0
        %2455 = vrot.lane.b32.xlu0 %v2336, 104
        %v2456 = vpop.permute.xlu0 %2455
        %2457 = vrot.lane.b32.xlu0 %v2341, 104
        %v2458 = vpop.permute.xlu0 %2457
        %v2460 = vsel %vm1848, %v2456, 0
        %v2463 = vsel %vm1848, %v2458, 0
        %2465 = vmatpush.bf16.xpose.msra.mxu0 0
        %2466 = vmatpush.bf16.xpose.msra.mxu0 0
        %2467 = vmatpush.bf16.xpose.msra.mxu0 0
        %2468 = vmatpush.bf16.xpose.msra.mxu0 0
        %2469 = vmatpush.bf16.xpose.msra.mxu0 0
        %2470 = vmatpush.bf16.xpose.msra.mxu0 0
        %2471 = vmatpush.bf16.xpose.msra.mxu0 0
        %2472 = vmatpush.bf16.xpose.msra.mxu0 %v2463
        %2473 = vmatmul.bf16.gmra.mxu0 %v2460
        %v2474 = vpop.f32.mrf.mxu0
        %v2475 = vadd.f32 0.0, %v2474
        %v2476 = vpop.f32.mrf.mxu0
        %2477 = vdwg.mxu0
        %v2478 = vsel %vm2301, %v2475, -inf
        %2479 = vmax.xlane.f32.xlu0 %v2478
        %v2480 = vpop.xlane.xlu0 %2479
        %v2481 = vsub.f32 %v2475, %v2480
        %v2482 = vmul.f32 %v2481, 1.442695
        %v2483 = vpow.pop %v2482
        %v2484 = vsel %vm2301, %v2483, 0.0
        %2485 = vadd.xlane.f32.xlu0 %v2484
        %v2486 = vpop.xlane.xlu0 %2485
        %v2487 = vrcp.pop %v2486
        %v2488 = vmul.f32 %v2483, %v2487
        %v2489 = vpack.c.bf16 %v2488, %v2488
        %2490 = vrot.lane.b32.xlu0 %v2377, 104
        %v2491 = vpop.permute.xlu0 %2490
        %v2493 = vsel %vm2301, %v2489, 0
        %v2496 = vsel %vm2317, %v2491, 0
        %2498 = vmatpush.bf16.msra.mxu0 0
        %2499 = vmatpush.bf16.msra.mxu0 0
        %2500 = vmatpush.bf16.msra.mxu0 0
        %2501 = vmatpush.bf16.msra.mxu0 0
        %2502 = vmatpush.bf16.msra.mxu0 0
        %2503 = vmatpush.bf16.msra.mxu0 0
        %2504 = vmatpush.bf16.msra.mxu0 0
        %2505 = vmatpush.bf16.msra.mxu0 %v2496
        %2506 = vmatmul.bf16.gmra.mxu0 %v2493
        %v2507 = vpop.f32.mrf.mxu0
        %v2508 = vadd.f32 0.0, %v2507
        %v2509 = vpop.f32.mrf.mxu0
        %2510 = vdwg.mxu0
        %2512 = vrot.lane.b32.xlu0 %v2396, 8
        %v2513 = vpop.permute.xlu0 %2512
        %2516 = vrot.lane.b32.xlu0 %v2452, 16
        %v2517 = vpop.permute.xlu0 %2516
        %2520 = vrot.lane.b32.xlu0 %v2508, 24
        %v2521 = vpop.permute.xlu0 %2520
        %v2523 = vsel %vm1848, %v2331, %v2513
        %v2524 = vsel %vm2090, %v2523, %v2517
        %v2525 = vsel %vm2092, %v2524, %v2521
        %v2526 = vpack.c.bf16 %v2525, %v2525
        %v2528 = vperm.slane %v2185, 0
        %v2534 = vunpack.c.l.b16 %v2181
        %v2535 = vunpack.c.l.b16 %v2182
        %v2536 = vunpack.c.l.b16 %v2183
        %v2537 = vunpack.c.l.b16 %v2184
        %v2538 = vpack.c.b16 %v2535, %v2534
        %v2539 = vpack.c.b16 %v2537, %v2536
        %v2543 = vsel %vm1771, %v2526, 0
        %2545 = vmatpush.bf16.msra.mxu0 0
        %2546 = vmatpush.bf16.msra.mxu0 0
        %2547 = vmatpush.bf16.msra.mxu0 0
        %2548 = vmatpush.bf16.msra.mxu0 0
        %2549 = vmatpush.bf16.msra.mxu0 0
        %2550 = vmatpush.bf16.msra.mxu0 0
        %2551 = vmatpush.bf16.msra.mxu0 %v2539
        %2552 = vmatpush.bf16.msra.mxu0 %v2538
        %2553 = vmatmul.bf16.gmra.mxu0 %v2543
        %v2554 = vpop.f32.mrf.mxu0
        %v2555 = vadd.f32 %v2528, %v2554
        %v2556 = vpop.f32.mrf.mxu0
        %2557 = vdwg.mxu0
        %v2558 = vadd.f32 %v2165, %v2555
        %v2559 = vld [vmem:[%s1430] sm:$0x1]
        %v2560 = vld [vmem:[%s1439] sm:$0x1]
        %v2561 = vsel %vm1771, %v2558, 0.0
        %2562 = vadd.xlane.f32.xlu0 %v2561
        %v2563 = vpop.xlane.xlu0 %2562
        %v2564 = vmul.f32 %v2563, %v2138
        %v2565 = vsub.f32 %v2558, %v2564
        %v2566 = vmul.f32 %v2565, %v2565
        %v2567 = vsel %vm1771, %v2566, 0.0
        %2568 = vadd.xlane.f32.xlu0 %v2567
        %v2569 = vpop.xlane.xlu0 %2568
        %v2570 = vmul.f32 %v2569, %v2138
        %v2571 = vadd.f32 %v2570, 1e-05
        %v2572 = vrsqrt.pop %v2571
        %v2573 = vmul.f32 %v2572, %v2571
        %v2574 = vmul.f32 %v2573, %v2572
        %v2575 = vmul.f32 0.5, %v2574
        %v2576 = vsub.f32 1.5, %v2575
        %v2577 = vmul.f32 %v2572, %v2576
        %vm2578 = vweird.f32 %v2571
        %vm2579 = vweird.f32 %v2572
        %vm2580 = vmor %vm2578, %vm2579
        %v2581 = vsel %vm2580, %v2572, %v2577
        %v2582 = vmul.f32 %v2565, %v2581
        %v2584 = vperm.slane %v2559, 0
        %v2586 = vmul.f32 %v2582, %v2584
        %v2588 = vperm.slane %v2560, 0
        %v2590 = vadd.f32 %v2586, %v2588
        %v2591 = vpack.c.bf16 %v2590, %v2590
        %v2592 = vld [vmem:[%s1467] sm:$0xf]
        %v2593 = vld [vmem:[%s1467 + $0x4] sm:$0xf]
        %v2594 = vld [vmem:[%s1467 + $0x8] sm:$0xf]
        %v2595 = vld [vmem:[%s1467 + $0xc] sm:$0xf]
        %v2596 = vld [vmem:[%s1476] sm:$0x1]
        %v2598 = vperm.slane %v2596, 0
        %v2604 = vunpack.c.l.b16 %v2592
        %v2605 = vunpack.c.l.b16 %v2593
        %v2606 = vunpack.c.l.b16 %v2594
        %v2607 = vunpack.c.l.b16 %v2595
        %v2608 = vpack.c.b16 %v2605, %v2604
        %v2609 = vpack.c.b16 %v2607, %v2606
        %v2613 = vsel %vm1771, %v2591, 0
        %2615 = vmatpush.bf16.msra.mxu0 0
        %2616 = vmatpush.bf16.msra.mxu0 0
        %2617 = vmatpush.bf16.msra.mxu0 0
        %2618 = vmatpush.bf16.msra.mxu0 0
        %2619 = vmatpush.bf16.msra.mxu0 0
        %2620 = vmatpush.bf16.msra.mxu0 0
        %2621 = vmatpush.bf16.msra.mxu0 %v2609
        %2622 = vmatpush.bf16.msra.mxu0 %v2608
        %2623 = vmatmul.bf16.gmra.mxu0 %v2613
        %v2624 = vpop.f32.mrf.mxu0
        %v2625 = vadd.f32 %v2598, %v2624
        %v2626 = vpop.f32.mrf.mxu0
        %2627 = vdwg.mxu0
        %v2628 = vmul.f32 %v2625, 0.5
        %v2629 = vmul.f32 %v2625, 0.70710677
        %vm2630 = vcmp.ge.f32.partialorder %v2629, 0.0
        %v2631 = vsel %vm2630, 1.0, -1.0
        %v2632 = vand.u32 2147483647, %v2629
        %v2633 = vmul.f32 %v2632, 0.3275911
        %v2634 = vadd.f32 %v2633, 1.0
        %v2635 = vrcp.pop %v2634
        %v2636 = vmul.f32 %v2634, %v2635
        %v2637 = vsub.f32 1.0, %v2636
        %v2638 = vmul.f32 %v2635, %v2637
        %v2639 = vadd.f32 %v2635, %v2638
        %vm2640 = vweird.f32 %v2634
        %vm2641 = vweird.f32 %v2635
        %vm2642 = vmor %vm2640, %vm2641
        %v2643 = vsel %vm2642, %v2635, %v2639
        %v2644 = vand.u32 2147483647, %v2634
        %vm2645 = vcmp.eq.f32.partialorder %v2644, 8.507059e+37
        %v2646 = vand.u32 %v2634, 2147483648
        %v2647 = vor.u32 1.1754944e-38, %v2646
        %v2648 = vsel %vm2645, %v2647, %v2643
        %v2649 = vmul.f32 1.0, %v2648
        %v2650 = vmul.f32 %v2649, 1.0614054
        %v2651 = vadd.f32 %v2650, -1.4531521
        %v2652 = vmul.f32 %v2651, %v2649
        %v2653 = vadd.f32 %v2652, 1.4214138
        %v2654 = vmul.f32 %v2653, %v2649
        %v2655 = vadd.f32 %v2654, -0.28449672
        %v2656 = vmul.f32 %v2655, %v2649
        %v2657 = vadd.f32 %v2656, 0.2548296
        %v2658 = vmul.f32 %v2657, %v2649
        %v2659 = vsub.f32 0.0, %v2632
        %v2660 = vmul.f32 %v2659, %v2632
        %v2661 = vmul.f32 %v2660, 1.442695
        %v2662 = vpow.pop %v2661
        %v2663 = vmul.f32 %v2658, %v2662
        %v2664 = vsub.f32 1.0, %v2663
        %v2665 = vmul.f32 %v2631, %v2664
        %v2666 = vadd.f32 %v2665, 1.0
        %v2667 = vmul.f32 %v2628, %v2666
        %v2668 = vpack.c.bf16 %v2667, %v2667
        %v2669 = vld [vmem:[%s1724] sm:$0xf]
        %v2670 = vld [vmem:[%s1724 + $0x4] sm:$0xf]
        %v2671 = vld [vmem:[%s1724 + $0x8] sm:$0xf]
        %v2672 = vld [vmem:[%s1724 + $0xc] sm:$0xf]
        %v2673 = vld [vmem:[%s1724 + $0x10] sm:$0xf]
        %v2674 = vld [vmem:[%s1724 + $0x14] sm:$0xf]
        %v2675 = vld [vmem:[%s1724 + $0x18] sm:$0xf]
        %v2676 = vld [vmem:[%s1724 + $0x1c] sm:$0xf]
        %v2677 = vld [vmem:[%s1724 + $0x20] sm:$0xf]
        %v2678 = vld [vmem:[%s1724 + $0x24] sm:$0xf]
        %v2679 = vld [vmem:[%s1724 + $0x28] sm:$0xf]
        %v2680 = vld [vmem:[%s1724 + $0x2c] sm:$0xf]
        %v2681 = vld [vmem:[%s1724 + $0x30] sm:$0xf]
        %v2682 = vld [vmem:[%s1724 + $0x34] sm:$0xf]
        %v2683 = vld [vmem:[%s1724 + $0x38] sm:$0xf]
        %v2684 = vld [vmem:[%s1724 + $0x3c] sm:$0xf]
        %v2685 = vld [vmem:[%s1485] sm:$0x1]
        %v2687 = vperm.slane %v2685, 0
        %v2705 = vunpack.c.l.b16 %v2669
        %v2706 = vunpack.c.l.b16 %v2670
        %v2707 = vunpack.c.l.b16 %v2671
        %v2708 = vunpack.c.l.b16 %v2672
        %v2709 = vunpack.c.l.b16 %v2673
        %v2710 = vunpack.c.l.b16 %v2674
        %v2711 = vunpack.c.l.b16 %v2675
        %v2712 = vunpack.c.l.b16 %v2676
        %v2713 = vunpack.c.l.b16 %v2677
        %v2714 = vunpack.c.l.b16 %v2678
        %v2715 = vunpack.c.l.b16 %v2679
        %v2716 = vunpack.c.l.b16 %v2680
        %v2717 = vunpack.c.l.b16 %v2681
        %v2718 = vunpack.c.l.b16 %v2682
        %v2719 = vunpack.c.l.b16 %v2683
        %v2720 = vunpack.c.l.b16 %v2684
        %v2721 = vpack.c.b16 %v2706, %v2705
        %v2722 = vpack.c.b16 %v2708, %v2707
        %v2723 = vpack.c.b16 %v2710, %v2709
        %v2724 = vpack.c.b16 %v2712, %v2711
        %v2725 = vpack.c.b16 %v2714, %v2713
        %v2726 = vpack.c.b16 %v2716, %v2715
        %v2727 = vpack.c.b16 %v2718, %v2717
        %v2728 = vpack.c.b16 %v2720, %v2719
        %2737 = vmatpush.bf16.msra.mxu0 %v2728
        %2738 = vmatpush.bf16.msra.mxu0 %v2727
        %2739 = vmatpush.bf16.msra.mxu0 %v2726
        %2740 = vmatpush.bf16.msra.mxu0 %v2725
        %2741 = vmatpush.bf16.msra.mxu0 %v2724
        %2742 = vmatpush.bf16.msra.mxu0 %v2723
        %2743 = vmatpush.bf16.msra.mxu0 %v2722
        %2744 = vmatpush.bf16.msra.mxu0 %v2721
        %2745 = vmatmul.bf16.gmra.mxu0 %v2668
        %v2746 = vpop.f32.mrf.mxu0
        %v2747 = vadd.f32 %v2687, %v2746
        %v2748 = vpop.f32.mrf.mxu0
        %2749 = vdwg.mxu0
        %v2750 = vadd.f32 %v2590, %v2747
        %v2751 = vld [vmem:[%s1448] sm:$0x1]
        %v2752 = vld [vmem:[%s1457] sm:$0x1]
        %v2753 = vsel %vm1771, %v2750, 0.0
        %2754 = vadd.xlane.f32.xlu0 %v2753
        %v2755 = vpop.xlane.xlu0 %2754
        %v2756 = vmul.f32 %v2755, %v2138
        %v2757 = vsub.f32 %v2750, %v2756
        %v2758 = vmul.f32 %v2757, %v2757
        %v2759 = vsel %vm1771, %v2758, 0.0
        %2760 = vadd.xlane.f32.xlu0 %v2759
        %v2761 = vpop.xlane.xlu0 %2760
        %v2762 = vmul.f32 %v2761, %v2138
        %v2763 = vadd.f32 %v2762, 1e-05
        %v2764 = vrsqrt.pop %v2763
        %v2765 = vmul.f32 %v2764, %v2763
        %v2766 = vmul.f32 %v2765, %v2764
        %v2767 = vmul.f32 0.5, %v2766
        %v2768 = vsub.f32 1.5, %v2767
        %v2769 = vmul.f32 %v2764, %v2768
        %vm2770 = vweird.f32 %v2763
        %vm2771 = vweird.f32 %v2764
        %vm2772 = vmor %vm2770, %vm2771
        %v2773 = vsel %vm2772, %v2764, %v2769
        %v2774 = vmul.f32 %v2757, %v2773
        %v2776 = vperm.slane %v2751, 0
        %v2778 = vmul.f32 %v2774, %v2776
        %v2780 = vperm.slane %v2752, 0
        %v2782 = vadd.f32 %v2778, %v2780
        %2783 = vst.msk [vmem:[#allocation2] sm:$0xff] %vm1771, %v2782
        %p2784 = scmp.eq.s32.totalorder %s108, 1
        // Predicated region
        $region217: #{tpu_custom_call.1} parent=135 // pred_check
          %p2785 = pneg %p2784
        $region218: #{tpu_custom_call.1} parent=135 // pred_check_branch
          %2787 = sbr.rel (%p2785) target = $region220
        $region219: #{tpu_custom_call.1} parent=135 // pred_region
          %v2788 = vpack.c.bf16 %v2782, %v2782
          %v2789 = vld [vmem:[#allocation32] sm:$0xf]
          %v2790 = vld [vmem:[#allocation32 + $0x4] sm:$0xf]
          %v2791 = vld [vmem:[#allocation32 + $0x8] sm:$0xf]
          %v2792 = vld [vmem:[#allocation32 + $0xc] sm:$0xf]
          %v2797 = vunpack.c.l.b16 %v2789
          %v2798 = vunpack.c.l.b16 %v2790
          %v2799 = vunpack.c.l.b16 %v2791
          %v2800 = vunpack.c.l.b16 %v2792
          %v2801 = vpack.c.b16 %v2798, %v2797
          %v2802 = vpack.c.b16 %v2800, %v2799
          %v2806 = vsel %vm1771, %v2788, 0
          %2808 = vmatpush.bf16.msra.mxu0 0
          %2809 = vmatpush.bf16.msra.mxu0 0
          %2810 = vmatpush.bf16.msra.mxu0 0
          %2811 = vmatpush.bf16.msra.mxu0 0
          %2812 = vmatpush.bf16.msra.mxu0 0
          %2813 = vmatpush.bf16.msra.mxu0 0
          %2814 = vmatpush.bf16.msra.mxu0 %v2802
          %2815 = vmatpush.bf16.msra.mxu0 %v2801
          %2816 = vmatmul.bf16.gmra.mxu0 %v2806
          %v2817 = vpop.f32.mrf.mxu0
          %v2818 = vadd.f32 0.0, %v2817
          %v2819 = vpop.f32.mrf.mxu0
          %2820 = vdwg.mxu0
          %2821 = vst [vmem:[%s1680] sm:$0xff] %v2818
        $region220: #{tpu_custom_call.1} parent=135 // pred_fallthru
          _
        %s2822 = sand.u32 %s872, 1
        %s2823 = scalar_lea.sflag [#allocation5], %s2822
        %s2824 = sand.u32 %s872, 1
        %s2825 = smul.addr %s2824, 8
        %s2826 = scalar_lea.vmem [#allocation33], %s2825
        // Predicated region
        $region221: #{tpu_custom_call.1} parent=135 // pred_check
          %p2827 = pneg %p882
        $region222: #{tpu_custom_call.1} parent=135 // pred_check_branch
          %2829 = sbr.rel (%p2827) target = $region224
        $region223: #{tpu_custom_call.1} parent=135 // pred_region
          %2831 = vsyncadd %s2823, 0
          %s2832 = smul.addr %s107, 8
          %s2833 = scalar_lea.hbm %s59, %s2832
          %s2835 = sshll.u32 %s2826, 4
          %s2836 = int_to_ptr.vmem [resolvable:$true] %s2835
          %s2837 = sshll.u32 %s2833, 4
          %s2838 = int_to_ptr.hbm [resolvable:$true] %s2837
          %2840 = dma.vmem_to_hbm [thread:$0]  %s2836, 128, %s2838, %s2823
        $region224: #{tpu_custom_call.1} parent=135 // pred_fallthru
          _
      $region136: #{tpu_custom_call.1} parent=5 // pred_fallthru
        _
      %p2841 = scmp.le.s32.totalorder 2, %s98
      // Predicated region
      $region225: #{tpu_custom_call.1} parent=5 // pred_check
        %p2842 = pneg %p2841
      $region226: #{tpu_custom_call.1} parent=5 // pred_check_branch
        %2844 = sbr.rel (%p2842) target = $region228
      $region227: #{tpu_custom_call.1} parent=5 // pred_region
        %s2845 = ssub.s32 %s98, 2
        // Predicated region
        $region229: #{tpu_custom_call.1} parent=227 // pred_check
          %p2846 = pneg %p888
        $region230: #{tpu_custom_call.1} parent=227 // pred_check_branch
          %2848 = sbr.rel (%p2846) target = $region232
        $region231: #{tpu_custom_call.1} parent=227 // pred_region
          %s2849 = sand.u32 %s873, 1
          %s2850 = scalar_lea.sflag [#allocation5], %s2849
          %s2851 = sand.u32 %s873, 1
          %s2852 = smul.addr %s2851, 8
          %s2853 = scalar_lea.vmem [#allocation33], %s2852
          %2855 = dma.done %s2850, 128
        $region232: #{tpu_custom_call.1} parent=227 // pred_fallthru
          _
      $region228: #{tpu_custom_call.1} parent=5 // pred_fallthru
        _
    $region6: #{tpu_custom_call.1} parent=1 // loop_footer
      %s102 = sadd.s32 1, %s98
    $region7: #{tpu_custom_call.1} parent=1 // loop_footer_branch
      %97 = sbr.rel target = $region3
    $region8: #{tpu_custom_call.1} parent=1 // loop_exit
      _
    %2856 = vsyncpa [#allocation4], 1
    %s2857 = scalar_lea.sflag [#allocation4], 1
    %2858 = vsyncpa %s2857, 1
    %2859 = vsyncpa [#allocation7], 1
    %s2860 = scalar_lea.sflag [#allocation7], 1
    %2861 = vsyncpa %s2860, 1
    %2862 = vsyncpa [#allocation10], 1
    %s2863 = scalar_lea.sflag [#allocation10], 1
    %2864 = vsyncpa %s2863, 1
    %2865 = vsyncpa [#allocation13], 1
    %s2866 = scalar_lea.sflag [#allocation13], 1
    %2867 = vsyncpa %s2866, 1
    %2868 = vsyncpa [#allocation16], 1
    %s2869 = scalar_lea.sflag [#allocation16], 1
    %2870 = vsyncpa %s2869, 1
    %2871 = vsyncpa [#allocation19], 1
    %s2872 = scalar_lea.sflag [#allocation19], 1
    %2873 = vsyncpa %s2872, 1
    %2874 = vsyncpa [#allocation22], 1
    %s2875 = scalar_lea.sflag [#allocation22], 1
    %2876 = vsyncpa %s2875, 1
    %2877 = vsyncpa [#allocation25], 1
    %s2878 = scalar_lea.sflag [#allocation25], 1
    %2879 = vsyncpa %s2878, 1
    %2880 = vsyncpa [#allocation28], 1
    %s2881 = scalar_lea.sflag [#allocation28], 1
    %2882 = vsyncpa %s2881, 1
    %2883 = vsyncpa [#allocation31], 1
    %s2884 = scalar_lea.sflag [#allocation31], 1
    %2885 = vsyncpa %s2884, 1
    %2886 = vsyncpa [#allocation5], 1
    %s2887 = scalar_lea.sflag [#allocation5], 1
    %2888 = vsyncpa %s2887, 1

</llo_original>
